<compile_context>
chip_gen: v7x
topology: tpu7x:2x2x1
jax: 0.10.0
libtpu: 0.0.40
codegen_flags: <defaults>
</compile_context>

<pallas_src>
import math
import functools

import jax
import jax.numpy as jnp
from jax.experimental import pallas as pl
from jax.experimental.pallas import tpu as pltpu

# ---- small synthetic config (BERT-base would be H=768, 12 layers, 12 heads) --
B, S, H = 2, 8, 32
NUM_HEADS = 4
HEAD_DIM = H // NUM_HEADS
FFN = 4 * H                      # 128 -> already lane dense
VOCAB = 100
VOCAB_PAD = 128                  # pad vocab so the one-hot gather matmul is lane dense
NUM_LAYERS = 2
LN_EPS = 1e-12
FC_PAD = 128                     # lane-dense padding of the Linear(H, 2) output
QKV_PAD = 128                    # 3*H = 96 -> 128 lanes


# ----------------------------- kernel helpers --------------------------------
def _layernorm(x, g, b):
    mu = jnp.mean(x, axis=-1, keepdims=True)
    var = jnp.mean(jnp.square(x - mu), axis=-1, keepdims=True)
    return (x - mu) * jax.lax.rsqrt(var + LN_EPS) * g + b


# ------------------------------- fused kernel ---------------------------------
def fused_forward_kernel(ids_ref, mask_ref, wemb_ref, pemb_ref, eg_ref, eb_ref,
                         wqkv_ref, wo_ref, w1_ref, w2_ref, lp_ref,
                         fcw_ref, fcb_ref, o_ref):
    # --- embeddings: in-kernel gather as one-hot @ table (single MXU pass) ---
    ids = ids_ref[...]                                            # (B*S, 1) int32
    iota = jax.lax.broadcasted_iota(jnp.int32, (B * S, VOCAB_PAD), 1)
    onehot = (iota == ids).astype(jnp.bfloat16)                   # (B*S, 128)
    x = jnp.dot(onehot, wemb_ref[...], preferred_element_type=jnp.float32)
    x = x + jnp.concatenate([pemb_ref[...]] * B, axis=0)          # + position emb
    x = _layernorm(x, eg_ref[...], eb_ref[...])                   # (B*S, H) f32

    add_mask = (1.0 - mask_ref[...]) * -1e9                       # (B, S) f32
    scale = 1.0 / math.sqrt(HEAD_DIM)

    for l in range(NUM_LAYERS):                                   # static unroll
        lp = lp_ref[l]                                            # (8, 128) f32 slab
        bqkv = lp[0:1, :]                                         # fused qkv bias
        b1 = lp[1:2, :]                                           # ffn bias
        bo = lp[2:3, 0:H]
        b2 = lp[2:3, H:2 * H]
        g1, be1 = lp[3:4, 0:H], lp[3:4, H:2 * H]
        g2, be2 = lp[3:4, 2 * H:3 * H], lp[3:4, 3 * H:4 * H]
        wo_l = wo_ref[l]                                          # (H, H) bf16

        # fused QKV projection: one (B*S, H) x (H, 128) matmul, [q|k|v|pad]
        xb = x.astype(jnp.bfloat16)
        qkv = (jnp.dot(xb, wqkv_ref[l], preferred_element_type=jnp.float32)
               + bqkv).astype(jnp.bfloat16)                       # (B*S, 128)

        # attention: per batch element (batches never mix), per head via static
        # 2-D lane slices; the per-head context is accumulated directly through
        # the output projection (no (S,NH,HD) reshapes, no head concat).
        attn_rows = []
        for b in range(B):
            r0 = b * S
            q_b = qkv[r0:r0 + S, 0:H]
            k_b = qkv[r0:r0 + S, H:2 * H]
            v_b = qkv[r0:r0 + S, 2 * H:3 * H]
            m_b = add_mask[b:b + 1, :]                            # (1, S) key mask
            acc_b = jnp.zeros((S, H), jnp.float32)
            for h in range(NUM_HEADS):
                c0 = h * HEAD_DIM
                c1 = c0 + HEAD_DIM
                s_h = jax.lax.dot_general(                        # q @ k.T (2-D)
                    q_b[:, c0:c1], k_b[:, c0:c1],
                    (((1,), (1,)), ((), ())),
                    preferred_element_type=jnp.float32) * scale   # (S, S) f32
                s_h = s_h + m_b
                s_h = s_h - jnp.max(s_h, axis=-1, keepdims=True)
                p_h = jnp.exp(s_h)
                p_h = p_h * pl.reciprocal(
                    jnp.sum(p_h, axis=-1, keepdims=True), approx=True)
                ctx_h = jnp.dot(p_h.astype(jnp.bfloat16), v_b[:, c0:c1],
                                preferred_element_type=jnp.float32)
                acc_b = acc_b + jnp.dot(ctx_h.astype(jnp.bfloat16),
                                        wo_l[c0:c1, :],
                                        preferred_element_type=jnp.float32)
            attn_rows.append(acc_b)
        attn = jnp.concatenate(attn_rows, axis=0) + bo            # (B*S, H)

        h1 = _layernorm(x + attn, g1, be1)
        f = jnp.dot(h1.astype(jnp.bfloat16), w1_ref[l],
                    preferred_element_type=jnp.float32) + b1
        f = jax.nn.gelu(f)                                        # f32 elementwise
        f = jnp.dot(f.astype(jnp.bfloat16), w2_ref[l],
                    preferred_element_type=jnp.float32) + b2
        x = _layernorm(h1 + f, g2, be2)

    # QA head (nn.Dropout(p=0.1) is identity at inference).  fc weight is
    # zero-padded to (H, 128) so the output store is lane-dense.
    o_ref[...] = (jnp.dot(x.astype(jnp.bfloat16), fcw_ref[...],
                          preferred_element_type=jnp.float32) + fcb_ref[...])


# ------------------------------- parameters ------------------------------------
def init_params(key):
    # TODO(synk): pretrained 'bert-base-uncased' weights cannot be loaded here;
    # parameters are synthetic, deterministic N(0, 0.02) init.
    def nrm(k, shape):
        return (jax.random.normal(k, shape) * 0.02).astype(jnp.float32)

    ks = jax.random.split(key, 3 + NUM_LAYERS)

    wemb = jnp.zeros((VOCAB_PAD, H), jnp.float32).at[:VOCAB].set(
        nrm(ks[0], (VOCAB, H)))
    fc_w = jnp.zeros((H, FC_PAD), jnp.float32).at[:, :2].set(nrm(ks[2], (H, 2)))

    wqkv, wo, w1, w2 = [], [], [], []
    for l in range(NUM_LAYERS):
        lk = jax.random.split(ks[3 + l], 6)
        qkv = jnp.concatenate(
            [nrm(lk[0], (H, H)), nrm(lk[1], (H, H)), nrm(lk[2], (H, H)),
             jnp.zeros((H, QKV_PAD - 3 * H), jnp.float32)], axis=1)
        wqkv.append(qkv)
        wo.append(nrm(lk[3], (H, H)))
        w1.append(nrm(lk[4], (H, FFN)))
        w2.append(nrm(lk[5], (FFN, H)))

    # per-layer bias / LayerNorm slab: one lane-dense (L, 8, 128) f32 array
    #   row 0: fused qkv bias        row 1: ffn bias b1
    #   row 2: [attn-out bias | ffn-out bias | unused]
    #   row 3: [ln1_gamma | ln1_beta | ln2_gamma | ln2_beta]
    lp = jnp.zeros((NUM_LAYERS, 8, 128), jnp.float32)
    lp = lp.at[:, 3, 0:H].set(1.0)           # ln1 gamma
    lp = lp.at[:, 3, 2 * H:3 * H].set(1.0)   # ln2 gamma

    stack_bf16 = lambda xs: jnp.stack(xs).astype(jnp.bfloat16)
    return {
        "word_emb": wemb.astype(jnp.bfloat16),        # (128, H) vocab-padded
        "pos_emb": nrm(ks[1], (S, H)),
        "emb_ln_g": jnp.ones((1, H), jnp.float32),
        "emb_ln_b": jnp.zeros((1, H), jnp.float32),
        "wqkv": stack_bf16(wqkv), "wo": stack_bf16(wo),
        "w1": stack_bf16(w1), "w2": stack_bf16(w2),
        "lparams": lp,
        "fc_w": fc_w.astype(jnp.bfloat16),            # (H, 128) lane-dense
        "fc_b": jnp.zeros((1, FC_PAD), jnp.float32),
    }


# ------------------------------ pallas wrapper ---------------------------------
def _full_spec(a):
    n = a.ndim
    return pl.BlockSpec(a.shape, lambda i, n=n: (0,) * n)


def my_model_forward(params, input_ids, attn_mask):
    ids = input_ids.reshape(B * S, 1).astype(jnp.int32)
    mask = attn_mask.astype(jnp.float32)                          # (B, S)

    args = (ids, mask, params["word_emb"], params["pos_emb"],
            params["emb_ln_g"], params["emb_ln_b"],
            params["wqkv"], params["wo"], params["w1"], params["w2"],
            params["lparams"], params["fc_w"], params["fc_b"])

    logits = pl.pallas_call(
        fused_forward_kernel,
        out_shape=jax.ShapeDtypeStruct((B * S, FC_PAD), jnp.float32),
        grid=(1,),                                    # single step, batch folded
        in_specs=[_full_spec(a) for a in args],
        out_specs=pl.BlockSpec((B * S, FC_PAD), lambda i: (0, 0)),
        compiler_params=pltpu.CompilerParams(
            dimension_semantics=("arbitrary",)),
    )(*args)

    logits = logits.reshape(B, S, FC_PAD)
    start = logits[..., 0]                                        # split + squeeze(-1)
    end = logits[..., 1]
    return start, end


if __name__ == "__main__":
    key = jax.random.PRNGKey(0)
    pkey, ikey = jax.random.split(key)
    params = init_params(pkey)

    input_ids = jax.random.randint(ikey, (B, S), 0, VOCAB, dtype=jnp.int32)
    attn_mask = jnp.ones((B, S), dtype=jnp.int32)

    fwd = jax.jit(functools.partial(my_model_forward, params))
    start, end = fwd(input_ids, attn_mask)
    jax.block_until_ready((start, end))

    assert start.shape == (B, S) and end.shape == (B, S)
    assert start.dtype == jnp.float32 and end.dtype == jnp.float32
    assert bool(jnp.all(jnp.isfinite(start))) and bool(jnp.all(jnp.isfinite(end)))
    print("KERNEL_OK")
</pallas_src>

<mosaic_0001>
module attributes {stable_mosaic.version = 11 : i64} {
  func.func @fused_forward_kernel(%arg0: i32, %arg1: memref<16x1xi32, #tpu.memory_space<vmem>>, %arg2: memref<2x8xf32, #tpu.memory_space<vmem>>, %arg3: memref<128x32xbf16, #tpu.memory_space<vmem>>, %arg4: memref<8x32xf32, #tpu.memory_space<vmem>>, %arg5: memref<1x32xf32, #tpu.memory_space<vmem>>, %arg6: memref<1x32xf32, #tpu.memory_space<vmem>>, %arg7: memref<2x32x128xbf16, #tpu.memory_space<vmem>>, %arg8: memref<2x32x32xbf16, #tpu.memory_space<vmem>>, %arg9: memref<2x32x128xbf16, #tpu.memory_space<vmem>>, %arg10: memref<2x128x32xbf16, #tpu.memory_space<vmem>>, %arg11: memref<2x8x128xf32, #tpu.memory_space<vmem>>, %arg12: memref<32x128xbf16, #tpu.memory_space<vmem>>, %arg13: memref<1x128xf32, #tpu.memory_space<vmem>>, %arg14: memref<16x128xf32, #tpu.memory_space<vmem>>) attributes {dimension_semantics = [#tpu.dimension_semantics<arbitrary>], iteration_bounds = array<i64: 1>, scalar_prefetch = 0 : i64, scratch_operands = 0 : i64, tpu.core_type = #tpu.core_type<tc>, window_params = [{pipeline_mode = #tpu.pipeline_mode<synchronous>, transform_indices = @transform_0, window_bounds = array<i64: 16, 1>}, {pipeline_mode = #tpu.pipeline_mode<synchronous>, transform_indices = @transform_1, window_bounds = array<i64: 2, 8>}, {pipeline_mode = #tpu.pipeline_mode<synchronous>, transform_indices = @transform_2, window_bounds = array<i64: 128, 32>}, {pipeline_mode = #tpu.pipeline_mode<synchronous>, transform_indices = @transform_3, window_bounds = array<i64: 8, 32>}, {pipeline_mode = #tpu.pipeline_mode<synchronous>, transform_indices = @transform_4, window_bounds = array<i64: 1, 32>}, {pipeline_mode = #tpu.pipeline_mode<synchronous>, transform_indices = @transform_5, window_bounds = array<i64: 1, 32>}, {pipeline_mode = #tpu.pipeline_mode<synchronous>, transform_indices = @transform_6, window_bounds = array<i64: 2, 32, 128>}, {pipeline_mode = #tpu.pipeline_mode<synchronous>, transform_indices = @transform_7, window_bounds = array<i64: 2, 32, 32>}, {pipeline_mode = #tpu.pipeline_mode<synchronous>, transform_indices = @transform_8, window_bounds = array<i64: 2, 32, 128>}, {pipeline_mode = #tpu.pipeline_mode<synchronous>, transform_indices = @transform_9, window_bounds = array<i64: 2, 128, 32>}, {pipeline_mode = #tpu.pipeline_mode<synchronous>, transform_indices = @transform_10, window_bounds = array<i64: 2, 8, 128>}, {pipeline_mode = #tpu.pipeline_mode<synchronous>, transform_indices = @transform_11, window_bounds = array<i64: 32, 128>}, {pipeline_mode = #tpu.pipeline_mode<synchronous>, transform_indices = @transform_12, window_bounds = array<i64: 1, 128>}, {pipeline_mode = #tpu.pipeline_mode<synchronous>, transform_indices = @transform_13, window_bounds = array<i64: 16, 128>}]} {
    %c0 = arith.constant 0 : index
    %c0_0 = arith.constant 0 : index
    %0 = vector.load %arg1[%c0, %c0_0] : memref<16x1xi32, #tpu.memory_space<vmem>>, vector<16x1xi32>
    %1 = tpu.iota {dimensions = array<i32: 1>} : vector<16x128xi32>
    %2 = vector.broadcast %0 : vector<16x1xi32> to vector<16x128xi32>
    %3 = arith.cmpi eq, %1, %2 : vector<16x128xi32>
    %4 = arith.extui %3 : vector<16x128xi1> to vector<16x128xi32>
    %5 = arith.sitofp %4 : vector<16x128xi32> to vector<16x128xf32>
    %6 = arith.truncf %5 : vector<16x128xf32> to vector<16x128xbf16>
    %c0_1 = arith.constant 0 : index
    %c0_2 = arith.constant 0 : index
    %7 = vector.load %arg3[%c0_1, %c0_2] : memref<128x32xbf16, #tpu.memory_space<vmem>>, vector<128x32xbf16>
    %cst = arith.constant dense<0.000000e+00> : vector<16x32xf32>
    %8 = tpu.matmul %6, %7, %cst {dimension_numbers = #tpu.dot_dimension_numbers<[1], [0], [0], [1], [0, 0, 1, 1], [], []>} : vector<16x128xbf16>, vector<128x32xbf16>, vector<16x32xf32> -> vector<16x32xf32>
    %c0_3 = arith.constant 0 : index
    %c0_4 = arith.constant 0 : index
    %9 = vector.load %arg4[%c0_3, %c0_4] : memref<8x32xf32, #tpu.memory_space<vmem>>, vector<8x32xf32>
    %10 = tpu.concatenate %9, %9 in 0 : vector<8x32xf32>, vector<8x32xf32> -> vector<16x32xf32>
    %11 = arith.addf %8, %10 : vector<16x32xf32>
    %c0_5 = arith.constant 0 : index
    %c0_6 = arith.constant 0 : index
    %12 = vector.load %arg5[%c0_5, %c0_6] : memref<1x32xf32, #tpu.memory_space<vmem>>, vector<1x32xf32>
    %c0_7 = arith.constant 0 : index
    %c0_8 = arith.constant 0 : index
    %13 = vector.load %arg6[%c0_7, %c0_8] : memref<1x32xf32, #tpu.memory_space<vmem>>, vector<1x32xf32>
    %cst_9 = arith.constant dense<0.000000e+00> : vector<16xf32>
    %14 = vector.multi_reduction <add>, %11, %cst_9 [1] : vector<16x32xf32> to vector<16xf32>
    %15 = vector.shape_cast %14 : vector<16xf32> to vector<16x1xf32>
    %cst_10 = arith.constant 3.200000e+01 : f32
    %16 = vector.broadcast %cst_10 : f32 to vector<16x1xf32>
    %17 = arith.divf %15, %16 : vector<16x1xf32>
    %18 = vector.broadcast %17 : vector<16x1xf32> to vector<16x32xf32>
    %19 = arith.subf %11, %18 : vector<16x32xf32>
    %20 = arith.mulf %19, %19 : vector<16x32xf32>
    %cst_11 = arith.constant dense<0.000000e+00> : vector<16xf32>
    %21 = vector.multi_reduction <add>, %20, %cst_11 [1] : vector<16x32xf32> to vector<16xf32>
    %22 = vector.shape_cast %21 : vector<16xf32> to vector<16x1xf32>
    %cst_12 = arith.constant 3.200000e+01 : f32
    %23 = vector.broadcast %cst_12 : f32 to vector<16x1xf32>
    %24 = arith.divf %22, %23 : vector<16x1xf32>
    %25 = vector.broadcast %17 : vector<16x1xf32> to vector<16x32xf32>
    %26 = arith.subf %11, %25 : vector<16x32xf32>
    %cst_13 = arith.constant 9.99999996E-13 : f32
    %27 = vector.broadcast %cst_13 : f32 to vector<16x1xf32>
    %28 = arith.addf %24, %27 : vector<16x1xf32>
    %29 = math.rsqrt %28 : vector<16x1xf32>
    %30 = vector.broadcast %29 : vector<16x1xf32> to vector<16x32xf32>
    %31 = arith.mulf %26, %30 : vector<16x32xf32>
    %32 = vector.broadcast %12 : vector<1x32xf32> to vector<16x32xf32>
    %33 = arith.mulf %31, %32 : vector<16x32xf32>
    %34 = vector.broadcast %13 : vector<1x32xf32> to vector<16x32xf32>
    %35 = arith.addf %33, %34 : vector<16x32xf32>
    %c0_14 = arith.constant 0 : index
    %c0_15 = arith.constant 0 : index
    %36 = vector.load %arg2[%c0_14, %c0_15] : memref<2x8xf32, #tpu.memory_space<vmem>>, vector<2x8xf32>
    %cst_16 = arith.constant 1.000000e+00 : f32
    %37 = vector.broadcast %cst_16 : f32 to vector<2x8xf32>
    %38 = arith.subf %37, %36 : vector<2x8xf32>
    %cst_17 = arith.constant -1.000000e+09 : f32
    %39 = vector.broadcast %cst_17 : f32 to vector<2x8xf32>
    %40 = arith.mulf %38, %39 : vector<2x8xf32>
    %c0_18 = arith.constant 0 : index
    %c0_19 = arith.constant 0 : index
    %c0_20 = arith.constant 0 : index
    %41 = vector.load %arg11[%c0_18, %c0_19, %c0_20] : memref<2x8x128xf32, #tpu.memory_space<vmem>>, vector<1x8x128xf32>
    %42 = vector.shape_cast %41 : vector<1x8x128xf32> to vector<8x128xf32>
    %43 = vector.extract_strided_slice %42 {offsets = [0, 0], sizes = [1, 128], strides = [1, 1]} : vector<8x128xf32> to vector<1x128xf32>
    %44 = vector.extract_strided_slice %42 {offsets = [1, 0], sizes = [1, 128], strides = [1, 1]} : vector<8x128xf32> to vector<1x128xf32>
    %45 = vector.extract_strided_slice %42 {offsets = [2, 0], sizes = [1, 32], strides = [1, 1]} : vector<8x128xf32> to vector<1x32xf32>
    %46 = vector.extract_strided_slice %42 {offsets = [2, 32], sizes = [1, 32], strides = [1, 1]} : vector<8x128xf32> to vector<1x32xf32>
    %47 = vector.extract_strided_slice %42 {offsets = [3, 0], sizes = [1, 32], strides = [1, 1]} : vector<8x128xf32> to vector<1x32xf32>
    %48 = vector.extract_strided_slice %42 {offsets = [3, 32], sizes = [1, 32], strides = [1, 1]} : vector<8x128xf32> to vector<1x32xf32>
    %49 = vector.extract_strided_slice %42 {offsets = [3, 64], sizes = [1, 32], strides = [1, 1]} : vector<8x128xf32> to vector<1x32xf32>
    %50 = vector.extract_strided_slice %42 {offsets = [3, 96], sizes = [1, 32], strides = [1, 1]} : vector<8x128xf32> to vector<1x32xf32>
    %c0_21 = arith.constant 0 : index
    %c0_22 = arith.constant 0 : index
    %c0_23 = arith.constant 0 : index
    %51 = vector.load %arg8[%c0_21, %c0_22, %c0_23] : memref<2x32x32xbf16, #tpu.memory_space<vmem>>, vector<1x32x32xbf16>
    %52 = vector.shape_cast %51 : vector<1x32x32xbf16> to vector<32x32xbf16>
    %53 = arith.truncf %35 : vector<16x32xf32> to vector<16x32xbf16>
    %c0_24 = arith.constant 0 : index
    %c0_25 = arith.constant 0 : index
    %c0_26 = arith.constant 0 : index
    %54 = vector.load %arg7[%c0_24, %c0_25, %c0_26] : memref<2x32x128xbf16, #tpu.memory_space<vmem>>, vector<1x32x128xbf16>
    %55 = vector.shape_cast %54 : vector<1x32x128xbf16> to vector<32x128xbf16>
    %cst_27 = arith.constant dense<0.000000e+00> : vector<16x128xf32>
    %56 = tpu.matmul %53, %55, %cst_27 {dimension_numbers = #tpu.dot_dimension_numbers<[1], [0], [0], [1], [0, 0, 1, 1], [], []>} : vector<16x32xbf16>, vector<32x128xbf16>, vector<16x128xf32> -> vector<16x128xf32>
    %57 = vector.broadcast %43 : vector<1x128xf32> to vector<16x128xf32>
    %58 = arith.addf %56, %57 : vector<16x128xf32>
    %59 = arith.truncf %58 : vector<16x128xf32> to vector<16x128xbf16>
    %60 = vector.extract_strided_slice %59 {offsets = [0, 0], sizes = [8, 32], strides = [1, 1]} : vector<16x128xbf16> to vector<8x32xbf16>
    %61 = vector.extract_strided_slice %59 {offsets = [0, 32], sizes = [8, 32], strides = [1, 1]} : vector<16x128xbf16> to vector<8x32xbf16>
    %62 = vector.extract_strided_slice %59 {offsets = [0, 64], sizes = [8, 32], strides = [1, 1]} : vector<16x128xbf16> to vector<8x32xbf16>
    %63 = vector.extract_strided_slice %40 {offsets = [0, 0], sizes = [1, 8], strides = [1, 1]} : vector<2x8xf32> to vector<1x8xf32>
    %cst_28 = arith.constant 0.000000e+00 : f32
    %64 = vector.broadcast %cst_28 : f32 to vector<8x32xf32>
    %65 = vector.extract_strided_slice %60 {offsets = [0, 0], sizes = [8, 8], strides = [1, 1]} : vector<8x32xbf16> to vector<8x8xbf16>
    %66 = vector.extract_strided_slice %61 {offsets = [0, 0], sizes = [8, 8], strides = [1, 1]} : vector<8x32xbf16> to vector<8x8xbf16>
    %cst_29 = arith.constant dense<0.000000e+00> : vector<8x8xf32>
    %67 = tpu.matmul %65, %66, %cst_29 {dimension_numbers = #tpu.dot_dimension_numbers<[1], [1], [0], [0], [0, 0, 1, 0], [], []>} : vector<8x8xbf16>, vector<8x8xbf16>, vector<8x8xf32> -> vector<8x8xf32>
    %cst_30 = arith.constant 0.353553385 : f32
    %68 = vector.broadcast %cst_30 : f32 to vector<8x8xf32>
    %69 = arith.mulf %67, %68 : vector<8x8xf32>
    %70 = vector.broadcast %63 : vector<1x8xf32> to vector<8x8xf32>
    %71 = arith.addf %69, %70 : vector<8x8xf32>
    %cst_31 = arith.constant dense<0xFF800000> : vector<8xf32>
    %72 = vector.multi_reduction <maximumf>, %71, %cst_31 [1] : vector<8x8xf32> to vector<8xf32>
    %73 = vector.shape_cast %72 : vector<8xf32> to vector<8x1xf32>
    %74 = vector.broadcast %73 : vector<8x1xf32> to vector<8x8xf32>
    %75 = arith.subf %71, %74 : vector<8x8xf32>
    %76 = math.exp %75 : vector<8x8xf32>
    %cst_32 = arith.constant dense<0.000000e+00> : vector<8xf32>
    %77 = vector.multi_reduction <add>, %76, %cst_32 [1] : vector<8x8xf32> to vector<8xf32>
    %78 = vector.shape_cast %77 : vector<8xf32> to vector<8x1xf32>
    %79 = tpu.reciprocal %78 {approx = true} : vector<8x1xf32> -> vector<8x1xf32>
    %80 = vector.broadcast %79 : vector<8x1xf32> to vector<8x8xf32>
    %81 = arith.mulf %76, %80 : vector<8x8xf32>
    %82 = arith.truncf %81 : vector<8x8xf32> to vector<8x8xbf16>
    %83 = vector.extract_strided_slice %62 {offsets = [0, 0], sizes = [8, 8], strides = [1, 1]} : vector<8x32xbf16> to vector<8x8xbf16>
    %cst_33 = arith.constant dense<0.000000e+00> : vector<8x8xf32>
    %84 = tpu.matmul %82, %83, %cst_33 {dimension_numbers = #tpu.dot_dimension_numbers<[1], [0], [0], [1], [0, 0, 1, 1], [], []>} : vector<8x8xbf16>, vector<8x8xbf16>, vector<8x8xf32> -> vector<8x8xf32>
    %85 = arith.truncf %84 : vector<8x8xf32> to vector<8x8xbf16>
    %86 = vector.extract_strided_slice %52 {offsets = [0, 0], sizes = [8, 32], strides = [1, 1]} : vector<32x32xbf16> to vector<8x32xbf16>
    %cst_34 = arith.constant dense<0.000000e+00> : vector<8x32xf32>
    %87 = tpu.matmul %85, %86, %cst_34 {dimension_numbers = #tpu.dot_dimension_numbers<[1], [0], [0], [1], [0, 0, 1, 1], [], []>} : vector<8x8xbf16>, vector<8x32xbf16>, vector<8x32xf32> -> vector<8x32xf32>
    %88 = arith.addf %64, %87 : vector<8x32xf32>
    %89 = vector.extract_strided_slice %60 {offsets = [0, 8], sizes = [8, 8], strides = [1, 1]} : vector<8x32xbf16> to vector<8x8xbf16>
    %90 = vector.extract_strided_slice %61 {offsets = [0, 8], sizes = [8, 8], strides = [1, 1]} : vector<8x32xbf16> to vector<8x8xbf16>
    %cst_35 = arith.constant dense<0.000000e+00> : vector<8x8xf32>
    %91 = tpu.matmul %89, %90, %cst_35 {dimension_numbers = #tpu.dot_dimension_numbers<[1], [1], [0], [0], [0, 0, 1, 0], [], []>} : vector<8x8xbf16>, vector<8x8xbf16>, vector<8x8xf32> -> vector<8x8xf32>
    %cst_36 = arith.constant 0.353553385 : f32
    %92 = vector.broadcast %cst_36 : f32 to vector<8x8xf32>
    %93 = arith.mulf %91, %92 : vector<8x8xf32>
    %94 = vector.broadcast %63 : vector<1x8xf32> to vector<8x8xf32>
    %95 = arith.addf %93, %94 : vector<8x8xf32>
    %cst_37 = arith.constant dense<0xFF800000> : vector<8xf32>
    %96 = vector.multi_reduction <maximumf>, %95, %cst_37 [1] : vector<8x8xf32> to vector<8xf32>
    %97 = vector.shape_cast %96 : vector<8xf32> to vector<8x1xf32>
    %98 = vector.broadcast %97 : vector<8x1xf32> to vector<8x8xf32>
    %99 = arith.subf %95, %98 : vector<8x8xf32>
    %100 = math.exp %99 : vector<8x8xf32>
    %cst_38 = arith.constant dense<0.000000e+00> : vector<8xf32>
    %101 = vector.multi_reduction <add>, %100, %cst_38 [1] : vector<8x8xf32> to vector<8xf32>
    %102 = vector.shape_cast %101 : vector<8xf32> to vector<8x1xf32>
    %103 = tpu.reciprocal %102 {approx = true} : vector<8x1xf32> -> vector<8x1xf32>
    %104 = vector.broadcast %103 : vector<8x1xf32> to vector<8x8xf32>
    %105 = arith.mulf %100, %104 : vector<8x8xf32>
    %106 = arith.truncf %105 : vector<8x8xf32> to vector<8x8xbf16>
    %107 = vector.extract_strided_slice %62 {offsets = [0, 8], sizes = [8, 8], strides = [1, 1]} : vector<8x32xbf16> to vector<8x8xbf16>
    %cst_39 = arith.constant dense<0.000000e+00> : vector<8x8xf32>
    %108 = tpu.matmul %106, %107, %cst_39 {dimension_numbers = #tpu.dot_dimension_numbers<[1], [0], [0], [1], [0, 0, 1, 1], [], []>} : vector<8x8xbf16>, vector<8x8xbf16>, vector<8x8xf32> -> vector<8x8xf32>
    %109 = arith.truncf %108 : vector<8x8xf32> to vector<8x8xbf16>
    %110 = vector.extract_strided_slice %52 {offsets = [8, 0], sizes = [8, 32], strides = [1, 1]} : vector<32x32xbf16> to vector<8x32xbf16>
    %cst_40 = arith.constant dense<0.000000e+00> : vector<8x32xf32>
    %111 = tpu.matmul %109, %110, %cst_40 {dimension_numbers = #tpu.dot_dimension_numbers<[1], [0], [0], [1], [0, 0, 1, 1], [], []>} : vector<8x8xbf16>, vector<8x32xbf16>, vector<8x32xf32> -> vector<8x32xf32>
    %112 = arith.addf %88, %111 : vector<8x32xf32>
    %113 = vector.extract_strided_slice %60 {offsets = [0, 16], sizes = [8, 8], strides = [1, 1]} : vector<8x32xbf16> to vector<8x8xbf16>
    %114 = vector.extract_strided_slice %61 {offsets = [0, 16], sizes = [8, 8], strides = [1, 1]} : vector<8x32xbf16> to vector<8x8xbf16>
    %cst_41 = arith.constant dense<0.000000e+00> : vector<8x8xf32>
    %115 = tpu.matmul %113, %114, %cst_41 {dimension_numbers = #tpu.dot_dimension_numbers<[1], [1], [0], [0], [0, 0, 1, 0], [], []>} : vector<8x8xbf16>, vector<8x8xbf16>, vector<8x8xf32> -> vector<8x8xf32>
    %cst_42 = arith.constant 0.353553385 : f32
    %116 = vector.broadcast %cst_42 : f32 to vector<8x8xf32>
    %117 = arith.mulf %115, %116 : vector<8x8xf32>
    %118 = vector.broadcast %63 : vector<1x8xf32> to vector<8x8xf32>
    %119 = arith.addf %117, %118 : vector<8x8xf32>
    %cst_43 = arith.constant dense<0xFF800000> : vector<8xf32>
    %120 = vector.multi_reduction <maximumf>, %119, %cst_43 [1] : vector<8x8xf32> to vector<8xf32>
    %121 = vector.shape_cast %120 : vector<8xf32> to vector<8x1xf32>
    %122 = vector.broadcast %121 : vector<8x1xf32> to vector<8x8xf32>
    %123 = arith.subf %119, %122 : vector<8x8xf32>
    %124 = math.exp %123 : vector<8x8xf32>
    %cst_44 = arith.constant dense<0.000000e+00> : vector<8xf32>
    %125 = vector.multi_reduction <add>, %124, %cst_44 [1] : vector<8x8xf32> to vector<8xf32>
    %126 = vector.shape_cast %125 : vector<8xf32> to vector<8x1xf32>
    %127 = tpu.reciprocal %126 {approx = true} : vector<8x1xf32> -> vector<8x1xf32>
    %128 = vector.broadcast %127 : vector<8x1xf32> to vector<8x8xf32>
    %129 = arith.mulf %124, %128 : vector<8x8xf32>
    %130 = arith.truncf %129 : vector<8x8xf32> to vector<8x8xbf16>
    %131 = vector.extract_strided_slice %62 {offsets = [0, 16], sizes = [8, 8], strides = [1, 1]} : vector<8x32xbf16> to vector<8x8xbf16>
    %cst_45 = arith.constant dense<0.000000e+00> : vector<8x8xf32>
    %132 = tpu.matmul %130, %131, %cst_45 {dimension_numbers = #tpu.dot_dimension_numbers<[1], [0], [0], [1], [0, 0, 1, 1], [], []>} : vector<8x8xbf16>, vector<8x8xbf16>, vector<8x8xf32> -> vector<8x8xf32>
    %133 = arith.truncf %132 : vector<8x8xf32> to vector<8x8xbf16>
    %134 = vector.extract_strided_slice %52 {offsets = [16, 0], sizes = [8, 32], strides = [1, 1]} : vector<32x32xbf16> to vector<8x32xbf16>
    %cst_46 = arith.constant dense<0.000000e+00> : vector<8x32xf32>
    %135 = tpu.matmul %133, %134, %cst_46 {dimension_numbers = #tpu.dot_dimension_numbers<[1], [0], [0], [1], [0, 0, 1, 1], [], []>} : vector<8x8xbf16>, vector<8x32xbf16>, vector<8x32xf32> -> vector<8x32xf32>
    %136 = arith.addf %112, %135 : vector<8x32xf32>
    %137 = vector.extract_strided_slice %60 {offsets = [0, 24], sizes = [8, 8], strides = [1, 1]} : vector<8x32xbf16> to vector<8x8xbf16>
    %138 = vector.extract_strided_slice %61 {offsets = [0, 24], sizes = [8, 8], strides = [1, 1]} : vector<8x32xbf16> to vector<8x8xbf16>
    %cst_47 = arith.constant dense<0.000000e+00> : vector<8x8xf32>
    %139 = tpu.matmul %137, %138, %cst_47 {dimension_numbers = #tpu.dot_dimension_numbers<[1], [1], [0], [0], [0, 0, 1, 0], [], []>} : vector<8x8xbf16>, vector<8x8xbf16>, vector<8x8xf32> -> vector<8x8xf32>
    %cst_48 = arith.constant 0.353553385 : f32
    %140 = vector.broadcast %cst_48 : f32 to vector<8x8xf32>
    %141 = arith.mulf %139, %140 : vector<8x8xf32>
    %142 = vector.broadcast %63 : vector<1x8xf32> to vector<8x8xf32>
    %143 = arith.addf %141, %142 : vector<8x8xf32>
    %cst_49 = arith.constant dense<0xFF800000> : vector<8xf32>
    %144 = vector.multi_reduction <maximumf>, %143, %cst_49 [1] : vector<8x8xf32> to vector<8xf32>
    %145 = vector.shape_cast %144 : vector<8xf32> to vector<8x1xf32>
    %146 = vector.broadcast %145 : vector<8x1xf32> to vector<8x8xf32>
    %147 = arith.subf %143, %146 : vector<8x8xf32>
    %148 = math.exp %147 : vector<8x8xf32>
    %cst_50 = arith.constant dense<0.000000e+00> : vector<8xf32>
    %149 = vector.multi_reduction <add>, %148, %cst_50 [1] : vector<8x8xf32> to vector<8xf32>
    %150 = vector.shape_cast %149 : vector<8xf32> to vector<8x1xf32>
    %151 = tpu.reciprocal %150 {approx = true} : vector<8x1xf32> -> vector<8x1xf32>
    %152 = vector.broadcast %151 : vector<8x1xf32> to vector<8x8xf32>
    %153 = arith.mulf %148, %152 : vector<8x8xf32>
    %154 = arith.truncf %153 : vector<8x8xf32> to vector<8x8xbf16>
    %155 = vector.extract_strided_slice %62 {offsets = [0, 24], sizes = [8, 8], strides = [1, 1]} : vector<8x32xbf16> to vector<8x8xbf16>
    %cst_51 = arith.constant dense<0.000000e+00> : vector<8x8xf32>
    %156 = tpu.matmul %154, %155, %cst_51 {dimension_numbers = #tpu.dot_dimension_numbers<[1], [0], [0], [1], [0, 0, 1, 1], [], []>} : vector<8x8xbf16>, vector<8x8xbf16>, vector<8x8xf32> -> vector<8x8xf32>
    %157 = arith.truncf %156 : vector<8x8xf32> to vector<8x8xbf16>
    %158 = vector.extract_strided_slice %52 {offsets = [24, 0], sizes = [8, 32], strides = [1, 1]} : vector<32x32xbf16> to vector<8x32xbf16>
    %cst_52 = arith.constant dense<0.000000e+00> : vector<8x32xf32>
    %159 = tpu.matmul %157, %158, %cst_52 {dimension_numbers = #tpu.dot_dimension_numbers<[1], [0], [0], [1], [0, 0, 1, 1], [], []>} : vector<8x8xbf16>, vector<8x32xbf16>, vector<8x32xf32> -> vector<8x32xf32>
    %160 = arith.addf %136, %159 : vector<8x32xf32>
    %161 = vector.extract_strided_slice %59 {offsets = [8, 0], sizes = [8, 32], strides = [1, 1]} : vector<16x128xbf16> to vector<8x32xbf16>
    %162 = vector.extract_strided_slice %59 {offsets = [8, 32], sizes = [8, 32], strides = [1, 1]} : vector<16x128xbf16> to vector<8x32xbf16>
    %163 = vector.extract_strided_slice %59 {offsets = [8, 64], sizes = [8, 32], strides = [1, 1]} : vector<16x128xbf16> to vector<8x32xbf16>
    %164 = vector.extract_strided_slice %40 {offsets = [1, 0], sizes = [1, 8], strides = [1, 1]} : vector<2x8xf32> to vector<1x8xf32>
    %cst_53 = arith.constant 0.000000e+00 : f32
    %165 = vector.broadcast %cst_53 : f32 to vector<8x32xf32>
    %166 = vector.extract_strided_slice %161 {offsets = [0, 0], sizes = [8, 8], strides = [1, 1]} : vector<8x32xbf16> to vector<8x8xbf16>
    %167 = vector.extract_strided_slice %162 {offsets = [0, 0], sizes = [8, 8], strides = [1, 1]} : vector<8x32xbf16> to vector<8x8xbf16>
    %cst_54 = arith.constant dense<0.000000e+00> : vector<8x8xf32>
    %168 = tpu.matmul %166, %167, %cst_54 {dimension_numbers = #tpu.dot_dimension_numbers<[1], [1], [0], [0], [0, 0, 1, 0], [], []>} : vector<8x8xbf16>, vector<8x8xbf16>, vector<8x8xf32> -> vector<8x8xf32>
    %cst_55 = arith.constant 0.353553385 : f32
    %169 = vector.broadcast %cst_55 : f32 to vector<8x8xf32>
    %170 = arith.mulf %168, %169 : vector<8x8xf32>
    %171 = vector.broadcast %164 : vector<1x8xf32> to vector<8x8xf32>
    %172 = arith.addf %170, %171 : vector<8x8xf32>
    %cst_56 = arith.constant dense<0xFF800000> : vector<8xf32>
    %173 = vector.multi_reduction <maximumf>, %172, %cst_56 [1] : vector<8x8xf32> to vector<8xf32>
    %174 = vector.shape_cast %173 : vector<8xf32> to vector<8x1xf32>
    %175 = vector.broadcast %174 : vector<8x1xf32> to vector<8x8xf32>
    %176 = arith.subf %172, %175 : vector<8x8xf32>
    %177 = math.exp %176 : vector<8x8xf32>
    %cst_57 = arith.constant dense<0.000000e+00> : vector<8xf32>
    %178 = vector.multi_reduction <add>, %177, %cst_57 [1] : vector<8x8xf32> to vector<8xf32>
    %179 = vector.shape_cast %178 : vector<8xf32> to vector<8x1xf32>
    %180 = tpu.reciprocal %179 {approx = true} : vector<8x1xf32> -> vector<8x1xf32>
    %181 = vector.broadcast %180 : vector<8x1xf32> to vector<8x8xf32>
    %182 = arith.mulf %177, %181 : vector<8x8xf32>
    %183 = arith.truncf %182 : vector<8x8xf32> to vector<8x8xbf16>
    %184 = vector.extract_strided_slice %163 {offsets = [0, 0], sizes = [8, 8], strides = [1, 1]} : vector<8x32xbf16> to vector<8x8xbf16>
    %cst_58 = arith.constant dense<0.000000e+00> : vector<8x8xf32>
    %185 = tpu.matmul %183, %184, %cst_58 {dimension_numbers = #tpu.dot_dimension_numbers<[1], [0], [0], [1], [0, 0, 1, 1], [], []>} : vector<8x8xbf16>, vector<8x8xbf16>, vector<8x8xf32> -> vector<8x8xf32>
    %186 = arith.truncf %185 : vector<8x8xf32> to vector<8x8xbf16>
    %187 = vector.extract_strided_slice %52 {offsets = [0, 0], sizes = [8, 32], strides = [1, 1]} : vector<32x32xbf16> to vector<8x32xbf16>
    %cst_59 = arith.constant dense<0.000000e+00> : vector<8x32xf32>
    %188 = tpu.matmul %186, %187, %cst_59 {dimension_numbers = #tpu.dot_dimension_numbers<[1], [0], [0], [1], [0, 0, 1, 1], [], []>} : vector<8x8xbf16>, vector<8x32xbf16>, vector<8x32xf32> -> vector<8x32xf32>
    %189 = arith.addf %165, %188 : vector<8x32xf32>
    %190 = vector.extract_strided_slice %161 {offsets = [0, 8], sizes = [8, 8], strides = [1, 1]} : vector<8x32xbf16> to vector<8x8xbf16>
    %191 = vector.extract_strided_slice %162 {offsets = [0, 8], sizes = [8, 8], strides = [1, 1]} : vector<8x32xbf16> to vector<8x8xbf16>
    %cst_60 = arith.constant dense<0.000000e+00> : vector<8x8xf32>
    %192 = tpu.matmul %190, %191, %cst_60 {dimension_numbers = #tpu.dot_dimension_numbers<[1], [1], [0], [0], [0, 0, 1, 0], [], []>} : vector<8x8xbf16>, vector<8x8xbf16>, vector<8x8xf32> -> vector<8x8xf32>
    %cst_61 = arith.constant 0.353553385 : f32
    %193 = vector.broadcast %cst_61 : f32 to vector<8x8xf32>
    %194 = arith.mulf %192, %193 : vector<8x8xf32>
    %195 = vector.broadcast %164 : vector<1x8xf32> to vector<8x8xf32>
    %196 = arith.addf %194, %195 : vector<8x8xf32>
    %cst_62 = arith.constant dense<0xFF800000> : vector<8xf32>
    %197 = vector.multi_reduction <maximumf>, %196, %cst_62 [1] : vector<8x8xf32> to vector<8xf32>
    %198 = vector.shape_cast %197 : vector<8xf32> to vector<8x1xf32>
    %199 = vector.broadcast %198 : vector<8x1xf32> to vector<8x8xf32>
    %200 = arith.subf %196, %199 : vector<8x8xf32>
    %201 = math.exp %200 : vector<8x8xf32>
    %cst_63 = arith.constant dense<0.000000e+00> : vector<8xf32>
    %202 = vector.multi_reduction <add>, %201, %cst_63 [1] : vector<8x8xf32> to vector<8xf32>
    %203 = vector.shape_cast %202 : vector<8xf32> to vector<8x1xf32>
    %204 = tpu.reciprocal %203 {approx = true} : vector<8x1xf32> -> vector<8x1xf32>
    %205 = vector.broadcast %204 : vector<8x1xf32> to vector<8x8xf32>
    %206 = arith.mulf %201, %205 : vector<8x8xf32>
    %207 = arith.truncf %206 : vector<8x8xf32> to vector<8x8xbf16>
    %208 = vector.extract_strided_slice %163 {offsets = [0, 8], sizes = [8, 8], strides = [1, 1]} : vector<8x32xbf16> to vector<8x8xbf16>
    %cst_64 = arith.constant dense<0.000000e+00> : vector<8x8xf32>
    %209 = tpu.matmul %207, %208, %cst_64 {dimension_numbers = #tpu.dot_dimension_numbers<[1], [0], [0], [1], [0, 0, 1, 1], [], []>} : vector<8x8xbf16>, vector<8x8xbf16>, vector<8x8xf32> -> vector<8x8xf32>
    %210 = arith.truncf %209 : vector<8x8xf32> to vector<8x8xbf16>
    %211 = vector.extract_strided_slice %52 {offsets = [8, 0], sizes = [8, 32], strides = [1, 1]} : vector<32x32xbf16> to vector<8x32xbf16>
    %cst_65 = arith.constant dense<0.000000e+00> : vector<8x32xf32>
    %212 = tpu.matmul %210, %211, %cst_65 {dimension_numbers = #tpu.dot_dimension_numbers<[1], [0], [0], [1], [0, 0, 1, 1], [], []>} : vector<8x8xbf16>, vector<8x32xbf16>, vector<8x32xf32> -> vector<8x32xf32>
    %213 = arith.addf %189, %212 : vector<8x32xf32>
    %214 = vector.extract_strided_slice %161 {offsets = [0, 16], sizes = [8, 8], strides = [1, 1]} : vector<8x32xbf16> to vector<8x8xbf16>
    %215 = vector.extract_strided_slice %162 {offsets = [0, 16], sizes = [8, 8], strides = [1, 1]} : vector<8x32xbf16> to vector<8x8xbf16>
    %cst_66 = arith.constant dense<0.000000e+00> : vector<8x8xf32>
    %216 = tpu.matmul %214, %215, %cst_66 {dimension_numbers = #tpu.dot_dimension_numbers<[1], [1], [0], [0], [0, 0, 1, 0], [], []>} : vector<8x8xbf16>, vector<8x8xbf16>, vector<8x8xf32> -> vector<8x8xf32>
    %cst_67 = arith.constant 0.353553385 : f32
    %217 = vector.broadcast %cst_67 : f32 to vector<8x8xf32>
    %218 = arith.mulf %216, %217 : vector<8x8xf32>
    %219 = vector.broadcast %164 : vector<1x8xf32> to vector<8x8xf32>
    %220 = arith.addf %218, %219 : vector<8x8xf32>
    %cst_68 = arith.constant dense<0xFF800000> : vector<8xf32>
    %221 = vector.multi_reduction <maximumf>, %220, %cst_68 [1] : vector<8x8xf32> to vector<8xf32>
    %222 = vector.shape_cast %221 : vector<8xf32> to vector<8x1xf32>
    %223 = vector.broadcast %222 : vector<8x1xf32> to vector<8x8xf32>
    %224 = arith.subf %220, %223 : vector<8x8xf32>
    %225 = math.exp %224 : vector<8x8xf32>
    %cst_69 = arith.constant dense<0.000000e+00> : vector<8xf32>
    %226 = vector.multi_reduction <add>, %225, %cst_69 [1] : vector<8x8xf32> to vector<8xf32>
    %227 = vector.shape_cast %226 : vector<8xf32> to vector<8x1xf32>
    %228 = tpu.reciprocal %227 {approx = true} : vector<8x1xf32> -> vector<8x1xf32>
    %229 = vector.broadcast %228 : vector<8x1xf32> to vector<8x8xf32>
    %230 = arith.mulf %225, %229 : vector<8x8xf32>
    %231 = arith.truncf %230 : vector<8x8xf32> to vector<8x8xbf16>
    %232 = vector.extract_strided_slice %163 {offsets = [0, 16], sizes = [8, 8], strides = [1, 1]} : vector<8x32xbf16> to vector<8x8xbf16>
    %cst_70 = arith.constant dense<0.000000e+00> : vector<8x8xf32>
    %233 = tpu.matmul %231, %232, %cst_70 {dimension_numbers = #tpu.dot_dimension_numbers<[1], [0], [0], [1], [0, 0, 1, 1], [], []>} : vector<8x8xbf16>, vector<8x8xbf16>, vector<8x8xf32> -> vector<8x8xf32>
    %234 = arith.truncf %233 : vector<8x8xf32> to vector<8x8xbf16>
    %235 = vector.extract_strided_slice %52 {offsets = [16, 0], sizes = [8, 32], strides = [1, 1]} : vector<32x32xbf16> to vector<8x32xbf16>
    %cst_71 = arith.constant dense<0.000000e+00> : vector<8x32xf32>
    %236 = tpu.matmul %234, %235, %cst_71 {dimension_numbers = #tpu.dot_dimension_numbers<[1], [0], [0], [1], [0, 0, 1, 1], [], []>} : vector<8x8xbf16>, vector<8x32xbf16>, vector<8x32xf32> -> vector<8x32xf32>
    %237 = arith.addf %213, %236 : vector<8x32xf32>
    %238 = vector.extract_strided_slice %161 {offsets = [0, 24], sizes = [8, 8], strides = [1, 1]} : vector<8x32xbf16> to vector<8x8xbf16>
    %239 = vector.extract_strided_slice %162 {offsets = [0, 24], sizes = [8, 8], strides = [1, 1]} : vector<8x32xbf16> to vector<8x8xbf16>
    %cst_72 = arith.constant dense<0.000000e+00> : vector<8x8xf32>
    %240 = tpu.matmul %238, %239, %cst_72 {dimension_numbers = #tpu.dot_dimension_numbers<[1], [1], [0], [0], [0, 0, 1, 0], [], []>} : vector<8x8xbf16>, vector<8x8xbf16>, vector<8x8xf32> -> vector<8x8xf32>
    %cst_73 = arith.constant 0.353553385 : f32
    %241 = vector.broadcast %cst_73 : f32 to vector<8x8xf32>
    %242 = arith.mulf %240, %241 : vector<8x8xf32>
    %243 = vector.broadcast %164 : vector<1x8xf32> to vector<8x8xf32>
    %244 = arith.addf %242, %243 : vector<8x8xf32>
    %cst_74 = arith.constant dense<0xFF800000> : vector<8xf32>
    %245 = vector.multi_reduction <maximumf>, %244, %cst_74 [1] : vector<8x8xf32> to vector<8xf32>
    %246 = vector.shape_cast %245 : vector<8xf32> to vector<8x1xf32>
    %247 = vector.broadcast %246 : vector<8x1xf32> to vector<8x8xf32>
    %248 = arith.subf %244, %247 : vector<8x8xf32>
    %249 = math.exp %248 : vector<8x8xf32>
    %cst_75 = arith.constant dense<0.000000e+00> : vector<8xf32>
    %250 = vector.multi_reduction <add>, %249, %cst_75 [1] : vector<8x8xf32> to vector<8xf32>
    %251 = vector.shape_cast %250 : vector<8xf32> to vector<8x1xf32>
    %252 = tpu.reciprocal %251 {approx = true} : vector<8x1xf32> -> vector<8x1xf32>
    %253 = vector.broadcast %252 : vector<8x1xf32> to vector<8x8xf32>
    %254 = arith.mulf %249, %253 : vector<8x8xf32>
    %255 = arith.truncf %254 : vector<8x8xf32> to vector<8x8xbf16>
    %256 = vector.extract_strided_slice %163 {offsets = [0, 24], sizes = [8, 8], strides = [1, 1]} : vector<8x32xbf16> to vector<8x8xbf16>
    %cst_76 = arith.constant dense<0.000000e+00> : vector<8x8xf32>
    %257 = tpu.matmul %255, %256, %cst_76 {dimension_numbers = #tpu.dot_dimension_numbers<[1], [0], [0], [1], [0, 0, 1, 1], [], []>} : vector<8x8xbf16>, vector<8x8xbf16>, vector<8x8xf32> -> vector<8x8xf32>
    %258 = arith.truncf %257 : vector<8x8xf32> to vector<8x8xbf16>
    %259 = vector.extract_strided_slice %52 {offsets = [24, 0], sizes = [8, 32], strides = [1, 1]} : vector<32x32xbf16> to vector<8x32xbf16>
    %cst_77 = arith.constant dense<0.000000e+00> : vector<8x32xf32>
    %260 = tpu.matmul %258, %259, %cst_77 {dimension_numbers = #tpu.dot_dimension_numbers<[1], [0], [0], [1], [0, 0, 1, 1], [], []>} : vector<8x8xbf16>, vector<8x32xbf16>, vector<8x32xf32> -> vector<8x32xf32>
    %261 = arith.addf %237, %260 : vector<8x32xf32>
    %262 = tpu.concatenate %160, %261 in 0 : vector<8x32xf32>, vector<8x32xf32> -> vector<16x32xf32>
    %263 = vector.broadcast %45 : vector<1x32xf32> to vector<16x32xf32>
    %264 = arith.addf %262, %263 : vector<16x32xf32>
    %265 = arith.addf %35, %264 : vector<16x32xf32>
    %cst_78 = arith.constant dense<0.000000e+00> : vector<16xf32>
    %266 = vector.multi_reduction <add>, %265, %cst_78 [1] : vector<16x32xf32> to vector<16xf32>
    %267 = vector.shape_cast %266 : vector<16xf32> to vector<16x1xf32>
    %cst_79 = arith.constant 3.200000e+01 : f32
    %268 = vector.broadcast %cst_79 : f32 to vector<16x1xf32>
    %269 = arith.divf %267, %268 : vector<16x1xf32>
    %270 = vector.broadcast %269 : vector<16x1xf32> to vector<16x32xf32>
    %271 = arith.subf %265, %270 : vector<16x32xf32>
    %272 = arith.mulf %271, %271 : vector<16x32xf32>
    %cst_80 = arith.constant dense<0.000000e+00> : vector<16xf32>
    %273 = vector.multi_reduction <add>, %272, %cst_80 [1] : vector<16x32xf32> to vector<16xf32>
    %274 = vector.shape_cast %273 : vector<16xf32> to vector<16x1xf32>
    %cst_81 = arith.constant 3.200000e+01 : f32
    %275 = vector.broadcast %cst_81 : f32 to vector<16x1xf32>
    %276 = arith.divf %274, %275 : vector<16x1xf32>
    %277 = vector.broadcast %269 : vector<16x1xf32> to vector<16x32xf32>
    %278 = arith.subf %265, %277 : vector<16x32xf32>
    %cst_82 = arith.constant 9.99999996E-13 : f32
    %279 = vector.broadcast %cst_82 : f32 to vector<16x1xf32>
    %280 = arith.addf %276, %279 : vector<16x1xf32>
    %281 = math.rsqrt %280 : vector<16x1xf32>
    %282 = vector.broadcast %281 : vector<16x1xf32> to vector<16x32xf32>
    %283 = arith.mulf %278, %282 : vector<16x32xf32>
    %284 = vector.broadcast %47 : vector<1x32xf32> to vector<16x32xf32>
    %285 = arith.mulf %283, %284 : vector<16x32xf32>
    %286 = vector.broadcast %48 : vector<1x32xf32> to vector<16x32xf32>
    %287 = arith.addf %285, %286 : vector<16x32xf32>
    %288 = arith.truncf %287 : vector<16x32xf32> to vector<16x32xbf16>
    %c0_83 = arith.constant 0 : index
    %c0_84 = arith.constant 0 : index
    %c0_85 = arith.constant 0 : index
    %289 = vector.load %arg9[%c0_83, %c0_84, %c0_85] : memref<2x32x128xbf16, #tpu.memory_space<vmem>>, vector<1x32x128xbf16>
    %290 = vector.shape_cast %289 : vector<1x32x128xbf16> to vector<32x128xbf16>
    %cst_86 = arith.constant dense<0.000000e+00> : vector<16x128xf32>
    %291 = tpu.matmul %288, %290, %cst_86 {dimension_numbers = #tpu.dot_dimension_numbers<[1], [0], [0], [1], [0, 0, 1, 1], [], []>} : vector<16x32xbf16>, vector<32x128xbf16>, vector<16x128xf32> -> vector<16x128xf32>
    %292 = vector.broadcast %44 : vector<1x128xf32> to vector<16x128xf32>
    %293 = arith.addf %291, %292 : vector<16x128xf32>
    %294 = arith.mulf %293, %293 : vector<16x128xf32>
    %295 = arith.mulf %293, %294 : vector<16x128xf32>
    %cst_87 = arith.constant 4.471500e-02 : f32
    %296 = vector.broadcast %cst_87 : f32 to vector<16x128xf32>
    %297 = arith.mulf %296, %295 : vector<16x128xf32>
    %298 = arith.addf %293, %297 : vector<16x128xf32>
    %cst_88 = arith.constant 0.797884583 : f32
    %299 = vector.broadcast %cst_88 : f32 to vector<16x128xf32>
    %300 = arith.mulf %299, %298 : vector<16x128xf32>
    %301 = math.tanh %300 : vector<16x128xf32>
    %cst_89 = arith.constant 1.000000e+00 : f32
    %302 = vector.broadcast %cst_89 : f32 to vector<16x128xf32>
    %303 = arith.addf %302, %301 : vector<16x128xf32>
    %cst_90 = arith.constant 5.000000e-01 : f32
    %304 = vector.broadcast %cst_90 : f32 to vector<16x128xf32>
    %305 = arith.mulf %304, %303 : vector<16x128xf32>
    %306 = arith.mulf %293, %305 : vector<16x128xf32>
    %307 = arith.truncf %306 : vector<16x128xf32> to vector<16x128xbf16>
    %c0_91 = arith.constant 0 : index
    %c0_92 = arith.constant 0 : index
    %c0_93 = arith.constant 0 : index
    %308 = vector.load %arg10[%c0_91, %c0_92, %c0_93] : memref<2x128x32xbf16, #tpu.memory_space<vmem>>, vector<1x128x32xbf16>
    %309 = vector.shape_cast %308 : vector<1x128x32xbf16> to vector<128x32xbf16>
    %cst_94 = arith.constant dense<0.000000e+00> : vector<16x32xf32>
    %310 = tpu.matmul %307, %309, %cst_94 {dimension_numbers = #tpu.dot_dimension_numbers<[1], [0], [0], [1], [0, 0, 1, 1], [], []>} : vector<16x128xbf16>, vector<128x32xbf16>, vector<16x32xf32> -> vector<16x32xf32>
    %311 = vector.broadcast %46 : vector<1x32xf32> to vector<16x32xf32>
    %312 = arith.addf %310, %311 : vector<16x32xf32>
    %313 = arith.addf %287, %312 : vector<16x32xf32>
    %cst_95 = arith.constant dense<0.000000e+00> : vector<16xf32>
    %314 = vector.multi_reduction <add>, %313, %cst_95 [1] : vector<16x32xf32> to vector<16xf32>
    %315 = vector.shape_cast %314 : vector<16xf32> to vector<16x1xf32>
    %cst_96 = arith.constant 3.200000e+01 : f32
    %316 = vector.broadcast %cst_96 : f32 to vector<16x1xf32>
    %317 = arith.divf %315, %316 : vector<16x1xf32>
    %318 = vector.broadcast %317 : vector<16x1xf32> to vector<16x32xf32>
    %319 = arith.subf %313, %318 : vector<16x32xf32>
    %320 = arith.mulf %319, %319 : vector<16x32xf32>
    %cst_97 = arith.constant dense<0.000000e+00> : vector<16xf32>
    %321 = vector.multi_reduction <add>, %320, %cst_97 [1] : vector<16x32xf32> to vector<16xf32>
    %322 = vector.shape_cast %321 : vector<16xf32> to vector<16x1xf32>
    %cst_98 = arith.constant 3.200000e+01 : f32
    %323 = vector.broadcast %cst_98 : f32 to vector<16x1xf32>
    %324 = arith.divf %322, %323 : vector<16x1xf32>
    %325 = vector.broadcast %317 : vector<16x1xf32> to vector<16x32xf32>
    %326 = arith.subf %313, %325 : vector<16x32xf32>
    %cst_99 = arith.constant 9.99999996E-13 : f32
    %327 = vector.broadcast %cst_99 : f32 to vector<16x1xf32>
    %328 = arith.addf %324, %327 : vector<16x1xf32>
    %329 = math.rsqrt %328 : vector<16x1xf32>
    %330 = vector.broadcast %329 : vector<16x1xf32> to vector<16x32xf32>
    %331 = arith.mulf %326, %330 : vector<16x32xf32>
    %332 = vector.broadcast %49 : vector<1x32xf32> to vector<16x32xf32>
    %333 = arith.mulf %331, %332 : vector<16x32xf32>
    %334 = vector.broadcast %50 : vector<1x32xf32> to vector<16x32xf32>
    %335 = arith.addf %333, %334 : vector<16x32xf32>
    %c1 = arith.constant 1 : index
    %c0_100 = arith.constant 0 : index
    %c0_101 = arith.constant 0 : index
    %336 = vector.load %arg11[%c1, %c0_100, %c0_101] : memref<2x8x128xf32, #tpu.memory_space<vmem>>, vector<1x8x128xf32>
    %337 = vector.shape_cast %336 : vector<1x8x128xf32> to vector<8x128xf32>
    %338 = vector.extract_strided_slice %337 {offsets = [0, 0], sizes = [1, 128], strides = [1, 1]} : vector<8x128xf32> to vector<1x128xf32>
    %339 = vector.extract_strided_slice %337 {offsets = [1, 0], sizes = [1, 128], strides = [1, 1]} : vector<8x128xf32> to vector<1x128xf32>
    %340 = vector.extract_strided_slice %337 {offsets = [2, 0], sizes = [1, 32], strides = [1, 1]} : vector<8x128xf32> to vector<1x32xf32>
    %341 = vector.extract_strided_slice %337 {offsets = [2, 32], sizes = [1, 32], strides = [1, 1]} : vector<8x128xf32> to vector<1x32xf32>
    %342 = vector.extract_strided_slice %337 {offsets = [3, 0], sizes = [1, 32], strides = [1, 1]} : vector<8x128xf32> to vector<1x32xf32>
    %343 = vector.extract_strided_slice %337 {offsets = [3, 32], sizes = [1, 32], strides = [1, 1]} : vector<8x128xf32> to vector<1x32xf32>
    %344 = vector.extract_strided_slice %337 {offsets = [3, 64], sizes = [1, 32], strides = [1, 1]} : vector<8x128xf32> to vector<1x32xf32>
    %345 = vector.extract_strided_slice %337 {offsets = [3, 96], sizes = [1, 32], strides = [1, 1]} : vector<8x128xf32> to vector<1x32xf32>
    %c1_102 = arith.constant 1 : index
    %c0_103 = arith.constant 0 : index
    %c0_104 = arith.constant 0 : index
    %346 = vector.load %arg8[%c1_102, %c0_103, %c0_104] : memref<2x32x32xbf16, #tpu.memory_space<vmem>>, vector<1x32x32xbf16>
    %347 = vector.shape_cast %346 : vector<1x32x32xbf16> to vector<32x32xbf16>
    %348 = arith.truncf %335 : vector<16x32xf32> to vector<16x32xbf16>
    %c1_105 = arith.constant 1 : index
    %c0_106 = arith.constant 0 : index
    %c0_107 = arith.constant 0 : index
    %349 = vector.load %arg7[%c1_105, %c0_106, %c0_107] : memref<2x32x128xbf16, #tpu.memory_space<vmem>>, vector<1x32x128xbf16>
    %350 = vector.shape_cast %349 : vector<1x32x128xbf16> to vector<32x128xbf16>
    %cst_108 = arith.constant dense<0.000000e+00> : vector<16x128xf32>
    %351 = tpu.matmul %348, %350, %cst_108 {dimension_numbers = #tpu.dot_dimension_numbers<[1], [0], [0], [1], [0, 0, 1, 1], [], []>} : vector<16x32xbf16>, vector<32x128xbf16>, vector<16x128xf32> -> vector<16x128xf32>
    %352 = vector.broadcast %338 : vector<1x128xf32> to vector<16x128xf32>
    %353 = arith.addf %351, %352 : vector<16x128xf32>
    %354 = arith.truncf %353 : vector<16x128xf32> to vector<16x128xbf16>
    %355 = vector.extract_strided_slice %354 {offsets = [0, 0], sizes = [8, 32], strides = [1, 1]} : vector<16x128xbf16> to vector<8x32xbf16>
    %356 = vector.extract_strided_slice %354 {offsets = [0, 32], sizes = [8, 32], strides = [1, 1]} : vector<16x128xbf16> to vector<8x32xbf16>
    %357 = vector.extract_strided_slice %354 {offsets = [0, 64], sizes = [8, 32], strides = [1, 1]} : vector<16x128xbf16> to vector<8x32xbf16>
    %358 = vector.extract_strided_slice %40 {offsets = [0, 0], sizes = [1, 8], strides = [1, 1]} : vector<2x8xf32> to vector<1x8xf32>
    %cst_109 = arith.constant 0.000000e+00 : f32
    %359 = vector.broadcast %cst_109 : f32 to vector<8x32xf32>
    %360 = vector.extract_strided_slice %355 {offsets = [0, 0], sizes = [8, 8], strides = [1, 1]} : vector<8x32xbf16> to vector<8x8xbf16>
    %361 = vector.extract_strided_slice %356 {offsets = [0, 0], sizes = [8, 8], strides = [1, 1]} : vector<8x32xbf16> to vector<8x8xbf16>
    %cst_110 = arith.constant dense<0.000000e+00> : vector<8x8xf32>
    %362 = tpu.matmul %360, %361, %cst_110 {dimension_numbers = #tpu.dot_dimension_numbers<[1], [1], [0], [0], [0, 0, 1, 0], [], []>} : vector<8x8xbf16>, vector<8x8xbf16>, vector<8x8xf32> -> vector<8x8xf32>
    %cst_111 = arith.constant 0.353553385 : f32
    %363 = vector.broadcast %cst_111 : f32 to vector<8x8xf32>
    %364 = arith.mulf %362, %363 : vector<8x8xf32>
    %365 = vector.broadcast %358 : vector<1x8xf32> to vector<8x8xf32>
    %366 = arith.addf %364, %365 : vector<8x8xf32>
    %cst_112 = arith.constant dense<0xFF800000> : vector<8xf32>
    %367 = vector.multi_reduction <maximumf>, %366, %cst_112 [1] : vector<8x8xf32> to vector<8xf32>
    %368 = vector.shape_cast %367 : vector<8xf32> to vector<8x1xf32>
    %369 = vector.broadcast %368 : vector<8x1xf32> to vector<8x8xf32>
    %370 = arith.subf %366, %369 : vector<8x8xf32>
    %371 = math.exp %370 : vector<8x8xf32>
    %cst_113 = arith.constant dense<0.000000e+00> : vector<8xf32>
    %372 = vector.multi_reduction <add>, %371, %cst_113 [1] : vector<8x8xf32> to vector<8xf32>
    %373 = vector.shape_cast %372 : vector<8xf32> to vector<8x1xf32>
    %374 = tpu.reciprocal %373 {approx = true} : vector<8x1xf32> -> vector<8x1xf32>
    %375 = vector.broadcast %374 : vector<8x1xf32> to vector<8x8xf32>
    %376 = arith.mulf %371, %375 : vector<8x8xf32>
    %377 = arith.truncf %376 : vector<8x8xf32> to vector<8x8xbf16>
    %378 = vector.extract_strided_slice %357 {offsets = [0, 0], sizes = [8, 8], strides = [1, 1]} : vector<8x32xbf16> to vector<8x8xbf16>
    %cst_114 = arith.constant dense<0.000000e+00> : vector<8x8xf32>
    %379 = tpu.matmul %377, %378, %cst_114 {dimension_numbers = #tpu.dot_dimension_numbers<[1], [0], [0], [1], [0, 0, 1, 1], [], []>} : vector<8x8xbf16>, vector<8x8xbf16>, vector<8x8xf32> -> vector<8x8xf32>
    %380 = arith.truncf %379 : vector<8x8xf32> to vector<8x8xbf16>
    %381 = vector.extract_strided_slice %347 {offsets = [0, 0], sizes = [8, 32], strides = [1, 1]} : vector<32x32xbf16> to vector<8x32xbf16>
    %cst_115 = arith.constant dense<0.000000e+00> : vector<8x32xf32>
    %382 = tpu.matmul %380, %381, %cst_115 {dimension_numbers = #tpu.dot_dimension_numbers<[1], [0], [0], [1], [0, 0, 1, 1], [], []>} : vector<8x8xbf16>, vector<8x32xbf16>, vector<8x32xf32> -> vector<8x32xf32>
    %383 = arith.addf %359, %382 : vector<8x32xf32>
    %384 = vector.extract_strided_slice %355 {offsets = [0, 8], sizes = [8, 8], strides = [1, 1]} : vector<8x32xbf16> to vector<8x8xbf16>
    %385 = vector.extract_strided_slice %356 {offsets = [0, 8], sizes = [8, 8], strides = [1, 1]} : vector<8x32xbf16> to vector<8x8xbf16>
    %cst_116 = arith.constant dense<0.000000e+00> : vector<8x8xf32>
    %386 = tpu.matmul %384, %385, %cst_116 {dimension_numbers = #tpu.dot_dimension_numbers<[1], [1], [0], [0], [0, 0, 1, 0], [], []>} : vector<8x8xbf16>, vector<8x8xbf16>, vector<8x8xf32> -> vector<8x8xf32>
    %cst_117 = arith.constant 0.353553385 : f32
    %387 = vector.broadcast %cst_117 : f32 to vector<8x8xf32>
    %388 = arith.mulf %386, %387 : vector<8x8xf32>
    %389 = vector.broadcast %358 : vector<1x8xf32> to vector<8x8xf32>
    %390 = arith.addf %388, %389 : vector<8x8xf32>
    %cst_118 = arith.constant dense<0xFF800000> : vector<8xf32>
    %391 = vector.multi_reduction <maximumf>, %390, %cst_118 [1] : vector<8x8xf32> to vector<8xf32>
    %392 = vector.shape_cast %391 : vector<8xf32> to vector<8x1xf32>
    %393 = vector.broadcast %392 : vector<8x1xf32> to vector<8x8xf32>
    %394 = arith.subf %390, %393 : vector<8x8xf32>
    %395 = math.exp %394 : vector<8x8xf32>
    %cst_119 = arith.constant dense<0.000000e+00> : vector<8xf32>
    %396 = vector.multi_reduction <add>, %395, %cst_119 [1] : vector<8x8xf32> to vector<8xf32>
    %397 = vector.shape_cast %396 : vector<8xf32> to vector<8x1xf32>
    %398 = tpu.reciprocal %397 {approx = true} : vector<8x1xf32> -> vector<8x1xf32>
    %399 = vector.broadcast %398 : vector<8x1xf32> to vector<8x8xf32>
    %400 = arith.mulf %395, %399 : vector<8x8xf32>
    %401 = arith.truncf %400 : vector<8x8xf32> to vector<8x8xbf16>
    %402 = vector.extract_strided_slice %357 {offsets = [0, 8], sizes = [8, 8], strides = [1, 1]} : vector<8x32xbf16> to vector<8x8xbf16>
    %cst_120 = arith.constant dense<0.000000e+00> : vector<8x8xf32>
    %403 = tpu.matmul %401, %402, %cst_120 {dimension_numbers = #tpu.dot_dimension_numbers<[1], [0], [0], [1], [0, 0, 1, 1], [], []>} : vector<8x8xbf16>, vector<8x8xbf16>, vector<8x8xf32> -> vector<8x8xf32>
    %404 = arith.truncf %403 : vector<8x8xf32> to vector<8x8xbf16>
    %405 = vector.extract_strided_slice %347 {offsets = [8, 0], sizes = [8, 32], strides = [1, 1]} : vector<32x32xbf16> to vector<8x32xbf16>
    %cst_121 = arith.constant dense<0.000000e+00> : vector<8x32xf32>
    %406 = tpu.matmul %404, %405, %cst_121 {dimension_numbers = #tpu.dot_dimension_numbers<[1], [0], [0], [1], [0, 0, 1, 1], [], []>} : vector<8x8xbf16>, vector<8x32xbf16>, vector<8x32xf32> -> vector<8x32xf32>
    %407 = arith.addf %383, %406 : vector<8x32xf32>
    %408 = vector.extract_strided_slice %355 {offsets = [0, 16], sizes = [8, 8], strides = [1, 1]} : vector<8x32xbf16> to vector<8x8xbf16>
    %409 = vector.extract_strided_slice %356 {offsets = [0, 16], sizes = [8, 8], strides = [1, 1]} : vector<8x32xbf16> to vector<8x8xbf16>
    %cst_122 = arith.constant dense<0.000000e+00> : vector<8x8xf32>
    %410 = tpu.matmul %408, %409, %cst_122 {dimension_numbers = #tpu.dot_dimension_numbers<[1], [1], [0], [0], [0, 0, 1, 0], [], []>} : vector<8x8xbf16>, vector<8x8xbf16>, vector<8x8xf32> -> vector<8x8xf32>
    %cst_123 = arith.constant 0.353553385 : f32
    %411 = vector.broadcast %cst_123 : f32 to vector<8x8xf32>
    %412 = arith.mulf %410, %411 : vector<8x8xf32>
    %413 = vector.broadcast %358 : vector<1x8xf32> to vector<8x8xf32>
    %414 = arith.addf %412, %413 : vector<8x8xf32>
    %cst_124 = arith.constant dense<0xFF800000> : vector<8xf32>
    %415 = vector.multi_reduction <maximumf>, %414, %cst_124 [1] : vector<8x8xf32> to vector<8xf32>
    %416 = vector.shape_cast %415 : vector<8xf32> to vector<8x1xf32>
    %417 = vector.broadcast %416 : vector<8x1xf32> to vector<8x8xf32>
    %418 = arith.subf %414, %417 : vector<8x8xf32>
    %419 = math.exp %418 : vector<8x8xf32>
    %cst_125 = arith.constant dense<0.000000e+00> : vector<8xf32>
    %420 = vector.multi_reduction <add>, %419, %cst_125 [1] : vector<8x8xf32> to vector<8xf32>
    %421 = vector.shape_cast %420 : vector<8xf32> to vector<8x1xf32>
    %422 = tpu.reciprocal %421 {approx = true} : vector<8x1xf32> -> vector<8x1xf32>
    %423 = vector.broadcast %422 : vector<8x1xf32> to vector<8x8xf32>
    %424 = arith.mulf %419, %423 : vector<8x8xf32>
    %425 = arith.truncf %424 : vector<8x8xf32> to vector<8x8xbf16>
    %426 = vector.extract_strided_slice %357 {offsets = [0, 16], sizes = [8, 8], strides = [1, 1]} : vector<8x32xbf16> to vector<8x8xbf16>
    %cst_126 = arith.constant dense<0.000000e+00> : vector<8x8xf32>
    %427 = tpu.matmul %425, %426, %cst_126 {dimension_numbers = #tpu.dot_dimension_numbers<[1], [0], [0], [1], [0, 0, 1, 1], [], []>} : vector<8x8xbf16>, vector<8x8xbf16>, vector<8x8xf32> -> vector<8x8xf32>
    %428 = arith.truncf %427 : vector<8x8xf32> to vector<8x8xbf16>
    %429 = vector.extract_strided_slice %347 {offsets = [16, 0], sizes = [8, 32], strides = [1, 1]} : vector<32x32xbf16> to vector<8x32xbf16>
    %cst_127 = arith.constant dense<0.000000e+00> : vector<8x32xf32>
    %430 = tpu.matmul %428, %429, %cst_127 {dimension_numbers = #tpu.dot_dimension_numbers<[1], [0], [0], [1], [0, 0, 1, 1], [], []>} : vector<8x8xbf16>, vector<8x32xbf16>, vector<8x32xf32> -> vector<8x32xf32>
    %431 = arith.addf %407, %430 : vector<8x32xf32>
    %432 = vector.extract_strided_slice %355 {offsets = [0, 24], sizes = [8, 8], strides = [1, 1]} : vector<8x32xbf16> to vector<8x8xbf16>
    %433 = vector.extract_strided_slice %356 {offsets = [0, 24], sizes = [8, 8], strides = [1, 1]} : vector<8x32xbf16> to vector<8x8xbf16>
    %cst_128 = arith.constant dense<0.000000e+00> : vector<8x8xf32>
    %434 = tpu.matmul %432, %433, %cst_128 {dimension_numbers = #tpu.dot_dimension_numbers<[1], [1], [0], [0], [0, 0, 1, 0], [], []>} : vector<8x8xbf16>, vector<8x8xbf16>, vector<8x8xf32> -> vector<8x8xf32>
    %cst_129 = arith.constant 0.353553385 : f32
    %435 = vector.broadcast %cst_129 : f32 to vector<8x8xf32>
    %436 = arith.mulf %434, %435 : vector<8x8xf32>
    %437 = vector.broadcast %358 : vector<1x8xf32> to vector<8x8xf32>
    %438 = arith.addf %436, %437 : vector<8x8xf32>
    %cst_130 = arith.constant dense<0xFF800000> : vector<8xf32>
    %439 = vector.multi_reduction <maximumf>, %438, %cst_130 [1] : vector<8x8xf32> to vector<8xf32>
    %440 = vector.shape_cast %439 : vector<8xf32> to vector<8x1xf32>
    %441 = vector.broadcast %440 : vector<8x1xf32> to vector<8x8xf32>
    %442 = arith.subf %438, %441 : vector<8x8xf32>
    %443 = math.exp %442 : vector<8x8xf32>
    %cst_131 = arith.constant dense<0.000000e+00> : vector<8xf32>
    %444 = vector.multi_reduction <add>, %443, %cst_131 [1] : vector<8x8xf32> to vector<8xf32>
    %445 = vector.shape_cast %444 : vector<8xf32> to vector<8x1xf32>
    %446 = tpu.reciprocal %445 {approx = true} : vector<8x1xf32> -> vector<8x1xf32>
    %447 = vector.broadcast %446 : vector<8x1xf32> to vector<8x8xf32>
    %448 = arith.mulf %443, %447 : vector<8x8xf32>
    %449 = arith.truncf %448 : vector<8x8xf32> to vector<8x8xbf16>
    %450 = vector.extract_strided_slice %357 {offsets = [0, 24], sizes = [8, 8], strides = [1, 1]} : vector<8x32xbf16> to vector<8x8xbf16>
    %cst_132 = arith.constant dense<0.000000e+00> : vector<8x8xf32>
    %451 = tpu.matmul %449, %450, %cst_132 {dimension_numbers = #tpu.dot_dimension_numbers<[1], [0], [0], [1], [0, 0, 1, 1], [], []>} : vector<8x8xbf16>, vector<8x8xbf16>, vector<8x8xf32> -> vector<8x8xf32>
    %452 = arith.truncf %451 : vector<8x8xf32> to vector<8x8xbf16>
    %453 = vector.extract_strided_slice %347 {offsets = [24, 0], sizes = [8, 32], strides = [1, 1]} : vector<32x32xbf16> to vector<8x32xbf16>
    %cst_133 = arith.constant dense<0.000000e+00> : vector<8x32xf32>
    %454 = tpu.matmul %452, %453, %cst_133 {dimension_numbers = #tpu.dot_dimension_numbers<[1], [0], [0], [1], [0, 0, 1, 1], [], []>} : vector<8x8xbf16>, vector<8x32xbf16>, vector<8x32xf32> -> vector<8x32xf32>
    %455 = arith.addf %431, %454 : vector<8x32xf32>
    %456 = vector.extract_strided_slice %354 {offsets = [8, 0], sizes = [8, 32], strides = [1, 1]} : vector<16x128xbf16> to vector<8x32xbf16>
    %457 = vector.extract_strided_slice %354 {offsets = [8, 32], sizes = [8, 32], strides = [1, 1]} : vector<16x128xbf16> to vector<8x32xbf16>
    %458 = vector.extract_strided_slice %354 {offsets = [8, 64], sizes = [8, 32], strides = [1, 1]} : vector<16x128xbf16> to vector<8x32xbf16>
    %459 = vector.extract_strided_slice %40 {offsets = [1, 0], sizes = [1, 8], strides = [1, 1]} : vector<2x8xf32> to vector<1x8xf32>
    %cst_134 = arith.constant 0.000000e+00 : f32
    %460 = vector.broadcast %cst_134 : f32 to vector<8x32xf32>
    %461 = vector.extract_strided_slice %456 {offsets = [0, 0], sizes = [8, 8], strides = [1, 1]} : vector<8x32xbf16> to vector<8x8xbf16>
    %462 = vector.extract_strided_slice %457 {offsets = [0, 0], sizes = [8, 8], strides = [1, 1]} : vector<8x32xbf16> to vector<8x8xbf16>
    %cst_135 = arith.constant dense<0.000000e+00> : vector<8x8xf32>
    %463 = tpu.matmul %461, %462, %cst_135 {dimension_numbers = #tpu.dot_dimension_numbers<[1], [1], [0], [0], [0, 0, 1, 0], [], []>} : vector<8x8xbf16>, vector<8x8xbf16>, vector<8x8xf32> -> vector<8x8xf32>
    %cst_136 = arith.constant 0.353553385 : f32
    %464 = vector.broadcast %cst_136 : f32 to vector<8x8xf32>
    %465 = arith.mulf %463, %464 : vector<8x8xf32>
    %466 = vector.broadcast %459 : vector<1x8xf32> to vector<8x8xf32>
    %467 = arith.addf %465, %466 : vector<8x8xf32>
    %cst_137 = arith.constant dense<0xFF800000> : vector<8xf32>
    %468 = vector.multi_reduction <maximumf>, %467, %cst_137 [1] : vector<8x8xf32> to vector<8xf32>
    %469 = vector.shape_cast %468 : vector<8xf32> to vector<8x1xf32>
    %470 = vector.broadcast %469 : vector<8x1xf32> to vector<8x8xf32>
    %471 = arith.subf %467, %470 : vector<8x8xf32>
    %472 = math.exp %471 : vector<8x8xf32>
    %cst_138 = arith.constant dense<0.000000e+00> : vector<8xf32>
    %473 = vector.multi_reduction <add>, %472, %cst_138 [1] : vector<8x8xf32> to vector<8xf32>
    %474 = vector.shape_cast %473 : vector<8xf32> to vector<8x1xf32>
    %475 = tpu.reciprocal %474 {approx = true} : vector<8x1xf32> -> vector<8x1xf32>
    %476 = vector.broadcast %475 : vector<8x1xf32> to vector<8x8xf32>
    %477 = arith.mulf %472, %476 : vector<8x8xf32>
    %478 = arith.truncf %477 : vector<8x8xf32> to vector<8x8xbf16>
    %479 = vector.extract_strided_slice %458 {offsets = [0, 0], sizes = [8, 8], strides = [1, 1]} : vector<8x32xbf16> to vector<8x8xbf16>
    %cst_139 = arith.constant dense<0.000000e+00> : vector<8x8xf32>
    %480 = tpu.matmul %478, %479, %cst_139 {dimension_numbers = #tpu.dot_dimension_numbers<[1], [0], [0], [1], [0, 0, 1, 1], [], []>} : vector<8x8xbf16>, vector<8x8xbf16>, vector<8x8xf32> -> vector<8x8xf32>
    %481 = arith.truncf %480 : vector<8x8xf32> to vector<8x8xbf16>
    %482 = vector.extract_strided_slice %347 {offsets = [0, 0], sizes = [8, 32], strides = [1, 1]} : vector<32x32xbf16> to vector<8x32xbf16>
    %cst_140 = arith.constant dense<0.000000e+00> : vector<8x32xf32>
    %483 = tpu.matmul %481, %482, %cst_140 {dimension_numbers = #tpu.dot_dimension_numbers<[1], [0], [0], [1], [0, 0, 1, 1], [], []>} : vector<8x8xbf16>, vector<8x32xbf16>, vector<8x32xf32> -> vector<8x32xf32>
    %484 = arith.addf %460, %483 : vector<8x32xf32>
    %485 = vector.extract_strided_slice %456 {offsets = [0, 8], sizes = [8, 8], strides = [1, 1]} : vector<8x32xbf16> to vector<8x8xbf16>
    %486 = vector.extract_strided_slice %457 {offsets = [0, 8], sizes = [8, 8], strides = [1, 1]} : vector<8x32xbf16> to vector<8x8xbf16>
    %cst_141 = arith.constant dense<0.000000e+00> : vector<8x8xf32>
    %487 = tpu.matmul %485, %486, %cst_141 {dimension_numbers = #tpu.dot_dimension_numbers<[1], [1], [0], [0], [0, 0, 1, 0], [], []>} : vector<8x8xbf16>, vector<8x8xbf16>, vector<8x8xf32> -> vector<8x8xf32>
    %cst_142 = arith.constant 0.353553385 : f32
    %488 = vector.broadcast %cst_142 : f32 to vector<8x8xf32>
    %489 = arith.mulf %487, %488 : vector<8x8xf32>
    %490 = vector.broadcast %459 : vector<1x8xf32> to vector<8x8xf32>
    %491 = arith.addf %489, %490 : vector<8x8xf32>
    %cst_143 = arith.constant dense<0xFF800000> : vector<8xf32>
    %492 = vector.multi_reduction <maximumf>, %491, %cst_143 [1] : vector<8x8xf32> to vector<8xf32>
    %493 = vector.shape_cast %492 : vector<8xf32> to vector<8x1xf32>
    %494 = vector.broadcast %493 : vector<8x1xf32> to vector<8x8xf32>
    %495 = arith.subf %491, %494 : vector<8x8xf32>
    %496 = math.exp %495 : vector<8x8xf32>
    %cst_144 = arith.constant dense<0.000000e+00> : vector<8xf32>
    %497 = vector.multi_reduction <add>, %496, %cst_144 [1] : vector<8x8xf32> to vector<8xf32>
    %498 = vector.shape_cast %497 : vector<8xf32> to vector<8x1xf32>
    %499 = tpu.reciprocal %498 {approx = true} : vector<8x1xf32> -> vector<8x1xf32>
    %500 = vector.broadcast %499 : vector<8x1xf32> to vector<8x8xf32>
    %501 = arith.mulf %496, %500 : vector<8x8xf32>
    %502 = arith.truncf %501 : vector<8x8xf32> to vector<8x8xbf16>
    %503 = vector.extract_strided_slice %458 {offsets = [0, 8], sizes = [8, 8], strides = [1, 1]} : vector<8x32xbf16> to vector<8x8xbf16>
    %cst_145 = arith.constant dense<0.000000e+00> : vector<8x8xf32>
    %504 = tpu.matmul %502, %503, %cst_145 {dimension_numbers = #tpu.dot_dimension_numbers<[1], [0], [0], [1], [0, 0, 1, 1], [], []>} : vector<8x8xbf16>, vector<8x8xbf16>, vector<8x8xf32> -> vector<8x8xf32>
    %505 = arith.truncf %504 : vector<8x8xf32> to vector<8x8xbf16>
    %506 = vector.extract_strided_slice %347 {offsets = [8, 0], sizes = [8, 32], strides = [1, 1]} : vector<32x32xbf16> to vector<8x32xbf16>
    %cst_146 = arith.constant dense<0.000000e+00> : vector<8x32xf32>
    %507 = tpu.matmul %505, %506, %cst_146 {dimension_numbers = #tpu.dot_dimension_numbers<[1], [0], [0], [1], [0, 0, 1, 1], [], []>} : vector<8x8xbf16>, vector<8x32xbf16>, vector<8x32xf32> -> vector<8x32xf32>
    %508 = arith.addf %484, %507 : vector<8x32xf32>
    %509 = vector.extract_strided_slice %456 {offsets = [0, 16], sizes = [8, 8], strides = [1, 1]} : vector<8x32xbf16> to vector<8x8xbf16>
    %510 = vector.extract_strided_slice %457 {offsets = [0, 16], sizes = [8, 8], strides = [1, 1]} : vector<8x32xbf16> to vector<8x8xbf16>
    %cst_147 = arith.constant dense<0.000000e+00> : vector<8x8xf32>
    %511 = tpu.matmul %509, %510, %cst_147 {dimension_numbers = #tpu.dot_dimension_numbers<[1], [1], [0], [0], [0, 0, 1, 0], [], []>} : vector<8x8xbf16>, vector<8x8xbf16>, vector<8x8xf32> -> vector<8x8xf32>
    %cst_148 = arith.constant 0.353553385 : f32
    %512 = vector.broadcast %cst_148 : f32 to vector<8x8xf32>
    %513 = arith.mulf %511, %512 : vector<8x8xf32>
    %514 = vector.broadcast %459 : vector<1x8xf32> to vector<8x8xf32>
    %515 = arith.addf %513, %514 : vector<8x8xf32>
    %cst_149 = arith.constant dense<0xFF800000> : vector<8xf32>
    %516 = vector.multi_reduction <maximumf>, %515, %cst_149 [1] : vector<8x8xf32> to vector<8xf32>
    %517 = vector.shape_cast %516 : vector<8xf32> to vector<8x1xf32>
    %518 = vector.broadcast %517 : vector<8x1xf32> to vector<8x8xf32>
    %519 = arith.subf %515, %518 : vector<8x8xf32>
    %520 = math.exp %519 : vector<8x8xf32>
    %cst_150 = arith.constant dense<0.000000e+00> : vector<8xf32>
    %521 = vector.multi_reduction <add>, %520, %cst_150 [1] : vector<8x8xf32> to vector<8xf32>
    %522 = vector.shape_cast %521 : vector<8xf32> to vector<8x1xf32>
    %523 = tpu.reciprocal %522 {approx = true} : vector<8x1xf32> -> vector<8x1xf32>
    %524 = vector.broadcast %523 : vector<8x1xf32> to vector<8x8xf32>
    %525 = arith.mulf %520, %524 : vector<8x8xf32>
    %526 = arith.truncf %525 : vector<8x8xf32> to vector<8x8xbf16>
    %527 = vector.extract_strided_slice %458 {offsets = [0, 16], sizes = [8, 8], strides = [1, 1]} : vector<8x32xbf16> to vector<8x8xbf16>
    %cst_151 = arith.constant dense<0.000000e+00> : vector<8x8xf32>
    %528 = tpu.matmul %526, %527, %cst_151 {dimension_numbers = #tpu.dot_dimension_numbers<[1], [0], [0], [1], [0, 0, 1, 1], [], []>} : vector<8x8xbf16>, vector<8x8xbf16>, vector<8x8xf32> -> vector<8x8xf32>
    %529 = arith.truncf %528 : vector<8x8xf32> to vector<8x8xbf16>
    %530 = vector.extract_strided_slice %347 {offsets = [16, 0], sizes = [8, 32], strides = [1, 1]} : vector<32x32xbf16> to vector<8x32xbf16>
    %cst_152 = arith.constant dense<0.000000e+00> : vector<8x32xf32>
    %531 = tpu.matmul %529, %530, %cst_152 {dimension_numbers = #tpu.dot_dimension_numbers<[1], [0], [0], [1], [0, 0, 1, 1], [], []>} : vector<8x8xbf16>, vector<8x32xbf16>, vector<8x32xf32> -> vector<8x32xf32>
    %532 = arith.addf %508, %531 : vector<8x32xf32>
    %533 = vector.extract_strided_slice %456 {offsets = [0, 24], sizes = [8, 8], strides = [1, 1]} : vector<8x32xbf16> to vector<8x8xbf16>
    %534 = vector.extract_strided_slice %457 {offsets = [0, 24], sizes = [8, 8], strides = [1, 1]} : vector<8x32xbf16> to vector<8x8xbf16>
    %cst_153 = arith.constant dense<0.000000e+00> : vector<8x8xf32>
    %535 = tpu.matmul %533, %534, %cst_153 {dimension_numbers = #tpu.dot_dimension_numbers<[1], [1], [0], [0], [0, 0, 1, 0], [], []>} : vector<8x8xbf16>, vector<8x8xbf16>, vector<8x8xf32> -> vector<8x8xf32>
    %cst_154 = arith.constant 0.353553385 : f32
    %536 = vector.broadcast %cst_154 : f32 to vector<8x8xf32>
    %537 = arith.mulf %535, %536 : vector<8x8xf32>
    %538 = vector.broadcast %459 : vector<1x8xf32> to vector<8x8xf32>
    %539 = arith.addf %537, %538 : vector<8x8xf32>
    %cst_155 = arith.constant dense<0xFF800000> : vector<8xf32>
    %540 = vector.multi_reduction <maximumf>, %539, %cst_155 [1] : vector<8x8xf32> to vector<8xf32>
    %541 = vector.shape_cast %540 : vector<8xf32> to vector<8x1xf32>
    %542 = vector.broadcast %541 : vector<8x1xf32> to vector<8x8xf32>
    %543 = arith.subf %539, %542 : vector<8x8xf32>
    %544 = math.exp %543 : vector<8x8xf32>
    %cst_156 = arith.constant dense<0.000000e+00> : vector<8xf32>
    %545 = vector.multi_reduction <add>, %544, %cst_156 [1] : vector<8x8xf32> to vector<8xf32>
    %546 = vector.shape_cast %545 : vector<8xf32> to vector<8x1xf32>
    %547 = tpu.reciprocal %546 {approx = true} : vector<8x1xf32> -> vector<8x1xf32>
    %548 = vector.broadcast %547 : vector<8x1xf32> to vector<8x8xf32>
    %549 = arith.mulf %544, %548 : vector<8x8xf32>
    %550 = arith.truncf %549 : vector<8x8xf32> to vector<8x8xbf16>
    %551 = vector.extract_strided_slice %458 {offsets = [0, 24], sizes = [8, 8], strides = [1, 1]} : vector<8x32xbf16> to vector<8x8xbf16>
    %cst_157 = arith.constant dense<0.000000e+00> : vector<8x8xf32>
    %552 = tpu.matmul %550, %551, %cst_157 {dimension_numbers = #tpu.dot_dimension_numbers<[1], [0], [0], [1], [0, 0, 1, 1], [], []>} : vector<8x8xbf16>, vector<8x8xbf16>, vector<8x8xf32> -> vector<8x8xf32>
    %553 = arith.truncf %552 : vector<8x8xf32> to vector<8x8xbf16>
    %554 = vector.extract_strided_slice %347 {offsets = [24, 0], sizes = [8, 32], strides = [1, 1]} : vector<32x32xbf16> to vector<8x32xbf16>
    %cst_158 = arith.constant dense<0.000000e+00> : vector<8x32xf32>
    %555 = tpu.matmul %553, %554, %cst_158 {dimension_numbers = #tpu.dot_dimension_numbers<[1], [0], [0], [1], [0, 0, 1, 1], [], []>} : vector<8x8xbf16>, vector<8x32xbf16>, vector<8x32xf32> -> vector<8x32xf32>
    %556 = arith.addf %532, %555 : vector<8x32xf32>
    %557 = tpu.concatenate %455, %556 in 0 : vector<8x32xf32>, vector<8x32xf32> -> vector<16x32xf32>
    %558 = vector.broadcast %340 : vector<1x32xf32> to vector<16x32xf32>
    %559 = arith.addf %557, %558 : vector<16x32xf32>
    %560 = arith.addf %335, %559 : vector<16x32xf32>
    %cst_159 = arith.constant dense<0.000000e+00> : vector<16xf32>
    %561 = vector.multi_reduction <add>, %560, %cst_159 [1] : vector<16x32xf32> to vector<16xf32>
    %562 = vector.shape_cast %561 : vector<16xf32> to vector<16x1xf32>
    %cst_160 = arith.constant 3.200000e+01 : f32
    %563 = vector.broadcast %cst_160 : f32 to vector<16x1xf32>
    %564 = arith.divf %562, %563 : vector<16x1xf32>
    %565 = vector.broadcast %564 : vector<16x1xf32> to vector<16x32xf32>
    %566 = arith.subf %560, %565 : vector<16x32xf32>
    %567 = arith.mulf %566, %566 : vector<16x32xf32>
    %cst_161 = arith.constant dense<0.000000e+00> : vector<16xf32>
    %568 = vector.multi_reduction <add>, %567, %cst_161 [1] : vector<16x32xf32> to vector<16xf32>
    %569 = vector.shape_cast %568 : vector<16xf32> to vector<16x1xf32>
    %cst_162 = arith.constant 3.200000e+01 : f32
    %570 = vector.broadcast %cst_162 : f32 to vector<16x1xf32>
    %571 = arith.divf %569, %570 : vector<16x1xf32>
    %572 = vector.broadcast %564 : vector<16x1xf32> to vector<16x32xf32>
    %573 = arith.subf %560, %572 : vector<16x32xf32>
    %cst_163 = arith.constant 9.99999996E-13 : f32
    %574 = vector.broadcast %cst_163 : f32 to vector<16x1xf32>
    %575 = arith.addf %571, %574 : vector<16x1xf32>
    %576 = math.rsqrt %575 : vector<16x1xf32>
    %577 = vector.broadcast %576 : vector<16x1xf32> to vector<16x32xf32>
    %578 = arith.mulf %573, %577 : vector<16x32xf32>
    %579 = vector.broadcast %342 : vector<1x32xf32> to vector<16x32xf32>
    %580 = arith.mulf %578, %579 : vector<16x32xf32>
    %581 = vector.broadcast %343 : vector<1x32xf32> to vector<16x32xf32>
    %582 = arith.addf %580, %581 : vector<16x32xf32>
    %583 = arith.truncf %582 : vector<16x32xf32> to vector<16x32xbf16>
    %c1_164 = arith.constant 1 : index
    %c0_165 = arith.constant 0 : index
    %c0_166 = arith.constant 0 : index
    %584 = vector.load %arg9[%c1_164, %c0_165, %c0_166] : memref<2x32x128xbf16, #tpu.memory_space<vmem>>, vector<1x32x128xbf16>
    %585 = vector.shape_cast %584 : vector<1x32x128xbf16> to vector<32x128xbf16>
    %cst_167 = arith.constant dense<0.000000e+00> : vector<16x128xf32>
    %586 = tpu.matmul %583, %585, %cst_167 {dimension_numbers = #tpu.dot_dimension_numbers<[1], [0], [0], [1], [0, 0, 1, 1], [], []>} : vector<16x32xbf16>, vector<32x128xbf16>, vector<16x128xf32> -> vector<16x128xf32>
    %587 = vector.broadcast %339 : vector<1x128xf32> to vector<16x128xf32>
    %588 = arith.addf %586, %587 : vector<16x128xf32>
    %589 = arith.mulf %588, %588 : vector<16x128xf32>
    %590 = arith.mulf %588, %589 : vector<16x128xf32>
    %cst_168 = arith.constant 4.471500e-02 : f32
    %591 = vector.broadcast %cst_168 : f32 to vector<16x128xf32>
    %592 = arith.mulf %591, %590 : vector<16x128xf32>
    %593 = arith.addf %588, %592 : vector<16x128xf32>
    %cst_169 = arith.constant 0.797884583 : f32
    %594 = vector.broadcast %cst_169 : f32 to vector<16x128xf32>
    %595 = arith.mulf %594, %593 : vector<16x128xf32>
    %596 = math.tanh %595 : vector<16x128xf32>
    %cst_170 = arith.constant 1.000000e+00 : f32
    %597 = vector.broadcast %cst_170 : f32 to vector<16x128xf32>
    %598 = arith.addf %597, %596 : vector<16x128xf32>
    %cst_171 = arith.constant 5.000000e-01 : f32
    %599 = vector.broadcast %cst_171 : f32 to vector<16x128xf32>
    %600 = arith.mulf %599, %598 : vector<16x128xf32>
    %601 = arith.mulf %588, %600 : vector<16x128xf32>
    %602 = arith.truncf %601 : vector<16x128xf32> to vector<16x128xbf16>
    %c1_172 = arith.constant 1 : index
    %c0_173 = arith.constant 0 : index
    %c0_174 = arith.constant 0 : index
    %603 = vector.load %arg10[%c1_172, %c0_173, %c0_174] : memref<2x128x32xbf16, #tpu.memory_space<vmem>>, vector<1x128x32xbf16>
    %604 = vector.shape_cast %603 : vector<1x128x32xbf16> to vector<128x32xbf16>
    %cst_175 = arith.constant dense<0.000000e+00> : vector<16x32xf32>
    %605 = tpu.matmul %602, %604, %cst_175 {dimension_numbers = #tpu.dot_dimension_numbers<[1], [0], [0], [1], [0, 0, 1, 1], [], []>} : vector<16x128xbf16>, vector<128x32xbf16>, vector<16x32xf32> -> vector<16x32xf32>
    %606 = vector.broadcast %341 : vector<1x32xf32> to vector<16x32xf32>
    %607 = arith.addf %605, %606 : vector<16x32xf32>
    %608 = arith.addf %582, %607 : vector<16x32xf32>
    %cst_176 = arith.constant dense<0.000000e+00> : vector<16xf32>
    %609 = vector.multi_reduction <add>, %608, %cst_176 [1] : vector<16x32xf32> to vector<16xf32>
    %610 = vector.shape_cast %609 : vector<16xf32> to vector<16x1xf32>
    %cst_177 = arith.constant 3.200000e+01 : f32
    %611 = vector.broadcast %cst_177 : f32 to vector<16x1xf32>
    %612 = arith.divf %610, %611 : vector<16x1xf32>
    %613 = vector.broadcast %612 : vector<16x1xf32> to vector<16x32xf32>
    %614 = arith.subf %608, %613 : vector<16x32xf32>
    %615 = arith.mulf %614, %614 : vector<16x32xf32>
    %cst_178 = arith.constant dense<0.000000e+00> : vector<16xf32>
    %616 = vector.multi_reduction <add>, %615, %cst_178 [1] : vector<16x32xf32> to vector<16xf32>
    %617 = vector.shape_cast %616 : vector<16xf32> to vector<16x1xf32>
    %cst_179 = arith.constant 3.200000e+01 : f32
    %618 = vector.broadcast %cst_179 : f32 to vector<16x1xf32>
    %619 = arith.divf %617, %618 : vector<16x1xf32>
    %620 = vector.broadcast %612 : vector<16x1xf32> to vector<16x32xf32>
    %621 = arith.subf %608, %620 : vector<16x32xf32>
    %cst_180 = arith.constant 9.99999996E-13 : f32
    %622 = vector.broadcast %cst_180 : f32 to vector<16x1xf32>
    %623 = arith.addf %619, %622 : vector<16x1xf32>
    %624 = math.rsqrt %623 : vector<16x1xf32>
    %625 = vector.broadcast %624 : vector<16x1xf32> to vector<16x32xf32>
    %626 = arith.mulf %621, %625 : vector<16x32xf32>
    %627 = vector.broadcast %344 : vector<1x32xf32> to vector<16x32xf32>
    %628 = arith.mulf %626, %627 : vector<16x32xf32>
    %629 = vector.broadcast %345 : vector<1x32xf32> to vector<16x32xf32>
    %630 = arith.addf %628, %629 : vector<16x32xf32>
    %631 = arith.truncf %630 : vector<16x32xf32> to vector<16x32xbf16>
    %c0_181 = arith.constant 0 : index
    %c0_182 = arith.constant 0 : index
    %632 = vector.load %arg12[%c0_181, %c0_182] : memref<32x128xbf16, #tpu.memory_space<vmem>>, vector<32x128xbf16>
    %cst_183 = arith.constant dense<0.000000e+00> : vector<16x128xf32>
    %633 = tpu.matmul %631, %632, %cst_183 {dimension_numbers = #tpu.dot_dimension_numbers<[1], [0], [0], [1], [0, 0, 1, 1], [], []>} : vector<16x32xbf16>, vector<32x128xbf16>, vector<16x128xf32> -> vector<16x128xf32>
    %c0_184 = arith.constant 0 : index
    %c0_185 = arith.constant 0 : index
    %634 = vector.load %arg13[%c0_184, %c0_185] : memref<1x128xf32, #tpu.memory_space<vmem>>, vector<1x128xf32>
    %635 = vector.broadcast %634 : vector<1x128xf32> to vector<16x128xf32>
    %636 = arith.addf %633, %635 : vector<16x128xf32>
    %c0_186 = arith.constant 0 : index
    %c0_187 = arith.constant 0 : index
    %637 = vector.load %arg14[%c0_186, %c0_187] : memref<16x128xf32, #tpu.memory_space<vmem>>, vector<16x128xf32>
    tpu.vector_store %arg14[%c0_186, %c0_187], %636 {strides = array<i32>} : memref<16x128xf32, #tpu.memory_space<vmem>>, vector<16x128xf32>,
    return
  }
  func.func @transform_0(%arg0: i32) -> (i32, i32) {
    %c0_i32 = arith.constant 0 : i32
    %c0_i32_0 = arith.constant 0 : i32
    %c0_i32_1 = arith.constant 0 : i32
    return %c0_i32, %c0_i32_0 : i32, i32
  }
  func.func @transform_1(%arg0: i32) -> (i32, i32) {
    %c0_i32 = arith.constant 0 : i32
    %c0_i32_0 = arith.constant 0 : i32
    %c0_i32_1 = arith.constant 0 : i32
    return %c0_i32, %c0_i32_0 : i32, i32
  }
  func.func @transform_2(%arg0: i32) -> (i32, i32) {
    %c0_i32 = arith.constant 0 : i32
    %c0_i32_0 = arith.constant 0 : i32
    %c0_i32_1 = arith.constant 0 : i32
    return %c0_i32, %c0_i32_0 : i32, i32
  }
  func.func @transform_3(%arg0: i32) -> (i32, i32) {
    %c0_i32 = arith.constant 0 : i32
    %c0_i32_0 = arith.constant 0 : i32
    %c0_i32_1 = arith.constant 0 : i32
    return %c0_i32, %c0_i32_0 : i32, i32
  }
  func.func @transform_4(%arg0: i32) -> (i32, i32) {
    %c0_i32 = arith.constant 0 : i32
    %c0_i32_0 = arith.constant 0 : i32
    %c0_i32_1 = arith.constant 0 : i32
    return %c0_i32, %c0_i32_0 : i32, i32
  }
  func.func @transform_5(%arg0: i32) -> (i32, i32) {
    %c0_i32 = arith.constant 0 : i32
    %c0_i32_0 = arith.constant 0 : i32
    %c0_i32_1 = arith.constant 0 : i32
    return %c0_i32, %c0_i32_0 : i32, i32
  }
  func.func @transform_6(%arg0: i32) -> (i32, i32, i32) {
    %c0_i32 = arith.constant 0 : i32
    %c0_i32_0 = arith.constant 0 : i32
    %c0_i32_1 = arith.constant 0 : i32
    %c0_i32_2 = arith.constant 0 : i32
    return %c0_i32, %c0_i32_0, %c0_i32_1 : i32, i32, i32
  }
  func.func @transform_7(%arg0: i32) -> (i32, i32, i32) {
    %c0_i32 = arith.constant 0 : i32
    %c0_i32_0 = arith.constant 0 : i32
    %c0_i32_1 = arith.constant 0 : i32
    %c0_i32_2 = arith.constant 0 : i32
    return %c0_i32, %c0_i32_0, %c0_i32_1 : i32, i32, i32
  }
  func.func @transform_8(%arg0: i32) -> (i32, i32, i32) {
    %c0_i32 = arith.constant 0 : i32
    %c0_i32_0 = arith.constant 0 : i32
    %c0_i32_1 = arith.constant 0 : i32
    %c0_i32_2 = arith.constant 0 : i32
    return %c0_i32, %c0_i32_0, %c0_i32_1 : i32, i32, i32
  }
  func.func @transform_9(%arg0: i32) -> (i32, i32, i32) {
    %c0_i32 = arith.constant 0 : i32
    %c0_i32_0 = arith.constant 0 : i32
    %c0_i32_1 = arith.constant 0 : i32
    %c0_i32_2 = arith.constant 0 : i32
    return %c0_i32, %c0_i32_0, %c0_i32_1 : i32, i32, i32
  }
  func.func @transform_10(%arg0: i32) -> (i32, i32, i32) {
    %c0_i32 = arith.constant 0 : i32
    %c0_i32_0 = arith.constant 0 : i32
    %c0_i32_1 = arith.constant 0 : i32
    %c0_i32_2 = arith.constant 0 : i32
    return %c0_i32, %c0_i32_0, %c0_i32_1 : i32, i32, i32
  }
  func.func @transform_11(%arg0: i32) -> (i32, i32) {
    %c0_i32 = arith.constant 0 : i32
    %c0_i32_0 = arith.constant 0 : i32
    %c0_i32_1 = arith.constant 0 : i32
    return %c0_i32, %c0_i32_0 : i32, i32
  }
  func.func @transform_12(%arg0: i32) -> (i32, i32) {
    %c0_i32 = arith.constant 0 : i32
    %c0_i32_0 = arith.constant 0 : i32
    %c0_i32_1 = arith.constant 0 : i32
    return %c0_i32, %c0_i32_0 : i32, i32
  }
  func.func @transform_13(%arg0: i32) -> (i32, i32) {
    %c0_i32 = arith.constant 0 : i32
    %c0_i32_0 = arith.constant 0 : i32
    %c0_i32_1 = arith.constant 0 : i32
    return %c0_i32, %c0_i32_0 : i32, i32
  }
}

</mosaic_0001>

<llo_original>
// kernel: my_model_forward.1
$region0: #{my_model_forward.1}
  #allocation0 [shape = 'u32[]', space=smem, size = 0x4, offset = 0x4, fixed_abs, tag = 'smem constant byte address 0x4 - core index']
  #allocation1 [shape = 'u32[144,128]{1,0:T(1,128)}', space=vmem, size = 0x12000, scoped, tag = 'internal scratch']
  %s0 = inlined_call_operand.vmem [shape: s32[16,1], index: 0, kind: input, shape index: {}]
  %s1 = inlined_call_operand.vmem [shape: f32[2,8], index: 1, kind: input, shape index: {}]
  %s2 = inlined_call_operand.vmem [shape: bf16[128,32], index: 2, kind: input, shape index: {}]
  %s3 = inlined_call_operand.hbm [shape: f32[8,32], index: 3, kind: input, shape index: {}]
  %s4 = inlined_call_operand.vmem [shape: f32[1,32], index: 4, kind: input, shape index: {}]
  %s5 = inlined_call_operand.vmem [shape: f32[1,32], index: 5, kind: input, shape index: {}]
  %s6 = inlined_call_operand.hbm [shape: bf16[2,32,128], index: 6, kind: input, shape index: {}]
  %s7 = inlined_call_operand.hbm [shape: bf16[2,32,32], index: 7, kind: input, shape index: {}]
  %s8 = inlined_call_operand.hbm [shape: bf16[2,32,128], index: 8, kind: input, shape index: {}]
  %s9 = inlined_call_operand.hbm [shape: bf16[2,128,32], index: 9, kind: input, shape index: {}]
  %s10 = inlined_call_operand.hbm [shape: f32[2,8,128], index: 10, kind: input, shape index: {}]
  %s11 = inlined_call_operand.vmem [shape: bf16[32,128], index: 11, kind: input, shape index: {}]
  %s12 = inlined_call_operand.vmem [shape: f32[1,128], index: 12, kind: input, shape index: {}]
  %s13 = inlined_call_operand.vmem [shape: f32[16,128], index: 13, kind: output, shape index: {}]
  %s14 = sld [smem:[#allocation0]]
  $region86: #{my_model_forward.1} parent=0
    _
  %s16 = ssub.s32 1, %s14
  %s17 = scalar_select 0, %s16, %s14
  $region1: #{my_model_forward.1} parent=0
    #allocation2 [shape = 'u8[4096]{0}', space=vmem, size = 0x1000, scoped, tag = 'input window, operand 3, single buffered']
    #allocation3 [shape = 's32[1]{0}', space=sflag, size = 0x4, scoped, tag = 'scoped memory for my_model_forward.1']
    #allocation4 [shape = 'u8[16384]{0}', space=vmem, size = 0x4000, scoped, tag = 'input window, operand 6, single buffered']
    #allocation5 [shape = 's32[1]{0}', space=sflag, size = 0x4, scoped, tag = 'scoped memory for my_model_forward.1']
    #allocation6 [shape = 'u8[16384]{0}', space=vmem, size = 0x4000, scoped, tag = 'input window, operand 7, single buffered']
    #allocation7 [shape = 'u8[16384]{0}', space=vmem, size = 0x4000, scoped, tag = 'input window, operand 8, single buffered']
    #allocation8 [shape = 's32[1]{0}', space=sflag, size = 0x4, scoped, tag = 'scoped memory for my_model_forward.1']
    #allocation9 [shape = 'u8[65536]{0}', space=vmem, size = 0x10000, scoped, tag = 'input window, operand 9, single buffered']
    #allocation10 [shape = 'u8[8192]{0}', space=vmem, size = 0x2000, scoped, tag = 'input window, operand 10, single buffered']
    #allocation11 [shape = 's32[1]{0}', space=sflag, size = 0x4, scoped, tag = 'scoped memory for my_model_forward.1']
    %18 = vsyncpa [#allocation3], 0
    %19 = vsyncpa [#allocation5], 0
    %20 = vsyncpa [#allocation8], 0
    %21 = vsyncpa [#allocation11], 0
    // Predicated region
    $region2: #{my_model_forward.1} parent=1 // pred_check
      _
    $region3: #{my_model_forward.1} parent=1 // pred_check_branch
      %23 = sbr.rel (0) target = $region5
    $region4: #{my_model_forward.1} parent=1 // pred_region
      _
    $region5: #{my_model_forward.1} parent=1 // pred_fallthru
      _
    // Predicated region
    $region6: #{my_model_forward.1} parent=1 // pred_check
      _
    $region7: #{my_model_forward.1} parent=1 // pred_check_branch
      %25 = sbr.rel (0) target = $region9
    $region8: #{my_model_forward.1} parent=1 // pred_region
      _
    $region9: #{my_model_forward.1} parent=1 // pred_fallthru
      _
    // Predicated region
    $region10: #{my_model_forward.1} parent=1 // pred_check
      _
    $region11: #{my_model_forward.1} parent=1 // pred_check_branch
      %27 = sbr.rel (0) target = $region13
    $region12: #{my_model_forward.1} parent=1 // pred_region
      _
    $region13: #{my_model_forward.1} parent=1 // pred_fallthru
      _
    // Predicated region
    $region14: #{my_model_forward.1} parent=1 // pred_check
      _
    $region15: #{my_model_forward.1} parent=1 // pred_check_branch
      %29 = sbr.rel (0) target = $region17
    $region16: #{my_model_forward.1} parent=1 // pred_region
      %s31 = ssub.s32 128, 128
      %32 = vsyncadd [#allocation3], %s31
      %s34 = sshll.u32 [#allocation2], 4
      %s35 = int_to_ptr.vmem [resolvable:$true] %s34
      %37 = dma.hbm_to_vmem [thread:$0]  %s3, 128, %s35, [#allocation3]
    $region17: #{my_model_forward.1} parent=1 // pred_fallthru
      _
    // Predicated region
    $region18: #{my_model_forward.1} parent=1 // pred_check
      _
    $region19: #{my_model_forward.1} parent=1 // pred_check_branch
      %39 = sbr.rel (0) target = $region21
    $region20: #{my_model_forward.1} parent=1 // pred_region
      _
    $region21: #{my_model_forward.1} parent=1 // pred_fallthru
      _
    // Predicated region
    $region22: #{my_model_forward.1} parent=1 // pred_check
      _
    $region23: #{my_model_forward.1} parent=1 // pred_check_branch
      %41 = sbr.rel (0) target = $region25
    $region24: #{my_model_forward.1} parent=1 // pred_region
      _
    $region25: #{my_model_forward.1} parent=1 // pred_fallthru
      _
    // Predicated region
    $region26: #{my_model_forward.1} parent=1 // pred_check
      _
    $region27: #{my_model_forward.1} parent=1 // pred_check_branch
      %43 = sbr.rel (0) target = $region29
    $region28: #{my_model_forward.1} parent=1 // pred_region
      %s45 = ssub.s32 512, 512
      %46 = vsyncadd [#allocation5], %s45
      %s47 = sshll.u32 [#allocation4], 4
      %s48 = int_to_ptr.vmem [resolvable:$true] %s47
      %53 = dma.hbm_to_vmem [thread:$0]  %s6, 512, %s48, [#allocation5], 64, 64, 4
    $region29: #{my_model_forward.1} parent=1 // pred_fallthru
      _
    // Predicated region
    $region30: #{my_model_forward.1} parent=1 // pred_check
      _
    $region31: #{my_model_forward.1} parent=1 // pred_check_branch
      %55 = sbr.rel (0) target = $region33
    $region32: #{my_model_forward.1} parent=1 // pred_region
      %s57 = ssub.s32 512, 512
      %58 = vsyncadd [#allocation5], %s57
      %s59 = sshll.u32 [#allocation6], 4
      %s60 = int_to_ptr.vmem [resolvable:$true] %s59
      %65 = dma.hbm_to_vmem [thread:$0]  %s7, 512, %s60, [#allocation5], 64, 64, 4
    $region33: #{my_model_forward.1} parent=1 // pred_fallthru
      _
    // Predicated region
    $region34: #{my_model_forward.1} parent=1 // pred_check
      _
    $region35: #{my_model_forward.1} parent=1 // pred_check_branch
      %67 = sbr.rel (0) target = $region37
    $region36: #{my_model_forward.1} parent=1 // pred_region
      %s69 = ssub.s32 512, 512
      %70 = vsyncadd [#allocation8], %s69
      %s71 = sshll.u32 [#allocation7], 4
      %s72 = int_to_ptr.vmem [resolvable:$true] %s71
      %77 = dma.hbm_to_vmem [thread:$0]  %s8, 512, %s72, [#allocation8], 64, 64, 4
    $region37: #{my_model_forward.1} parent=1 // pred_fallthru
      _
    // Predicated region
    $region38: #{my_model_forward.1} parent=1 // pred_check
      _
    $region39: #{my_model_forward.1} parent=1 // pred_check_branch
      %79 = sbr.rel (0) target = $region41
    $region40: #{my_model_forward.1} parent=1 // pred_region
      %s81 = ssub.s32 2048, 2048
      %82 = vsyncadd [#allocation8], %s81
      %s83 = sshll.u32 [#allocation9], 4
      %s84 = int_to_ptr.vmem [resolvable:$true] %s83
      %89 = dma.hbm_to_vmem [thread:$0]  %s9, 2048, %s84, [#allocation8], 64, 64, 4
    $region41: #{my_model_forward.1} parent=1 // pred_fallthru
      _
    // Predicated region
    $region42: #{my_model_forward.1} parent=1 // pred_check
      _
    $region43: #{my_model_forward.1} parent=1 // pred_check_branch
      %91 = sbr.rel (0) target = $region45
    $region44: #{my_model_forward.1} parent=1 // pred_region
      %s93 = ssub.s32 256, 256
      %94 = vsyncadd [#allocation11], %s93
      %s95 = sshll.u32 [#allocation10], 4
      %s96 = int_to_ptr.vmem [resolvable:$true] %s95
      %101 = dma.hbm_to_vmem [thread:$0]  %s10, 256, %s96, [#allocation11], 128, 128, 8
    $region45: #{my_model_forward.1} parent=1 // pred_fallthru
      _
    // Predicated region
    $region46: #{my_model_forward.1} parent=1 // pred_check
      _
    $region47: #{my_model_forward.1} parent=1 // pred_check_branch
      %103 = sbr.rel (0) target = $region49
    $region48: #{my_model_forward.1} parent=1 // pred_region
      _
    $region49: #{my_model_forward.1} parent=1 // pred_fallthru
      _
    // Predicated region
    $region50: #{my_model_forward.1} parent=1 // pred_check
      _
    $region51: #{my_model_forward.1} parent=1 // pred_check_branch
      %105 = sbr.rel (0) target = $region53
    $region52: #{my_model_forward.1} parent=1 // pred_region
      _
    $region53: #{my_model_forward.1} parent=1 // pred_fallthru
      _
    // Predicated region
    $region54: #{my_model_forward.1} parent=1 // pred_check
      _
    $region55: #{my_model_forward.1} parent=1 // pred_check_branch
      %107 = sbr.rel (0) target = $region57
    $region56: #{my_model_forward.1} parent=1 // pred_region
      %108 = dma.done [#allocation3], 128
    $region57: #{my_model_forward.1} parent=1 // pred_fallthru
      _
    // Predicated region
    $region58: #{my_model_forward.1} parent=1 // pred_check
      _
    $region59: #{my_model_forward.1} parent=1 // pred_check_branch
      %110 = sbr.rel (0) target = $region61
    $region60: #{my_model_forward.1} parent=1 // pred_region
      %111 = dma.done [#allocation5], 512
    $region61: #{my_model_forward.1} parent=1 // pred_fallthru
      _
    // Predicated region
    $region62: #{my_model_forward.1} parent=1 // pred_check
      _
    $region63: #{my_model_forward.1} parent=1 // pred_check_branch
      %113 = sbr.rel (0) target = $region65
    $region64: #{my_model_forward.1} parent=1 // pred_region
      %114 = dma.done [#allocation5], 512
    $region65: #{my_model_forward.1} parent=1 // pred_fallthru
      _
    // Predicated region
    $region66: #{my_model_forward.1} parent=1 // pred_check
      _
    $region67: #{my_model_forward.1} parent=1 // pred_check_branch
      %116 = sbr.rel (0) target = $region69
    $region68: #{my_model_forward.1} parent=1 // pred_region
      %117 = dma.done [#allocation8], 512
    $region69: #{my_model_forward.1} parent=1 // pred_fallthru
      _
    // Predicated region
    $region70: #{my_model_forward.1} parent=1 // pred_check
      _
    $region71: #{my_model_forward.1} parent=1 // pred_check_branch
      %119 = sbr.rel (0) target = $region73
    $region72: #{my_model_forward.1} parent=1 // pred_region
      %120 = dma.done [#allocation8], 2048
    $region73: #{my_model_forward.1} parent=1 // pred_fallthru
      _
    // Predicated region
    $region74: #{my_model_forward.1} parent=1 // pred_check
      _
    $region75: #{my_model_forward.1} parent=1 // pred_check_branch
      %122 = sbr.rel (0) target = $region77
    $region76: #{my_model_forward.1} parent=1 // pred_region
      %123 = dma.done [#allocation11], 256
    $region77: #{my_model_forward.1} parent=1 // pred_fallthru
      _
    %v125 = vld [vmem:[%s0] sm:$0xff]
    %v126 = vld [vmem:[%s0 + $0x8] sm:$0xff]
    %v127 = vlaneseq
    %v128 = vand.u32 %v127, 127
    %129 = vset.pattern.permute.xlu0 0
    %130 = vperm.xlu0 %129, %v125
    %v131 = vpop.permute.xlu0 %130
    %132 = vset.pattern.permute.xlu0 0
    %133 = vperm.xlu0 %132, %v126
    %v134 = vpop.permute.xlu0 %133
    %vm135 = vcmp.eq.s32.totalorder %v128, %v131
    %vm136 = vcmp.eq.s32.totalorder %v128, %v134
    %v137 = vsel %vm135, 1, 0
    %v138 = vsel %vm136, 1, 0
    %v139 = vcvt.s32.f32 %v137
    %v140 = vcvt.s32.f32 %v138
    %v141 = vpack.c.bf16 %v140, %v139
    %v142 = vld [vmem:[%s2] sm:$0xf]
    %v143 = vld [vmem:[%s2 + $0x4] sm:$0xf]
    %v144 = vld [vmem:[%s2 + $0x8] sm:$0xf]
    %v145 = vld [vmem:[%s2 + $0xc] sm:$0xf]
    %v146 = vld [vmem:[%s2 + $0x10] sm:$0xf]
    %v147 = vld [vmem:[%s2 + $0x14] sm:$0xf]
    %v148 = vld [vmem:[%s2 + $0x18] sm:$0xf]
    %v149 = vld [vmem:[%s2 + $0x1c] sm:$0xf]
    %v150 = vld [vmem:[%s2 + $0x20] sm:$0xf]
    %v151 = vld [vmem:[%s2 + $0x24] sm:$0xf]
    %v152 = vld [vmem:[%s2 + $0x28] sm:$0xf]
    %v153 = vld [vmem:[%s2 + $0x2c] sm:$0xf]
    %v154 = vld [vmem:[%s2 + $0x30] sm:$0xf]
    %v155 = vld [vmem:[%s2 + $0x34] sm:$0xf]
    %v156 = vld [vmem:[%s2 + $0x38] sm:$0xf]
    %v157 = vld [vmem:[%s2 + $0x3c] sm:$0xf]
    %v158 = vld [vmem:[#allocation2] sm:$0xff]
    %v175 = vunpack.c.l.b16 %v142
    %v176 = vunpack.c.l.b16 %v143
    %v177 = vunpack.c.l.b16 %v144
    %v178 = vunpack.c.l.b16 %v145
    %v179 = vunpack.c.l.b16 %v146
    %v180 = vunpack.c.l.b16 %v147
    %v181 = vunpack.c.l.b16 %v148
    %v182 = vunpack.c.l.b16 %v149
    %v183 = vunpack.c.l.b16 %v150
    %v184 = vunpack.c.l.b16 %v151
    %v185 = vunpack.c.l.b16 %v152
    %v186 = vunpack.c.l.b16 %v153
    %v187 = vunpack.c.l.b16 %v154
    %v188 = vunpack.c.l.b16 %v155
    %v189 = vunpack.c.l.b16 %v156
    %v190 = vunpack.c.l.b16 %v157
    %v191 = vpack.c.b16 %v176, %v175
    %v192 = vpack.c.b16 %v178, %v177
    %v193 = vpack.c.b16 %v180, %v179
    %v194 = vpack.c.b16 %v182, %v181
    %v195 = vpack.c.b16 %v184, %v183
    %v196 = vpack.c.b16 %v186, %v185
    %v197 = vpack.c.b16 %v188, %v187
    %v198 = vpack.c.b16 %v190, %v189
    %207 = vmatprep.subr.bf16.mxu0 0
    %208 = vmatpush1.bf16.msra.mxu0 %v191
    %209 = vmatprep.subr.bf16.mxu0 0
    %210 = vmatpush1.bf16.msra.mxu0 %v192
    %211 = vmatprep.subr.bf16.mxu0 0
    %212 = vmatpush1.bf16.msra.mxu0 %v193
    %213 = vmatprep.subr.bf16.mxu0 0
    %214 = vmatpush1.bf16.msra.mxu0 %v194
    %215 = vmatprep.subr.bf16.mxu0 0
    %216 = vmatpush1.bf16.msra.mxu0 %v195
    %217 = vmatprep.subr.bf16.mxu0 0
    %218 = vmatpush1.bf16.msra.mxu0 %v196
    %219 = vmatprep.subr.bf16.mxu0 0
    %220 = vmatpush1.bf16.msra.mxu0 %v197
    %221 = vmatprep.subr.bf16.mxu0 0
    %222 = vmatpush1.bf16.msra.mxu0 %v198
    %223 = vmatprep.subr.bf16.mxu0 0
    %224 = vmatpush1.bf16.msra.mxu0 0
    %225 = vmatprep.subr.bf16.mxu0 0
    %226 = vmatpush1.bf16.msra.mxu0 0
    %227 = vmatprep.subr.bf16.mxu0 0
    %228 = vmatpush1.bf16.msra.mxu0 0
    %229 = vmatprep.subr.bf16.mxu0 0
    %230 = vmatpush1.bf16.msra.mxu0 0
    %231 = vmatprep.subr.bf16.mxu0 0
    %232 = vmatpush1.bf16.msra.mxu0 0
    %233 = vmatprep.subr.bf16.mxu0 0
    %234 = vmatpush1.bf16.msra.mxu0 0
    %235 = vmatprep.subr.bf16.mxu0 0
    %236 = vmatpush1.bf16.msra.mxu0 0
    %237 = vmatprep.subr.bf16.mxu0 0
    %238 = vmatpush1.bf16.msra.mxu0 0
    %239 = vmatprep.mubr.bf16.mxu0 0
    %240 = vmatmul.mubr.bf16.gmra.mrb[0].mxu0 %v141
    %v241 = vpop.f32.mrb[0].mxu0
    %v242 = vadd.f32 %v158, %v241
    %v243 = vpop.f32.mrb[0].mxu0
    %v244 = vpop.f32.mrb[0].mxu0
    %v245 = vadd.f32 %v158, %v244
    %v246 = vpop.f32.mrb[0].mxu0
    %247 = vdwg.mxu0
    %v248 = vld [vmem:[%s4] sm:$0x1]
    %v249 = vld [vmem:[%s5] sm:$0x1]
    %vm250 = vcmask 261120
    %v251 = vsel %vm250, %v242, 0.0
    %252 = vadd.xlane.f32.xlu0 %v251
    %v253 = vpop.xlane.xlu0 %252
    %v254 = vsel %vm250, %v245, 0.0
    %255 = vadd.xlane.f32.xlu0 %v254
    %v256 = vpop.xlane.xlu0 %255
    %v257 = vrcp.pop 32.0
    %v258 = vmul.f32 %v253, %v257
    %v259 = vmul.f32 %v256, %v257
    %v260 = vsub.f32 %v242, %v258
    %v261 = vsub.f32 %v245, %v259
    %v262 = vmul.f32 %v260, %v260
    %v263 = vmul.f32 %v261, %v261
    %v264 = vsel %vm250, %v262, 0.0
    %265 = vadd.xlane.f32.xlu0 %v264
    %v266 = vpop.xlane.xlu0 %265
    %v267 = vsel %vm250, %v263, 0.0
    %268 = vadd.xlane.f32.xlu0 %v267
    %v269 = vpop.xlane.xlu0 %268
    %v270 = vmul.f32 %v266, %v257
    %v271 = vmul.f32 %v269, %v257
    %v272 = vadd.f32 %v270, 1e-12
    %v273 = vadd.f32 %v271, 1e-12
    %v274 = vrsqrt.pop %v272
    %v275 = vrsqrt.pop %v273
    %v276 = vmul.f32 %v260, %v274
    %v277 = vmul.f32 %v261, %v275
    %v279 = vlaneseq
    %v280 = vshrl.u32 %v279, 7
    %v281 = vsub.s32 0, %v280
    %v282 = vrot.slane %v248, %v281
    %v284 = vmul.f32 %v276, %v282
    %v285 = vmul.f32 %v277, %v282
    %v287 = vlaneseq
    %v288 = vshrl.u32 %v287, 7
    %v289 = vsub.s32 0, %v288
    %v290 = vrot.slane %v249, %v289
    %v292 = vadd.f32 %v284, %v290
    %v293 = vadd.f32 %v285, %v290
    %v294 = vld [vmem:[%s1] sm:$0x3]
    %v295 = vsub.f32 1.0, %v294
    %v296 = vmul.f32 %v295, -1e+09
    %v297 = vld [vmem:[#allocation10] sm:$0xff]
    %v298 = vld [vmem:[#allocation6] sm:$0xf]
    %v299 = vld [vmem:[#allocation6 + $0x4] sm:$0xf]
    %v300 = vld [vmem:[#allocation6 + $0x8] sm:$0xf]
    %v301 = vld [vmem:[#allocation6 + $0xc] sm:$0xf]
    %v302 = vpack.c.bf16 %v293, %v292
    %v303 = vld [vmem:[#allocation4] sm:$0xf]
    %v304 = vld [vmem:[#allocation4 + $0x4] sm:$0xf]
    %v305 = vld [vmem:[#allocation4 + $0x8] sm:$0xf]
    %v306 = vld [vmem:[#allocation4 + $0xc] sm:$0xf]
    %v307 = vlaneseq
    %v308 = vshrl.u32 %v307, 7
    %v309 = vsub.s32 0, %v308
    %v310 = vrot.slane %v297, %v309
    %v315 = vunpack.c.l.b16 %v303
    %v316 = vunpack.c.l.b16 %v304
    %v317 = vunpack.c.l.b16 %v305
    %v318 = vunpack.c.l.b16 %v306
    %v319 = vpack.c.b16 %v316, %v315
    %v320 = vpack.c.b16 %v318, %v317
    %v324 = vsel %vm250, %v302, 0
    %326 = vmatprep.subr.bf16.mxu0 0
    %327 = vmatpush1.bf16.msra.mxu0 %v319
    %328 = vmatprep.subr.bf16.mxu0 0
    %329 = vmatpush1.bf16.msra.mxu0 %v320
    %330 = vmatprep.subr.bf16.mxu0 0
    %331 = vmatpush1.bf16.msra.mxu0 0
    %332 = vmatprep.subr.bf16.mxu0 0
    %333 = vmatpush1.bf16.msra.mxu0 0
    %334 = vmatprep.subr.bf16.mxu0 0
    %335 = vmatpush1.bf16.msra.mxu0 0
    %336 = vmatprep.subr.bf16.mxu0 0
    %337 = vmatpush1.bf16.msra.mxu0 0
    %338 = vmatprep.subr.bf16.mxu0 0
    %339 = vmatpush1.bf16.msra.mxu0 0
    %340 = vmatprep.subr.bf16.mxu0 0
    %341 = vmatpush1.bf16.msra.mxu0 0
    %342 = vmatprep.subr.bf16.mxu0 0
    %343 = vmatpush1.bf16.msra.mxu0 0
    %344 = vmatprep.subr.bf16.mxu0 0
    %345 = vmatpush1.bf16.msra.mxu0 0
    %346 = vmatprep.subr.bf16.mxu0 0
    %347 = vmatpush1.bf16.msra.mxu0 0
    %348 = vmatprep.subr.bf16.mxu0 0
    %349 = vmatpush1.bf16.msra.mxu0 0
    %350 = vmatprep.subr.bf16.mxu0 0
    %351 = vmatpush1.bf16.msra.mxu0 0
    %352 = vmatprep.subr.bf16.mxu0 0
    %353 = vmatpush1.bf16.msra.mxu0 0
    %354 = vmatprep.subr.bf16.mxu0 0
    %355 = vmatpush1.bf16.msra.mxu0 0
    %356 = vmatprep.subr.bf16.mxu0 0
    %357 = vmatpush1.bf16.msra.mxu0 0
    %358 = vmatprep.mubr.bf16.mxu0 0
    %359 = vmatmul.mubr.bf16.gmra.mrb[0].mxu0 %v324
    %v360 = vpop.f32.mrb[0].mxu0
    %v361 = vadd.f32 %v310, %v360
    %v362 = vpop.f32.mrb[0].mxu0
    %v363 = vpop.f32.mrb[0].mxu0
    %v364 = vadd.f32 %v310, %v363
    %v365 = vpop.f32.mrb[0].mxu0
    %366 = vdwg.mxu0
    %v367 = vpack.c.bf16 %v364, %v361
    %369 = vrot.lane.b32.xlu0 %v367, 96
    %v370 = vpop.permute.xlu0 %369
    %vm371 = vcmask 64512
    %v373 = vsel %vm371, %v367, 0
    %v376 = vsel %vm371, %v370, 0
    %378 = vmatprep.subr.bf16.mxu0 0
    %379 = vmatpush1.bf16.xpose.msra.mxu0 %v376
    %380 = vmatprep.subr.bf16.mxu0 0
    %381 = vmatpush1.bf16.xpose.msra.mxu0 0
    %382 = vmatprep.subr.bf16.mxu0 0
    %383 = vmatpush1.bf16.xpose.msra.mxu0 0
    %384 = vmatprep.subr.bf16.mxu0 0
    %385 = vmatpush1.bf16.xpose.msra.mxu0 0
    %386 = vmatprep.subr.bf16.mxu0 0
    %387 = vmatpush1.bf16.xpose.msra.mxu0 0
    %388 = vmatprep.subr.bf16.mxu0 0
    %389 = vmatpush1.bf16.xpose.msra.mxu0 0
    %390 = vmatprep.subr.bf16.mxu0 0
    %391 = vmatpush1.bf16.xpose.msra.mxu0 0
    %392 = vmatprep.subr.bf16.mxu0 0
    %393 = vmatpush1.bf16.xpose.msra.mxu0 0
    %394 = vmatprep.subr.bf16.mxu0 0
    %395 = vmatpush1.bf16.xpose.msra.mxu0 0
    %396 = vmatprep.subr.bf16.mxu0 0
    %397 = vmatpush1.bf16.xpose.msra.mxu0 0
    %398 = vmatprep.subr.bf16.mxu0 0
    %399 = vmatpush1.bf16.xpose.msra.mxu0 0
    %400 = vmatprep.subr.bf16.mxu0 0
    %401 = vmatpush1.bf16.xpose.msra.mxu0 0
    %402 = vmatprep.subr.bf16.mxu0 0
    %403 = vmatpush1.bf16.xpose.msra.mxu0 0
    %404 = vmatprep.subr.bf16.mxu0 0
    %405 = vmatpush1.bf16.xpose.msra.mxu0 0
    %406 = vmatprep.subr.bf16.mxu0 0
    %407 = vmatpush1.bf16.xpose.msra.mxu0 0
    %408 = vmatprep.subr.bf16.mxu0 0
    %409 = vmatpush1.bf16.xpose.msra.mxu0 0
    %410 = vmatprep.mubr.bf16.mxu0 0
    %411 = vmatmul.mubr.bf16.gmra.mrb[0].mxu0 %v373
    %v412 = vpop.f32.mrb[0].mxu0
    %v413 = vadd.f32 0.0, %v412
    %v414 = vpop.f32.mrb[0].mxu0
    %v415 = vpop.f32.mrb[0].mxu0
    %v416 = vpop.f32.mrb[0].mxu0
    %417 = vdwg.mxu0
    %v418 = vmul.f32 %v413, 0.35355338
    %v419 = vlaneseq
    %v420 = vshrl.u32 %v419, 7
    %v421 = vsub.s32 0, %v420
    %v422 = vrot.slane %v296, %v421
    %v423 = vadd.f32 %v418, %v422
    %v424 = vsel %vm371, %v423, -inf
    %425 = vmax.xlane.f32.xlu0 %v424
    %v426 = vpop.xlane.xlu0 %425
    %v427 = vsub.f32 %v423, %v426
    %v428 = vmul.f32 %v427, 1.442695
    %v429 = vpow.pop %v428
    %v430 = vsel %vm371, %v429, 0.0
    %431 = vadd.xlane.f32.xlu0 %v430
    %v432 = vpop.xlane.xlu0 %431
    %v433 = vrcp.pop %v432
    %v434 = vmul.f32 %v429, %v433
    %v435 = vpack.c.bf16 %v434, %v434
    %436 = vrot.lane.b32.xlu0 %v367, 64
    %v437 = vpop.permute.xlu0 %436
    %v439 = vsel %vm371, %v435, 0
    %vm441 = vcmask 1043456
    %v443 = vsel %vm441, %v437, 0
    %445 = vmatprep.subr.bf16.mxu0 0
    %446 = vmatpush1.bf16.msra.mxu0 %v443
    %447 = vmatprep.subr.bf16.mxu0 0
    %448 = vmatpush1.bf16.msra.mxu0 0
    %449 = vmatprep.subr.bf16.mxu0 0
    %450 = vmatpush1.bf16.msra.mxu0 0
    %451 = vmatprep.subr.bf16.mxu0 0
    %452 = vmatpush1.bf16.msra.mxu0 0
    %453 = vmatprep.subr.bf16.mxu0 0
    %454 = vmatpush1.bf16.msra.mxu0 0
    %455 = vmatprep.subr.bf16.mxu0 0
    %456 = vmatpush1.bf16.msra.mxu0 0
    %457 = vmatprep.subr.bf16.mxu0 0
    %458 = vmatpush1.bf16.msra.mxu0 0
    %459 = vmatprep.subr.bf16.mxu0 0
    %460 = vmatpush1.bf16.msra.mxu0 0
    %461 = vmatprep.subr.bf16.mxu0 0
    %462 = vmatpush1.bf16.msra.mxu0 0
    %463 = vmatprep.subr.bf16.mxu0 0
    %464 = vmatpush1.bf16.msra.mxu0 0
    %465 = vmatprep.subr.bf16.mxu0 0
    %466 = vmatpush1.bf16.msra.mxu0 0
    %467 = vmatprep.subr.bf16.mxu0 0
    %468 = vmatpush1.bf16.msra.mxu0 0
    %469 = vmatprep.subr.bf16.mxu0 0
    %470 = vmatpush1.bf16.msra.mxu0 0
    %471 = vmatprep.subr.bf16.mxu0 0
    %472 = vmatpush1.bf16.msra.mxu0 0
    %473 = vmatprep.subr.bf16.mxu0 0
    %474 = vmatpush1.bf16.msra.mxu0 0
    %475 = vmatprep.subr.bf16.mxu0 0
    %476 = vmatpush1.bf16.msra.mxu0 0
    %477 = vmatprep.mubr.bf16.mxu0 0
    %478 = vmatmul.mubr.bf16.gmra.mrb[0].mxu0 %v439
    %v479 = vpop.f32.mrb[0].mxu0
    %v480 = vadd.f32 0.0, %v479
    %v481 = vpop.f32.mrb[0].mxu0
    %v482 = vpop.f32.mrb[0].mxu0
    %v483 = vpop.f32.mrb[0].mxu0
    %484 = vdwg.mxu0
    %v485 = vpack.c.bf16 %v480, %v480
    %486 = vrot.lane.b32.xlu0 %v367, 120
    %v487 = vpop.permute.xlu0 %486
    %488 = vrot.lane.b32.xlu0 %v367, 88
    %v489 = vpop.permute.xlu0 %488
    %v491 = vsel %vm371, %v487, 0
    %v494 = vsel %vm371, %v489, 0
    %496 = vmatprep.subr.bf16.mxu0 0
    %497 = vmatpush1.bf16.xpose.msra.mxu0 %v494
    %498 = vmatprep.subr.bf16.mxu0 0
    %499 = vmatpush1.bf16.xpose.msra.mxu0 0
    %500 = vmatprep.subr.bf16.mxu0 0
    %501 = vmatpush1.bf16.xpose.msra.mxu0 0
    %502 = vmatprep.subr.bf16.mxu0 0
    %503 = vmatpush1.bf16.xpose.msra.mxu0 0
    %504 = vmatprep.subr.bf16.mxu0 0
    %505 = vmatpush1.bf16.xpose.msra.mxu0 0
    %506 = vmatprep.subr.bf16.mxu0 0
    %507 = vmatpush1.bf16.xpose.msra.mxu0 0
    %508 = vmatprep.subr.bf16.mxu0 0
    %509 = vmatpush1.bf16.xpose.msra.mxu0 0
    %510 = vmatprep.subr.bf16.mxu0 0
    %511 = vmatpush1.bf16.xpose.msra.mxu0 0
    %512 = vmatprep.subr.bf16.mxu0 0
    %513 = vmatpush1.bf16.xpose.msra.mxu0 0
    %514 = vmatprep.subr.bf16.mxu0 0
    %515 = vmatpush1.bf16.xpose.msra.mxu0 0
    %516 = vmatprep.subr.bf16.mxu0 0
    %517 = vmatpush1.bf16.xpose.msra.mxu0 0
    %518 = vmatprep.subr.bf16.mxu0 0
    %519 = vmatpush1.bf16.xpose.msra.mxu0 0
    %520 = vmatprep.subr.bf16.mxu0 0
    %521 = vmatpush1.bf16.xpose.msra.mxu0 0
    %522 = vmatprep.subr.bf16.mxu0 0
    %523 = vmatpush1.bf16.xpose.msra.mxu0 0
    %524 = vmatprep.subr.bf16.mxu0 0
    %525 = vmatpush1.bf16.xpose.msra.mxu0 0
    %526 = vmatprep.subr.bf16.mxu0 0
    %527 = vmatpush1.bf16.xpose.msra.mxu0 0
    %528 = vmatprep.mubr.bf16.mxu0 0
    %529 = vmatmul.mubr.bf16.gmra.mrb[0].mxu0 %v491
    %v530 = vpop.f32.mrb[0].mxu0
    %v531 = vadd.f32 0.0, %v530
    %v532 = vpop.f32.mrb[0].mxu0
    %v533 = vpop.f32.mrb[0].mxu0
    %v534 = vpop.f32.mrb[0].mxu0
    %535 = vdwg.mxu0
    %v536 = vmul.f32 %v531, 0.35355338
    %v537 = vadd.f32 %v536, %v422
    %v538 = vsel %vm371, %v537, -inf
    %539 = vmax.xlane.f32.xlu0 %v538
    %v540 = vpop.xlane.xlu0 %539
    %v541 = vsub.f32 %v537, %v540
    %v542 = vmul.f32 %v541, 1.442695
    %v543 = vpow.pop %v542
    %v544 = vsel %vm371, %v543, 0.0
    %545 = vadd.xlane.f32.xlu0 %v544
    %v546 = vpop.xlane.xlu0 %545
    %v547 = vrcp.pop %v546
    %v548 = vmul.f32 %v543, %v547
    %v549 = vpack.c.bf16 %v548, %v548
    %550 = vrot.lane.b32.xlu0 %v367, 56
    %v551 = vpop.permute.xlu0 %550
    %v553 = vsel %vm371, %v549, 0
    %v556 = vsel %vm441, %v551, 0
    %558 = vmatprep.subr.bf16.mxu0 0
    %559 = vmatpush1.bf16.msra.mxu0 %v556
    %560 = vmatprep.subr.bf16.mxu0 0
    %561 = vmatpush1.bf16.msra.mxu0 0
    %562 = vmatprep.subr.bf16.mxu0 0
    %563 = vmatpush1.bf16.msra.mxu0 0
    %564 = vmatprep.subr.bf16.mxu0 0
    %565 = vmatpush1.bf16.msra.mxu0 0
    %566 = vmatprep.subr.bf16.mxu0 0
    %567 = vmatpush1.bf16.msra.mxu0 0
    %568 = vmatprep.subr.bf16.mxu0 0
    %569 = vmatpush1.bf16.msra.mxu0 0
    %570 = vmatprep.subr.bf16.mxu0 0
    %571 = vmatpush1.bf16.msra.mxu0 0
    %572 = vmatprep.subr.bf16.mxu0 0
    %573 = vmatpush1.bf16.msra.mxu0 0
    %574 = vmatprep.subr.bf16.mxu0 0
    %575 = vmatpush1.bf16.msra.mxu0 0
    %576 = vmatprep.subr.bf16.mxu0 0
    %577 = vmatpush1.bf16.msra.mxu0 0
    %578 = vmatprep.subr.bf16.mxu0 0
    %579 = vmatpush1.bf16.msra.mxu0 0
    %580 = vmatprep.subr.bf16.mxu0 0
    %581 = vmatpush1.bf16.msra.mxu0 0
    %582 = vmatprep.subr.bf16.mxu0 0
    %583 = vmatpush1.bf16.msra.mxu0 0
    %584 = vmatprep.subr.bf16.mxu0 0
    %585 = vmatpush1.bf16.msra.mxu0 0
    %586 = vmatprep.subr.bf16.mxu0 0
    %587 = vmatpush1.bf16.msra.mxu0 0
    %588 = vmatprep.subr.bf16.mxu0 0
    %589 = vmatpush1.bf16.msra.mxu0 0
    %590 = vmatprep.mubr.bf16.mxu0 0
    %591 = vmatmul.mubr.bf16.gmra.mrb[0].mxu0 %v553
    %v592 = vpop.f32.mrb[0].mxu0
    %v593 = vadd.f32 0.0, %v592
    %v594 = vpop.f32.mrb[0].mxu0
    %v595 = vpop.f32.mrb[0].mxu0
    %v596 = vpop.f32.mrb[0].mxu0
    %597 = vdwg.mxu0
    %v598 = vpack.c.bf16 %v593, %v593
    %v600 = vsel %vm371, %v598, 0
    %v603 = vsel %vm441, %v299, 0
    %605 = vmatprep.subr.bf16.mxu0 0
    %606 = vmatpush1.bf16.msra.mxu0 %v603
    %607 = vmatprep.subr.bf16.mxu0 0
    %608 = vmatpush1.bf16.msra.mxu0 0
    %609 = vmatprep.subr.bf16.mxu0 0
    %610 = vmatpush1.bf16.msra.mxu0 0
    %611 = vmatprep.subr.bf16.mxu0 0
    %612 = vmatpush1.bf16.msra.mxu0 0
    %613 = vmatprep.subr.bf16.mxu0 0
    %614 = vmatpush1.bf16.msra.mxu0 0
    %615 = vmatprep.subr.bf16.mxu0 0
    %616 = vmatpush1.bf16.msra.mxu0 0
    %617 = vmatprep.subr.bf16.mxu0 0
    %618 = vmatpush1.bf16.msra.mxu0 0
    %619 = vmatprep.subr.bf16.mxu0 0
    %620 = vmatpush1.bf16.msra.mxu0 0
    %621 = vmatprep.subr.bf16.mxu0 0
    %622 = vmatpush1.bf16.msra.mxu0 0
    %623 = vmatprep.subr.bf16.mxu0 0
    %624 = vmatpush1.bf16.msra.mxu0 0
    %625 = vmatprep.subr.bf16.mxu0 0
    %626 = vmatpush1.bf16.msra.mxu0 0
    %627 = vmatprep.subr.bf16.mxu0 0
    %628 = vmatpush1.bf16.msra.mxu0 0
    %629 = vmatprep.subr.bf16.mxu0 0
    %630 = vmatpush1.bf16.msra.mxu0 0
    %631 = vmatprep.subr.bf16.mxu0 0
    %632 = vmatpush1.bf16.msra.mxu0 0
    %633 = vmatprep.subr.bf16.mxu0 0
    %634 = vmatpush1.bf16.msra.mxu0 0
    %635 = vmatprep.subr.bf16.mxu0 0
    %636 = vmatpush1.bf16.msra.mxu0 0
    %637 = vmatprep.mubr.bf16.mxu0 0
    %638 = vmatmul.mubr.bf16.gmra.mrb[0].mxu0 %v600
    %v639 = vpop.f32.mrb[0].mxu0
    %v640 = vadd.f32 0.0, %v639
    %v641 = vpop.f32.mrb[0].mxu0
    %v642 = vpop.f32.mrb[0].mxu0
    %v643 = vpop.f32.mrb[0].mxu0
    %644 = vdwg.mxu0
    %v646 = vsel %vm371, %v485, 0
    %v649 = vsel %vm441, %v298, 0
    %651 = vmatprep.subr.bf16.mxu0 0
    %652 = vmatpush1.bf16.msra.mxu0 %v649
    %653 = vmatprep.subr.bf16.mxu0 0
    %654 = vmatpush1.bf16.msra.mxu0 0
    %655 = vmatprep.subr.bf16.mxu0 0
    %656 = vmatpush1.bf16.msra.mxu0 0
    %657 = vmatprep.subr.bf16.mxu0 0
    %658 = vmatpush1.bf16.msra.mxu0 0
    %659 = vmatprep.subr.bf16.mxu0 0
    %660 = vmatpush1.bf16.msra.mxu0 0
    %661 = vmatprep.subr.bf16.mxu0 0
    %662 = vmatpush1.bf16.msra.mxu0 0
    %663 = vmatprep.subr.bf16.mxu0 0
    %664 = vmatpush1.bf16.msra.mxu0 0
    %665 = vmatprep.subr.bf16.mxu0 0
    %666 = vmatpush1.bf16.msra.mxu0 0
    %667 = vmatprep.subr.bf16.mxu0 0
    %668 = vmatpush1.bf16.msra.mxu0 0
    %669 = vmatprep.subr.bf16.mxu0 0
    %670 = vmatpush1.bf16.msra.mxu0 0
    %671 = vmatprep.subr.bf16.mxu0 0
    %672 = vmatpush1.bf16.msra.mxu0 0
    %673 = vmatprep.subr.bf16.mxu0 0
    %674 = vmatpush1.bf16.msra.mxu0 0
    %675 = vmatprep.subr.bf16.mxu0 0
    %676 = vmatpush1.bf16.msra.mxu0 0
    %677 = vmatprep.subr.bf16.mxu0 0
    %678 = vmatpush1.bf16.msra.mxu0 0
    %679 = vmatprep.subr.bf16.mxu0 0
    %680 = vmatpush1.bf16.msra.mxu0 0
    %681 = vmatprep.subr.bf16.mxu0 0
    %682 = vmatpush1.bf16.msra.mxu0 0
    %683 = vmatprep.mubr.bf16.mxu0 0
    %684 = vmatmul.mubr.bf16.gmra.mrb[0].mxu0 %v646
    %v685 = vpop.f32.mrb[0].mxu0
    %v686 = vadd.f32 %v640, %v685
    %v687 = vpop.f32.mrb[0].mxu0
    %v688 = vpop.f32.mrb[0].mxu0
    %v689 = vpop.f32.mrb[0].mxu0
    %690 = vdwg.mxu0
    %691 = vrot.lane.b32.xlu0 %v367, 112
    %v692 = vpop.permute.xlu0 %691
    %693 = vrot.lane.b32.xlu0 %v367, 80
    %v694 = vpop.permute.xlu0 %693
    %v696 = vsel %vm371, %v692, 0
    %v699 = vsel %vm371, %v694, 0
    %701 = vmatprep.subr.bf16.mxu0 0
    %702 = vmatpush1.bf16.xpose.msra.mxu0 %v699
    %703 = vmatprep.subr.bf16.mxu0 0
    %704 = vmatpush1.bf16.xpose.msra.mxu0 0
    %705 = vmatprep.subr.bf16.mxu0 0
    %706 = vmatpush1.bf16.xpose.msra.mxu0 0
    %707 = vmatprep.subr.bf16.mxu0 0
    %708 = vmatpush1.bf16.xpose.msra.mxu0 0
    %709 = vmatprep.subr.bf16.mxu0 0
    %710 = vmatpush1.bf16.xpose.msra.mxu0 0
    %711 = vmatprep.subr.bf16.mxu0 0
    %712 = vmatpush1.bf16.xpose.msra.mxu0 0
    %713 = vmatprep.subr.bf16.mxu0 0
    %714 = vmatpush1.bf16.xpose.msra.mxu0 0
    %715 = vmatprep.subr.bf16.mxu0 0
    %716 = vmatpush1.bf16.xpose.msra.mxu0 0
    %717 = vmatprep.subr.bf16.mxu0 0
    %718 = vmatpush1.bf16.xpose.msra.mxu0 0
    %719 = vmatprep.subr.bf16.mxu0 0
    %720 = vmatpush1.bf16.xpose.msra.mxu0 0
    %721 = vmatprep.subr.bf16.mxu0 0
    %722 = vmatpush1.bf16.xpose.msra.mxu0 0
    %723 = vmatprep.subr.bf16.mxu0 0
    %724 = vmatpush1.bf16.xpose.msra.mxu0 0
    %725 = vmatprep.subr.bf16.mxu0 0
    %726 = vmatpush1.bf16.xpose.msra.mxu0 0
    %727 = vmatprep.subr.bf16.mxu0 0
    %728 = vmatpush1.bf16.xpose.msra.mxu0 0
    %729 = vmatprep.subr.bf16.mxu0 0
    %730 = vmatpush1.bf16.xpose.msra.mxu0 0
    %731 = vmatprep.subr.bf16.mxu0 0
    %732 = vmatpush1.bf16.xpose.msra.mxu0 0
    %733 = vmatprep.mubr.bf16.mxu0 0
    %734 = vmatmul.mubr.bf16.gmra.mrb[0].mxu0 %v696
    %v735 = vpop.f32.mrb[0].mxu0
    %v736 = vadd.f32 0.0, %v735
    %v737 = vpop.f32.mrb[0].mxu0
    %v738 = vpop.f32.mrb[0].mxu0
    %v739 = vpop.f32.mrb[0].mxu0
    %740 = vdwg.mxu0
    %v741 = vmul.f32 %v736, 0.35355338
    %v742 = vadd.f32 %v741, %v422
    %v743 = vsel %vm371, %v742, -inf
    %744 = vmax.xlane.f32.xlu0 %v743
    %v745 = vpop.xlane.xlu0 %744
    %v746 = vsub.f32 %v742, %v745
    %v747 = vmul.f32 %v746, 1.442695
    %v748 = vpow.pop %v747
    %v749 = vsel %vm371, %v748, 0.0
    %750 = vadd.xlane.f32.xlu0 %v749
    %v751 = vpop.xlane.xlu0 %750
    %v752 = vrcp.pop %v751
    %v753 = vmul.f32 %v748, %v752
    %v754 = vpack.c.bf16 %v753, %v753
    %755 = vrot.lane.b32.xlu0 %v367, 48
    %v756 = vpop.permute.xlu0 %755
    %v758 = vsel %vm371, %v754, 0
    %v761 = vsel %vm441, %v756, 0
    %763 = vmatprep.subr.bf16.mxu0 0
    %764 = vmatpush1.bf16.msra.mxu0 %v761
    %765 = vmatprep.subr.bf16.mxu0 0
    %766 = vmatpush1.bf16.msra.mxu0 0
    %767 = vmatprep.subr.bf16.mxu0 0
    %768 = vmatpush1.bf16.msra.mxu0 0
    %769 = vmatprep.subr.bf16.mxu0 0
    %770 = vmatpush1.bf16.msra.mxu0 0
    %771 = vmatprep.subr.bf16.mxu0 0
    %772 = vmatpush1.bf16.msra.mxu0 0
    %773 = vmatprep.subr.bf16.mxu0 0
    %774 = vmatpush1.bf16.msra.mxu0 0
    %775 = vmatprep.subr.bf16.mxu0 0
    %776 = vmatpush1.bf16.msra.mxu0 0
    %777 = vmatprep.subr.bf16.mxu0 0
    %778 = vmatpush1.bf16.msra.mxu0 0
    %779 = vmatprep.subr.bf16.mxu0 0
    %780 = vmatpush1.bf16.msra.mxu0 0
    %781 = vmatprep.subr.bf16.mxu0 0
    %782 = vmatpush1.bf16.msra.mxu0 0
    %783 = vmatprep.subr.bf16.mxu0 0
    %784 = vmatpush1.bf16.msra.mxu0 0
    %785 = vmatprep.subr.bf16.mxu0 0
    %786 = vmatpush1.bf16.msra.mxu0 0
    %787 = vmatprep.subr.bf16.mxu0 0
    %788 = vmatpush1.bf16.msra.mxu0 0
    %789 = vmatprep.subr.bf16.mxu0 0
    %790 = vmatpush1.bf16.msra.mxu0 0
    %791 = vmatprep.subr.bf16.mxu0 0
    %792 = vmatpush1.bf16.msra.mxu0 0
    %793 = vmatprep.subr.bf16.mxu0 0
    %794 = vmatpush1.bf16.msra.mxu0 0
    %795 = vmatprep.mubr.bf16.mxu0 0
    %796 = vmatmul.mubr.bf16.gmra.mrb[0].mxu0 %v758
    %v797 = vpop.f32.mrb[0].mxu0
    %v798 = vadd.f32 0.0, %v797
    %v799 = vpop.f32.mrb[0].mxu0
    %v800 = vpop.f32.mrb[0].mxu0
    %v801 = vpop.f32.mrb[0].mxu0
    %802 = vdwg.mxu0
    %v803 = vpack.c.bf16 %v798, %v798
    %v805 = vsel %vm371, %v803, 0
    %v808 = vsel %vm441, %v300, 0
    %810 = vmatprep.subr.bf16.mxu0 0
    %811 = vmatpush1.bf16.msra.mxu0 %v808
    %812 = vmatprep.subr.bf16.mxu0 0
    %813 = vmatpush1.bf16.msra.mxu0 0
    %814 = vmatprep.subr.bf16.mxu0 0
    %815 = vmatpush1.bf16.msra.mxu0 0
    %816 = vmatprep.subr.bf16.mxu0 0
    %817 = vmatpush1.bf16.msra.mxu0 0
    %818 = vmatprep.subr.bf16.mxu0 0
    %819 = vmatpush1.bf16.msra.mxu0 0
    %820 = vmatprep.subr.bf16.mxu0 0
    %821 = vmatpush1.bf16.msra.mxu0 0
    %822 = vmatprep.subr.bf16.mxu0 0
    %823 = vmatpush1.bf16.msra.mxu0 0
    %824 = vmatprep.subr.bf16.mxu0 0
    %825 = vmatpush1.bf16.msra.mxu0 0
    %826 = vmatprep.subr.bf16.mxu0 0
    %827 = vmatpush1.bf16.msra.mxu0 0
    %828 = vmatprep.subr.bf16.mxu0 0
    %829 = vmatpush1.bf16.msra.mxu0 0
    %830 = vmatprep.subr.bf16.mxu0 0
    %831 = vmatpush1.bf16.msra.mxu0 0
    %832 = vmatprep.subr.bf16.mxu0 0
    %833 = vmatpush1.bf16.msra.mxu0 0
    %834 = vmatprep.subr.bf16.mxu0 0
    %835 = vmatpush1.bf16.msra.mxu0 0
    %836 = vmatprep.subr.bf16.mxu0 0
    %837 = vmatpush1.bf16.msra.mxu0 0
    %838 = vmatprep.subr.bf16.mxu0 0
    %839 = vmatpush1.bf16.msra.mxu0 0
    %840 = vmatprep.subr.bf16.mxu0 0
    %841 = vmatpush1.bf16.msra.mxu0 0
    %842 = vmatprep.mubr.bf16.mxu0 0
    %843 = vmatmul.mubr.bf16.gmra.mrb[0].mxu0 %v805
    %v844 = vpop.f32.mrb[0].mxu0
    %v845 = vadd.f32 0.0, %v844
    %v846 = vpop.f32.mrb[0].mxu0
    %v847 = vpop.f32.mrb[0].mxu0
    %v848 = vpop.f32.mrb[0].mxu0
    %849 = vdwg.mxu0
    %v850 = vadd.f32 %v686, %v845
    %851 = vrot.lane.b32.xlu0 %v367, 104
    %v852 = vpop.permute.xlu0 %851
    %853 = vrot.lane.b32.xlu0 %v367, 72
    %v854 = vpop.permute.xlu0 %853
    %v856 = vsel %vm371, %v852, 0
    %v859 = vsel %vm371, %v854, 0
    %861 = vmatprep.subr.bf16.mxu0 0
    %862 = vmatpush1.bf16.xpose.msra.mxu0 %v859
    %863 = vmatprep.subr.bf16.mxu0 0
    %864 = vmatpush1.bf16.xpose.msra.mxu0 0
    %865 = vmatprep.subr.bf16.mxu0 0
    %866 = vmatpush1.bf16.xpose.msra.mxu0 0
    %867 = vmatprep.subr.bf16.mxu0 0
    %868 = vmatpush1.bf16.xpose.msra.mxu0 0
    %869 = vmatprep.subr.bf16.mxu0 0
    %870 = vmatpush1.bf16.xpose.msra.mxu0 0
    %871 = vmatprep.subr.bf16.mxu0 0
    %872 = vmatpush1.bf16.xpose.msra.mxu0 0
    %873 = vmatprep.subr.bf16.mxu0 0
    %874 = vmatpush1.bf16.xpose.msra.mxu0 0
    %875 = vmatprep.subr.bf16.mxu0 0
    %876 = vmatpush1.bf16.xpose.msra.mxu0 0
    %877 = vmatprep.subr.bf16.mxu0 0
    %878 = vmatpush1.bf16.xpose.msra.mxu0 0
    %879 = vmatprep.subr.bf16.mxu0 0
    %880 = vmatpush1.bf16.xpose.msra.mxu0 0
    %881 = vmatprep.subr.bf16.mxu0 0
    %882 = vmatpush1.bf16.xpose.msra.mxu0 0
    %883 = vmatprep.subr.bf16.mxu0 0
    %884 = vmatpush1.bf16.xpose.msra.mxu0 0
    %885 = vmatprep.subr.bf16.mxu0 0
    %886 = vmatpush1.bf16.xpose.msra.mxu0 0
    %887 = vmatprep.subr.bf16.mxu0 0
    %888 = vmatpush1.bf16.xpose.msra.mxu0 0
    %889 = vmatprep.subr.bf16.mxu0 0
    %890 = vmatpush1.bf16.xpose.msra.mxu0 0
    %891 = vmatprep.subr.bf16.mxu0 0
    %892 = vmatpush1.bf16.xpose.msra.mxu0 0
    %893 = vmatprep.mubr.bf16.mxu0 0
    %894 = vmatmul.mubr.bf16.gmra.mrb[0].mxu0 %v856
    %v895 = vpop.f32.mrb[0].mxu0
    %v896 = vadd.f32 0.0, %v895
    %v897 = vpop.f32.mrb[0].mxu0
    %v898 = vpop.f32.mrb[0].mxu0
    %v899 = vpop.f32.mrb[0].mxu0
    %900 = vdwg.mxu0
    %v901 = vmul.f32 %v896, 0.35355338
    %v902 = vadd.f32 %v901, %v422
    %v903 = vsel %vm371, %v902, -inf
    %904 = vmax.xlane.f32.xlu0 %v903
    %v905 = vpop.xlane.xlu0 %904
    %v906 = vsub.f32 %v902, %v905
    %v907 = vmul.f32 %v906, 1.442695
    %v908 = vpow.pop %v907
    %v909 = vsel %vm371, %v908, 0.0
    %910 = vadd.xlane.f32.xlu0 %v909
    %v911 = vpop.xlane.xlu0 %910
    %v912 = vrcp.pop %v911
    %v913 = vmul.f32 %v908, %v912
    %v914 = vpack.c.bf16 %v913, %v913
    %915 = vrot.lane.b32.xlu0 %v367, 40
    %v916 = vpop.permute.xlu0 %915
    %v918 = vsel %vm371, %v914, 0
    %v921 = vsel %vm441, %v916, 0
    %923 = vmatprep.subr.bf16.mxu0 0
    %924 = vmatpush1.bf16.msra.mxu0 %v921
    %925 = vmatprep.subr.bf16.mxu0 0
    %926 = vmatpush1.bf16.msra.mxu0 0
    %927 = vmatprep.subr.bf16.mxu0 0
    %928 = vmatpush1.bf16.msra.mxu0 0
    %929 = vmatprep.subr.bf16.mxu0 0
    %930 = vmatpush1.bf16.msra.mxu0 0
    %931 = vmatprep.subr.bf16.mxu0 0
    %932 = vmatpush1.bf16.msra.mxu0 0
    %933 = vmatprep.subr.bf16.mxu0 0
    %934 = vmatpush1.bf16.msra.mxu0 0
    %935 = vmatprep.subr.bf16.mxu0 0
    %936 = vmatpush1.bf16.msra.mxu0 0
    %937 = vmatprep.subr.bf16.mxu0 0
    %938 = vmatpush1.bf16.msra.mxu0 0
    %939 = vmatprep.subr.bf16.mxu0 0
    %940 = vmatpush1.bf16.msra.mxu0 0
    %941 = vmatprep.subr.bf16.mxu0 0
    %942 = vmatpush1.bf16.msra.mxu0 0
    %943 = vmatprep.subr.bf16.mxu0 0
    %944 = vmatpush1.bf16.msra.mxu0 0
    %945 = vmatprep.subr.bf16.mxu0 0
    %946 = vmatpush1.bf16.msra.mxu0 0
    %947 = vmatprep.subr.bf16.mxu0 0
    %948 = vmatpush1.bf16.msra.mxu0 0
    %949 = vmatprep.subr.bf16.mxu0 0
    %950 = vmatpush1.bf16.msra.mxu0 0
    %951 = vmatprep.subr.bf16.mxu0 0
    %952 = vmatpush1.bf16.msra.mxu0 0
    %953 = vmatprep.subr.bf16.mxu0 0
    %954 = vmatpush1.bf16.msra.mxu0 0
    %955 = vmatprep.mubr.bf16.mxu0 0
    %956 = vmatmul.mubr.bf16.gmra.mrb[0].mxu0 %v918
    %v957 = vpop.f32.mrb[0].mxu0
    %v958 = vadd.f32 0.0, %v957
    %v959 = vpop.f32.mrb[0].mxu0
    %v960 = vpop.f32.mrb[0].mxu0
    %v961 = vpop.f32.mrb[0].mxu0
    %962 = vdwg.mxu0
    %v963 = vpack.c.bf16 %v958, %v958
    %v965 = vsel %vm371, %v963, 0
    %v968 = vsel %vm441, %v301, 0
    %970 = vmatprep.subr.bf16.mxu0 0
    %971 = vmatpush1.bf16.msra.mxu0 %v968
    %972 = vmatprep.subr.bf16.mxu0 0
    %973 = vmatpush1.bf16.msra.mxu0 0
    %974 = vmatprep.subr.bf16.mxu0 0
    %975 = vmatpush1.bf16.msra.mxu0 0
    %976 = vmatprep.subr.bf16.mxu0 0
    %977 = vmatpush1.bf16.msra.mxu0 0
    %978 = vmatprep.subr.bf16.mxu0 0
    %979 = vmatpush1.bf16.msra.mxu0 0
    %980 = vmatprep.subr.bf16.mxu0 0
    %981 = vmatpush1.bf16.msra.mxu0 0
    %982 = vmatprep.subr.bf16.mxu0 0
    %983 = vmatpush1.bf16.msra.mxu0 0
    %984 = vmatprep.subr.bf16.mxu0 0
    %985 = vmatpush1.bf16.msra.mxu0 0
    %986 = vmatprep.subr.bf16.mxu0 0
    %987 = vmatpush1.bf16.msra.mxu0 0
    %988 = vmatprep.subr.bf16.mxu0 0
    %989 = vmatpush1.bf16.msra.mxu0 0
    %990 = vmatprep.subr.bf16.mxu0 0
    %991 = vmatpush1.bf16.msra.mxu0 0
    %992 = vmatprep.subr.bf16.mxu0 0
    %993 = vmatpush1.bf16.msra.mxu0 0
    %994 = vmatprep.subr.bf16.mxu0 0
    %995 = vmatpush1.bf16.msra.mxu0 0
    %996 = vmatprep.subr.bf16.mxu0 0
    %997 = vmatpush1.bf16.msra.mxu0 0
    %998 = vmatprep.subr.bf16.mxu0 0
    %999 = vmatpush1.bf16.msra.mxu0 0
    %1000 = vmatprep.subr.bf16.mxu0 0
    %1001 = vmatpush1.bf16.msra.mxu0 0
    %1002 = vmatprep.mubr.bf16.mxu0 0
    %1003 = vmatmul.mubr.bf16.gmra.mrb[0].mxu0 %v965
    %v1004 = vpop.f32.mrb[0].mxu0
    %v1005 = vadd.f32 0.0, %v1004
    %v1006 = vpop.f32.mrb[0].mxu0
    %v1007 = vpop.f32.mrb[0].mxu0
    %v1008 = vpop.f32.mrb[0].mxu0
    %1009 = vdwg.mxu0
    %v1010 = vadd.f32 %v850, %v1005
    %v1011 = vrot.slane %v367, 4
    %1012 = vrot.lane.b32.xlu0 %v1011, 96
    %v1013 = vpop.permute.xlu0 %1012
    %v1015 = vsel %vm371, %v1011, 0
    %v1018 = vsel %vm371, %v1013, 0
    %1020 = vmatprep.subr.bf16.mxu0 0
    %1021 = vmatpush1.bf16.xpose.msra.mxu0 %v1018
    %1022 = vmatprep.subr.bf16.mxu0 0
    %1023 = vmatpush1.bf16.xpose.msra.mxu0 0
    %1024 = vmatprep.subr.bf16.mxu0 0
    %1025 = vmatpush1.bf16.xpose.msra.mxu0 0
    %1026 = vmatprep.subr.bf16.mxu0 0
    %1027 = vmatpush1.bf16.xpose.msra.mxu0 0
    %1028 = vmatprep.subr.bf16.mxu0 0
    %1029 = vmatpush1.bf16.xpose.msra.mxu0 0
    %1030 = vmatprep.subr.bf16.mxu0 0
    %1031 = vmatpush1.bf16.xpose.msra.mxu0 0
    %1032 = vmatprep.subr.bf16.mxu0 0
    %1033 = vmatpush1.bf16.xpose.msra.mxu0 0
    %1034 = vmatprep.subr.bf16.mxu0 0
    %1035 = vmatpush1.bf16.xpose.msra.mxu0 0
    %1036 = vmatprep.subr.bf16.mxu0 0
    %1037 = vmatpush1.bf16.xpose.msra.mxu0 0
    %1038 = vmatprep.subr.bf16.mxu0 0
    %1039 = vmatpush1.bf16.xpose.msra.mxu0 0
    %1040 = vmatprep.subr.bf16.mxu0 0
    %1041 = vmatpush1.bf16.xpose.msra.mxu0 0
    %1042 = vmatprep.subr.bf16.mxu0 0
    %1043 = vmatpush1.bf16.xpose.msra.mxu0 0
    %1044 = vmatprep.subr.bf16.mxu0 0
    %1045 = vmatpush1.bf16.xpose.msra.mxu0 0
    %1046 = vmatprep.subr.bf16.mxu0 0
    %1047 = vmatpush1.bf16.xpose.msra.mxu0 0
    %1048 = vmatprep.subr.bf16.mxu0 0
    %1049 = vmatpush1.bf16.xpose.msra.mxu0 0
    %1050 = vmatprep.subr.bf16.mxu0 0
    %1051 = vmatpush1.bf16.xpose.msra.mxu0 0
    %1052 = vmatprep.mubr.bf16.mxu0 0
    %1053 = vmatmul.mubr.bf16.gmra.mrb[0].mxu0 %v1015
    %v1054 = vpop.f32.mrb[0].mxu0
    %v1055 = vadd.f32 0.0, %v1054
    %v1056 = vpop.f32.mrb[0].mxu0
    %v1057 = vpop.f32.mrb[0].mxu0
    %v1058 = vpop.f32.mrb[0].mxu0
    %1059 = vdwg.mxu0
    %v1060 = vmul.f32 %v1055, 0.35355338
    %v1061 = vlaneseq
    %v1062 = vshrl.u32 %v1061, 7
    %v1063 = vsub.s32 1, %v1062
    %v1064 = vrot.slane %v296, %v1063
    %v1065 = vadd.f32 %v1060, %v1064
    %v1066 = vsel %vm371, %v1065, -inf
    %1067 = vmax.xlane.f32.xlu0 %v1066
    %v1068 = vpop.xlane.xlu0 %1067
    %v1069 = vsub.f32 %v1065, %v1068
    %v1070 = vmul.f32 %v1069, 1.442695
    %v1071 = vpow.pop %v1070
    %v1072 = vsel %vm371, %v1071, 0.0
    %1073 = vadd.xlane.f32.xlu0 %v1072
    %v1074 = vpop.xlane.xlu0 %1073
    %v1075 = vrcp.pop %v1074
    %v1076 = vmul.f32 %v1071, %v1075
    %v1077 = vpack.c.bf16 %v1076, %v1076
    %1078 = vrot.lane.b32.xlu0 %v1011, 64
    %v1079 = vpop.permute.xlu0 %1078
    %v1081 = vsel %vm371, %v1077, 0
    %v1084 = vsel %vm441, %v1079, 0
    %1086 = vmatprep.subr.bf16.mxu0 0
    %1087 = vmatpush1.bf16.msra.mxu0 %v1084
    %1088 = vmatprep.subr.bf16.mxu0 0
    %1089 = vmatpush1.bf16.msra.mxu0 0
    %1090 = vmatprep.subr.bf16.mxu0 0
    %1091 = vmatpush1.bf16.msra.mxu0 0
    %1092 = vmatprep.subr.bf16.mxu0 0
    %1093 = vmatpush1.bf16.msra.mxu0 0
    %1094 = vmatprep.subr.bf16.mxu0 0
    %1095 = vmatpush1.bf16.msra.mxu0 0
    %1096 = vmatprep.subr.bf16.mxu0 0
    %1097 = vmatpush1.bf16.msra.mxu0 0
    %1098 = vmatprep.subr.bf16.mxu0 0
    %1099 = vmatpush1.bf16.msra.mxu0 0
    %1100 = vmatprep.subr.bf16.mxu0 0
    %1101 = vmatpush1.bf16.msra.mxu0 0
    %1102 = vmatprep.subr.bf16.mxu0 0
    %1103 = vmatpush1.bf16.msra.mxu0 0
    %1104 = vmatprep.subr.bf16.mxu0 0
    %1105 = vmatpush1.bf16.msra.mxu0 0
    %1106 = vmatprep.subr.bf16.mxu0 0
    %1107 = vmatpush1.bf16.msra.mxu0 0
    %1108 = vmatprep.subr.bf16.mxu0 0
    %1109 = vmatpush1.bf16.msra.mxu0 0
    %1110 = vmatprep.subr.bf16.mxu0 0
    %1111 = vmatpush1.bf16.msra.mxu0 0
    %1112 = vmatprep.subr.bf16.mxu0 0
    %1113 = vmatpush1.bf16.msra.mxu0 0
    %1114 = vmatprep.subr.bf16.mxu0 0
    %1115 = vmatpush1.bf16.msra.mxu0 0
    %1116 = vmatprep.subr.bf16.mxu0 0
    %1117 = vmatpush1.bf16.msra.mxu0 0
    %1118 = vmatprep.mubr.bf16.mxu0 0
    %1119 = vmatmul.mubr.bf16.gmra.mrb[0].mxu0 %v1081
    %v1120 = vpop.f32.mrb[0].mxu0
    %v1121 = vadd.f32 0.0, %v1120
    %v1122 = vpop.f32.mrb[0].mxu0
    %v1123 = vpop.f32.mrb[0].mxu0
    %v1124 = vpop.f32.mrb[0].mxu0
    %1125 = vdwg.mxu0
    %v1126 = vpack.c.bf16 %v1121, %v1121
    %1127 = vrot.lane.b32.xlu0 %v1011, 120
    %v1128 = vpop.permute.xlu0 %1127
    %1129 = vrot.lane.b32.xlu0 %v1011, 88
    %v1130 = vpop.permute.xlu0 %1129
    %v1132 = vsel %vm371, %v1128, 0
    %v1135 = vsel %vm371, %v1130, 0
    %1137 = vmatprep.subr.bf16.mxu0 0
    %1138 = vmatpush1.bf16.xpose.msra.mxu0 %v1135
    %1139 = vmatprep.subr.bf16.mxu0 0
    %1140 = vmatpush1.bf16.xpose.msra.mxu0 0
    %1141 = vmatprep.subr.bf16.mxu0 0
    %1142 = vmatpush1.bf16.xpose.msra.mxu0 0
    %1143 = vmatprep.subr.bf16.mxu0 0
    %1144 = vmatpush1.bf16.xpose.msra.mxu0 0
    %1145 = vmatprep.subr.bf16.mxu0 0
    %1146 = vmatpush1.bf16.xpose.msra.mxu0 0
    %1147 = vmatprep.subr.bf16.mxu0 0
    %1148 = vmatpush1.bf16.xpose.msra.mxu0 0
    %1149 = vmatprep.subr.bf16.mxu0 0
    %1150 = vmatpush1.bf16.xpose.msra.mxu0 0
    %1151 = vmatprep.subr.bf16.mxu0 0
    %1152 = vmatpush1.bf16.xpose.msra.mxu0 0
    %1153 = vmatprep.subr.bf16.mxu0 0
    %1154 = vmatpush1.bf16.xpose.msra.mxu0 0
    %1155 = vmatprep.subr.bf16.mxu0 0
    %1156 = vmatpush1.bf16.xpose.msra.mxu0 0
    %1157 = vmatprep.subr.bf16.mxu0 0
    %1158 = vmatpush1.bf16.xpose.msra.mxu0 0
    %1159 = vmatprep.subr.bf16.mxu0 0
    %1160 = vmatpush1.bf16.xpose.msra.mxu0 0
    %1161 = vmatprep.subr.bf16.mxu0 0
    %1162 = vmatpush1.bf16.xpose.msra.mxu0 0
    %1163 = vmatprep.subr.bf16.mxu0 0
    %1164 = vmatpush1.bf16.xpose.msra.mxu0 0
    %1165 = vmatprep.subr.bf16.mxu0 0
    %1166 = vmatpush1.bf16.xpose.msra.mxu0 0
    %1167 = vmatprep.subr.bf16.mxu0 0
    %1168 = vmatpush1.bf16.xpose.msra.mxu0 0
    %1169 = vmatprep.mubr.bf16.mxu0 0
    %1170 = vmatmul.mubr.bf16.gmra.mrb[0].mxu0 %v1132
    %v1171 = vpop.f32.mrb[0].mxu0
    %v1172 = vadd.f32 0.0, %v1171
    %v1173 = vpop.f32.mrb[0].mxu0
    %v1174 = vpop.f32.mrb[0].mxu0
    %v1175 = vpop.f32.mrb[0].mxu0
    %1176 = vdwg.mxu0
    %v1177 = vmul.f32 %v1172, 0.35355338
    %v1178 = vadd.f32 %v1177, %v1064
    %v1179 = vsel %vm371, %v1178, -inf
    %1180 = vmax.xlane.f32.xlu0 %v1179
    %v1181 = vpop.xlane.xlu0 %1180
    %v1182 = vsub.f32 %v1178, %v1181
    %v1183 = vmul.f32 %v1182, 1.442695
    %v1184 = vpow.pop %v1183
    %v1185 = vsel %vm371, %v1184, 0.0
    %1186 = vadd.xlane.f32.xlu0 %v1185
    %v1187 = vpop.xlane.xlu0 %1186
    %v1188 = vrcp.pop %v1187
    %v1189 = vmul.f32 %v1184, %v1188
    %v1190 = vpack.c.bf16 %v1189, %v1189
    %1191 = vrot.lane.b32.xlu0 %v1011, 56
    %v1192 = vpop.permute.xlu0 %1191
    %v1194 = vsel %vm371, %v1190, 0
    %v1197 = vsel %vm441, %v1192, 0
    %1199 = vmatprep.subr.bf16.mxu0 0
    %1200 = vmatpush1.bf16.msra.mxu0 %v1197
    %1201 = vmatprep.subr.bf16.mxu0 0
    %1202 = vmatpush1.bf16.msra.mxu0 0
    %1203 = vmatprep.subr.bf16.mxu0 0
    %1204 = vmatpush1.bf16.msra.mxu0 0
    %1205 = vmatprep.subr.bf16.mxu0 0
    %1206 = vmatpush1.bf16.msra.mxu0 0
    %1207 = vmatprep.subr.bf16.mxu0 0
    %1208 = vmatpush1.bf16.msra.mxu0 0
    %1209 = vmatprep.subr.bf16.mxu0 0
    %1210 = vmatpush1.bf16.msra.mxu0 0
    %1211 = vmatprep.subr.bf16.mxu0 0
    %1212 = vmatpush1.bf16.msra.mxu0 0
    %1213 = vmatprep.subr.bf16.mxu0 0
    %1214 = vmatpush1.bf16.msra.mxu0 0
    %1215 = vmatprep.subr.bf16.mxu0 0
    %1216 = vmatpush1.bf16.msra.mxu0 0
    %1217 = vmatprep.subr.bf16.mxu0 0
    %1218 = vmatpush1.bf16.msra.mxu0 0
    %1219 = vmatprep.subr.bf16.mxu0 0
    %1220 = vmatpush1.bf16.msra.mxu0 0
    %1221 = vmatprep.subr.bf16.mxu0 0
    %1222 = vmatpush1.bf16.msra.mxu0 0
    %1223 = vmatprep.subr.bf16.mxu0 0
    %1224 = vmatpush1.bf16.msra.mxu0 0
    %1225 = vmatprep.subr.bf16.mxu0 0
    %1226 = vmatpush1.bf16.msra.mxu0 0
    %1227 = vmatprep.subr.bf16.mxu0 0
    %1228 = vmatpush1.bf16.msra.mxu0 0
    %1229 = vmatprep.subr.bf16.mxu0 0
    %1230 = vmatpush1.bf16.msra.mxu0 0
    %1231 = vmatprep.mubr.bf16.mxu0 0
    %1232 = vmatmul.mubr.bf16.gmra.mrb[0].mxu0 %v1194
    %v1233 = vpop.f32.mrb[0].mxu0
    %v1234 = vadd.f32 0.0, %v1233
    %v1235 = vpop.f32.mrb[0].mxu0
    %v1236 = vpop.f32.mrb[0].mxu0
    %v1237 = vpop.f32.mrb[0].mxu0
    %1238 = vdwg.mxu0
    %v1239 = vpack.c.bf16 %v1234, %v1234
    %v1241 = vsel %vm371, %v1239, 0
    %1243 = vmatprep.subr.bf16.mxu0 0
    %1244 = vmatpush1.bf16.msra.mxu0 %v603
    %1245 = vmatprep.subr.bf16.mxu0 0
    %1246 = vmatpush1.bf16.msra.mxu0 0
    %1247 = vmatprep.subr.bf16.mxu0 0
    %1248 = vmatpush1.bf16.msra.mxu0 0
    %1249 = vmatprep.subr.bf16.mxu0 0
    %1250 = vmatpush1.bf16.msra.mxu0 0
    %1251 = vmatprep.subr.bf16.mxu0 0
    %1252 = vmatpush1.bf16.msra.mxu0 0
    %1253 = vmatprep.subr.bf16.mxu0 0
    %1254 = vmatpush1.bf16.msra.mxu0 0
    %1255 = vmatprep.subr.bf16.mxu0 0
    %1256 = vmatpush1.bf16.msra.mxu0 0
    %1257 = vmatprep.subr.bf16.mxu0 0
    %1258 = vmatpush1.bf16.msra.mxu0 0
    %1259 = vmatprep.subr.bf16.mxu0 0
    %1260 = vmatpush1.bf16.msra.mxu0 0
    %1261 = vmatprep.subr.bf16.mxu0 0
    %1262 = vmatpush1.bf16.msra.mxu0 0
    %1263 = vmatprep.subr.bf16.mxu0 0
    %1264 = vmatpush1.bf16.msra.mxu0 0
    %1265 = vmatprep.subr.bf16.mxu0 0
    %1266 = vmatpush1.bf16.msra.mxu0 0
    %1267 = vmatprep.subr.bf16.mxu0 0
    %1268 = vmatpush1.bf16.msra.mxu0 0
    %1269 = vmatprep.subr.bf16.mxu0 0
    %1270 = vmatpush1.bf16.msra.mxu0 0
    %1271 = vmatprep.subr.bf16.mxu0 0
    %1272 = vmatpush1.bf16.msra.mxu0 0
    %1273 = vmatprep.subr.bf16.mxu0 0
    %1274 = vmatpush1.bf16.msra.mxu0 0
    %1275 = vmatprep.mubr.bf16.mxu0 0
    %1276 = vmatmul.mubr.bf16.gmra.mrb[0].mxu0 %v1241
    %v1277 = vpop.f32.mrb[0].mxu0
    %v1278 = vadd.f32 0.0, %v1277
    %v1279 = vpop.f32.mrb[0].mxu0
    %v1280 = vpop.f32.mrb[0].mxu0
    %v1281 = vpop.f32.mrb[0].mxu0
    %1282 = vdwg.mxu0
    %v1284 = vsel %vm371, %v1126, 0
    %1286 = vmatprep.subr.bf16.mxu0 0
    %1287 = vmatpush1.bf16.msra.mxu0 %v649
    %1288 = vmatprep.subr.bf16.mxu0 0
    %1289 = vmatpush1.bf16.msra.mxu0 0
    %1290 = vmatprep.subr.bf16.mxu0 0
    %1291 = vmatpush1.bf16.msra.mxu0 0
    %1292 = vmatprep.subr.bf16.mxu0 0
    %1293 = vmatpush1.bf16.msra.mxu0 0
    %1294 = vmatprep.subr.bf16.mxu0 0
    %1295 = vmatpush1.bf16.msra.mxu0 0
    %1296 = vmatprep.subr.bf16.mxu0 0
    %1297 = vmatpush1.bf16.msra.mxu0 0
    %1298 = vmatprep.subr.bf16.mxu0 0
    %1299 = vmatpush1.bf16.msra.mxu0 0
    %1300 = vmatprep.subr.bf16.mxu0 0
    %1301 = vmatpush1.bf16.msra.mxu0 0
    %1302 = vmatprep.subr.bf16.mxu0 0
    %1303 = vmatpush1.bf16.msra.mxu0 0
    %1304 = vmatprep.subr.bf16.mxu0 0
    %1305 = vmatpush1.bf16.msra.mxu0 0
    %1306 = vmatprep.subr.bf16.mxu0 0
    %1307 = vmatpush1.bf16.msra.mxu0 0
    %1308 = vmatprep.subr.bf16.mxu0 0
    %1309 = vmatpush1.bf16.msra.mxu0 0
    %1310 = vmatprep.subr.bf16.mxu0 0
    %1311 = vmatpush1.bf16.msra.mxu0 0
    %1312 = vmatprep.subr.bf16.mxu0 0
    %1313 = vmatpush1.bf16.msra.mxu0 0
    %1314 = vmatprep.subr.bf16.mxu0 0
    %1315 = vmatpush1.bf16.msra.mxu0 0
    %1316 = vmatprep.subr.bf16.mxu0 0
    %1317 = vmatpush1.bf16.msra.mxu0 0
    %1318 = vmatprep.mubr.bf16.mxu0 0
    %1319 = vmatmul.mubr.bf16.gmra.mrb[0].mxu0 %v1284
    %v1320 = vpop.f32.mrb[0].mxu0
    %v1321 = vadd.f32 %v1278, %v1320
    %v1322 = vpop.f32.mrb[0].mxu0
    %v1323 = vpop.f32.mrb[0].mxu0
    %v1324 = vpop.f32.mrb[0].mxu0
    %1325 = vdwg.mxu0
    %1326 = vrot.lane.b32.xlu0 %v1011, 112
    %v1327 = vpop.permute.xlu0 %1326
    %1328 = vrot.lane.b32.xlu0 %v1011, 80
    %v1329 = vpop.permute.xlu0 %1328
    %v1331 = vsel %vm371, %v1327, 0
    %v1334 = vsel %vm371, %v1329, 0
    %1336 = vmatprep.subr.bf16.mxu0 0
    %1337 = vmatpush1.bf16.xpose.msra.mxu0 %v1334
    %1338 = vmatprep.subr.bf16.mxu0 0
    %1339 = vmatpush1.bf16.xpose.msra.mxu0 0
    %1340 = vmatprep.subr.bf16.mxu0 0
    %1341 = vmatpush1.bf16.xpose.msra.mxu0 0
    %1342 = vmatprep.subr.bf16.mxu0 0
    %1343 = vmatpush1.bf16.xpose.msra.mxu0 0
    %1344 = vmatprep.subr.bf16.mxu0 0
    %1345 = vmatpush1.bf16.xpose.msra.mxu0 0
    %1346 = vmatprep.subr.bf16.mxu0 0
    %1347 = vmatpush1.bf16.xpose.msra.mxu0 0
    %1348 = vmatprep.subr.bf16.mxu0 0
    %1349 = vmatpush1.bf16.xpose.msra.mxu0 0
    %1350 = vmatprep.subr.bf16.mxu0 0
    %1351 = vmatpush1.bf16.xpose.msra.mxu0 0
    %1352 = vmatprep.subr.bf16.mxu0 0
    %1353 = vmatpush1.bf16.xpose.msra.mxu0 0
    %1354 = vmatprep.subr.bf16.mxu0 0
    %1355 = vmatpush1.bf16.xpose.msra.mxu0 0
    %1356 = vmatprep.subr.bf16.mxu0 0
    %1357 = vmatpush1.bf16.xpose.msra.mxu0 0
    %1358 = vmatprep.subr.bf16.mxu0 0
    %1359 = vmatpush1.bf16.xpose.msra.mxu0 0
    %1360 = vmatprep.subr.bf16.mxu0 0
    %1361 = vmatpush1.bf16.xpose.msra.mxu0 0
    %1362 = vmatprep.subr.bf16.mxu0 0
    %1363 = vmatpush1.bf16.xpose.msra.mxu0 0
    %1364 = vmatprep.subr.bf16.mxu0 0
    %1365 = vmatpush1.bf16.xpose.msra.mxu0 0
    %1366 = vmatprep.subr.bf16.mxu0 0
    %1367 = vmatpush1.bf16.xpose.msra.mxu0 0
    %1368 = vmatprep.mubr.bf16.mxu0 0
    %1369 = vmatmul.mubr.bf16.gmra.mrb[0].mxu0 %v1331
    %v1370 = vpop.f32.mrb[0].mxu0
    %v1371 = vadd.f32 0.0, %v1370
    %v1372 = vpop.f32.mrb[0].mxu0
    %v1373 = vpop.f32.mrb[0].mxu0
    %v1374 = vpop.f32.mrb[0].mxu0
    %1375 = vdwg.mxu0
    %v1376 = vmul.f32 %v1371, 0.35355338
    %v1377 = vadd.f32 %v1376, %v1064
    %v1378 = vsel %vm371, %v1377, -inf
    %1379 = vmax.xlane.f32.xlu0 %v1378
    %v1380 = vpop.xlane.xlu0 %1379
    %v1381 = vsub.f32 %v1377, %v1380
    %v1382 = vmul.f32 %v1381, 1.442695
    %v1383 = vpow.pop %v1382
    %v1384 = vsel %vm371, %v1383, 0.0
    %1385 = vadd.xlane.f32.xlu0 %v1384
    %v1386 = vpop.xlane.xlu0 %1385
    %v1387 = vrcp.pop %v1386
    %v1388 = vmul.f32 %v1383, %v1387
    %v1389 = vpack.c.bf16 %v1388, %v1388
    %1390 = vrot.lane.b32.xlu0 %v1011, 48
    %v1391 = vpop.permute.xlu0 %1390
    %v1393 = vsel %vm371, %v1389, 0
    %v1396 = vsel %vm441, %v1391, 0
    %1398 = vmatprep.subr.bf16.mxu0 0
    %1399 = vmatpush1.bf16.msra.mxu0 %v1396
    %1400 = vmatprep.subr.bf16.mxu0 0
    %1401 = vmatpush1.bf16.msra.mxu0 0
    %1402 = vmatprep.subr.bf16.mxu0 0
    %1403 = vmatpush1.bf16.msra.mxu0 0
    %1404 = vmatprep.subr.bf16.mxu0 0
    %1405 = vmatpush1.bf16.msra.mxu0 0
    %1406 = vmatprep.subr.bf16.mxu0 0
    %1407 = vmatpush1.bf16.msra.mxu0 0
    %1408 = vmatprep.subr.bf16.mxu0 0
    %1409 = vmatpush1.bf16.msra.mxu0 0
    %1410 = vmatprep.subr.bf16.mxu0 0
    %1411 = vmatpush1.bf16.msra.mxu0 0
    %1412 = vmatprep.subr.bf16.mxu0 0
    %1413 = vmatpush1.bf16.msra.mxu0 0
    %1414 = vmatprep.subr.bf16.mxu0 0
    %1415 = vmatpush1.bf16.msra.mxu0 0
    %1416 = vmatprep.subr.bf16.mxu0 0
    %1417 = vmatpush1.bf16.msra.mxu0 0
    %1418 = vmatprep.subr.bf16.mxu0 0
    %1419 = vmatpush1.bf16.msra.mxu0 0
    %1420 = vmatprep.subr.bf16.mxu0 0
    %1421 = vmatpush1.bf16.msra.mxu0 0
    %1422 = vmatprep.subr.bf16.mxu0 0
    %1423 = vmatpush1.bf16.msra.mxu0 0
    %1424 = vmatprep.subr.bf16.mxu0 0
    %1425 = vmatpush1.bf16.msra.mxu0 0
    %1426 = vmatprep.subr.bf16.mxu0 0
    %1427 = vmatpush1.bf16.msra.mxu0 0
    %1428 = vmatprep.subr.bf16.mxu0 0
    %1429 = vmatpush1.bf16.msra.mxu0 0
    %1430 = vmatprep.mubr.bf16.mxu0 0
    %1431 = vmatmul.mubr.bf16.gmra.mrb[0].mxu0 %v1393
    %v1432 = vpop.f32.mrb[0].mxu0
    %v1433 = vadd.f32 0.0, %v1432
    %v1434 = vpop.f32.mrb[0].mxu0
    %v1435 = vpop.f32.mrb[0].mxu0
    %v1436 = vpop.f32.mrb[0].mxu0
    %1437 = vdwg.mxu0
    %v1438 = vpack.c.bf16 %v1433, %v1433
    %v1440 = vsel %vm371, %v1438, 0
    %1442 = vmatprep.subr.bf16.mxu0 0
    %1443 = vmatpush1.bf16.msra.mxu0 %v808
    %1444 = vmatprep.subr.bf16.mxu0 0
    %1445 = vmatpush1.bf16.msra.mxu0 0
    %1446 = vmatprep.subr.bf16.mxu0 0
    %1447 = vmatpush1.bf16.msra.mxu0 0
    %1448 = vmatprep.subr.bf16.mxu0 0
    %1449 = vmatpush1.bf16.msra.mxu0 0
    %1450 = vmatprep.subr.bf16.mxu0 0
    %1451 = vmatpush1.bf16.msra.mxu0 0
    %1452 = vmatprep.subr.bf16.mxu0 0
    %1453 = vmatpush1.bf16.msra.mxu0 0
    %1454 = vmatprep.subr.bf16.mxu0 0
    %1455 = vmatpush1.bf16.msra.mxu0 0
    %1456 = vmatprep.subr.bf16.mxu0 0
    %1457 = vmatpush1.bf16.msra.mxu0 0
    %1458 = vmatprep.subr.bf16.mxu0 0
    %1459 = vmatpush1.bf16.msra.mxu0 0
    %1460 = vmatprep.subr.bf16.mxu0 0
    %1461 = vmatpush1.bf16.msra.mxu0 0
    %1462 = vmatprep.subr.bf16.mxu0 0
    %1463 = vmatpush1.bf16.msra.mxu0 0
    %1464 = vmatprep.subr.bf16.mxu0 0
    %1465 = vmatpush1.bf16.msra.mxu0 0
    %1466 = vmatprep.subr.bf16.mxu0 0
    %1467 = vmatpush1.bf16.msra.mxu0 0
    %1468 = vmatprep.subr.bf16.mxu0 0
    %1469 = vmatpush1.bf16.msra.mxu0 0
    %1470 = vmatprep.subr.bf16.mxu0 0
    %1471 = vmatpush1.bf16.msra.mxu0 0
    %1472 = vmatprep.subr.bf16.mxu0 0
    %1473 = vmatpush1.bf16.msra.mxu0 0
    %1474 = vmatprep.mubr.bf16.mxu0 0
    %1475 = vmatmul.mubr.bf16.gmra.mrb[0].mxu0 %v1440
    %v1476 = vpop.f32.mrb[0].mxu0
    %v1477 = vadd.f32 0.0, %v1476
    %v1478 = vpop.f32.mrb[0].mxu0
    %v1479 = vpop.f32.mrb[0].mxu0
    %v1480 = vpop.f32.mrb[0].mxu0
    %1481 = vdwg.mxu0
    %v1482 = vadd.f32 %v1321, %v1477
    %1483 = vrot.lane.b32.xlu0 %v1011, 104
    %v1484 = vpop.permute.xlu0 %1483
    %1485 = vrot.lane.b32.xlu0 %v1011, 72
    %v1486 = vpop.permute.xlu0 %1485
    %v1488 = vsel %vm371, %v1484, 0
    %v1491 = vsel %vm371, %v1486, 0
    %1493 = vmatprep.subr.bf16.mxu0 0
    %1494 = vmatpush1.bf16.xpose.msra.mxu0 %v1491
    %1495 = vmatprep.subr.bf16.mxu0 0
    %1496 = vmatpush1.bf16.xpose.msra.mxu0 0
    %1497 = vmatprep.subr.bf16.mxu0 0
    %1498 = vmatpush1.bf16.xpose.msra.mxu0 0
    %1499 = vmatprep.subr.bf16.mxu0 0
    %1500 = vmatpush1.bf16.xpose.msra.mxu0 0
    %1501 = vmatprep.subr.bf16.mxu0 0
    %1502 = vmatpush1.bf16.xpose.msra.mxu0 0
    %1503 = vmatprep.subr.bf16.mxu0 0
    %1504 = vmatpush1.bf16.xpose.msra.mxu0 0
    %1505 = vmatprep.subr.bf16.mxu0 0
    %1506 = vmatpush1.bf16.xpose.msra.mxu0 0
    %1507 = vmatprep.subr.bf16.mxu0 0
    %1508 = vmatpush1.bf16.xpose.msra.mxu0 0
    %1509 = vmatprep.subr.bf16.mxu0 0
    %1510 = vmatpush1.bf16.xpose.msra.mxu0 0
    %1511 = vmatprep.subr.bf16.mxu0 0
    %1512 = vmatpush1.bf16.xpose.msra.mxu0 0
    %1513 = vmatprep.subr.bf16.mxu0 0
    %1514 = vmatpush1.bf16.xpose.msra.mxu0 0
    %1515 = vmatprep.subr.bf16.mxu0 0
    %1516 = vmatpush1.bf16.xpose.msra.mxu0 0
    %1517 = vmatprep.subr.bf16.mxu0 0
    %1518 = vmatpush1.bf16.xpose.msra.mxu0 0
    %1519 = vmatprep.subr.bf16.mxu0 0
    %1520 = vmatpush1.bf16.xpose.msra.mxu0 0
    %1521 = vmatprep.subr.bf16.mxu0 0
    %1522 = vmatpush1.bf16.xpose.msra.mxu0 0
    %1523 = vmatprep.subr.bf16.mxu0 0
    %1524 = vmatpush1.bf16.xpose.msra.mxu0 0
    %1525 = vmatprep.mubr.bf16.mxu0 0
    %1526 = vmatmul.mubr.bf16.gmra.mrb[0].mxu0 %v1488
    %v1527 = vpop.f32.mrb[0].mxu0
    %v1528 = vadd.f32 0.0, %v1527
    %v1529 = vpop.f32.mrb[0].mxu0
    %v1530 = vpop.f32.mrb[0].mxu0
    %v1531 = vpop.f32.mrb[0].mxu0
    %1532 = vdwg.mxu0
    %v1533 = vmul.f32 %v1528, 0.35355338
    %v1534 = vadd.f32 %v1533, %v1064
    %v1535 = vsel %vm371, %v1534, -inf
    %1536 = vmax.xlane.f32.xlu0 %v1535
    %v1537 = vpop.xlane.xlu0 %1536
    %v1538 = vsub.f32 %v1534, %v1537
    %v1539 = vmul.f32 %v1538, 1.442695
    %v1540 = vpow.pop %v1539
    %v1541 = vsel %vm371, %v1540, 0.0
    %1542 = vadd.xlane.f32.xlu0 %v1541
    %v1543 = vpop.xlane.xlu0 %1542
    %v1544 = vrcp.pop %v1543
    %v1545 = vmul.f32 %v1540, %v1544
    %v1546 = vpack.c.bf16 %v1545, %v1545
    %1547 = vrot.lane.b32.xlu0 %v1011, 40
    %v1548 = vpop.permute.xlu0 %1547
    %v1550 = vsel %vm371, %v1546, 0
    %v1553 = vsel %vm441, %v1548, 0
    %1555 = vmatprep.subr.bf16.mxu0 0
    %1556 = vmatpush1.bf16.msra.mxu0 %v1553
    %1557 = vmatprep.subr.bf16.mxu0 0
    %1558 = vmatpush1.bf16.msra.mxu0 0
    %1559 = vmatprep.subr.bf16.mxu0 0
    %1560 = vmatpush1.bf16.msra.mxu0 0
    %1561 = vmatprep.subr.bf16.mxu0 0
    %1562 = vmatpush1.bf16.msra.mxu0 0
    %1563 = vmatprep.subr.bf16.mxu0 0
    %1564 = vmatpush1.bf16.msra.mxu0 0
    %1565 = vmatprep.subr.bf16.mxu0 0
    %1566 = vmatpush1.bf16.msra.mxu0 0
    %1567 = vmatprep.subr.bf16.mxu0 0
    %1568 = vmatpush1.bf16.msra.mxu0 0
    %1569 = vmatprep.subr.bf16.mxu0 0
    %1570 = vmatpush1.bf16.msra.mxu0 0
    %1571 = vmatprep.subr.bf16.mxu0 0
    %1572 = vmatpush1.bf16.msra.mxu0 0
    %1573 = vmatprep.subr.bf16.mxu0 0
    %1574 = vmatpush1.bf16.msra.mxu0 0
    %1575 = vmatprep.subr.bf16.mxu0 0
    %1576 = vmatpush1.bf16.msra.mxu0 0
    %1577 = vmatprep.subr.bf16.mxu0 0
    %1578 = vmatpush1.bf16.msra.mxu0 0
    %1579 = vmatprep.subr.bf16.mxu0 0
    %1580 = vmatpush1.bf16.msra.mxu0 0
    %1581 = vmatprep.subr.bf16.mxu0 0
    %1582 = vmatpush1.bf16.msra.mxu0 0
    %1583 = vmatprep.subr.bf16.mxu0 0
    %1584 = vmatpush1.bf16.msra.mxu0 0
    %1585 = vmatprep.subr.bf16.mxu0 0
    %1586 = vmatpush1.bf16.msra.mxu0 0
    %1587 = vmatprep.mubr.bf16.mxu0 0
    %1588 = vmatmul.mubr.bf16.gmra.mrb[0].mxu0 %v1550
    %v1589 = vpop.f32.mrb[0].mxu0
    %v1590 = vadd.f32 0.0, %v1589
    %v1591 = vpop.f32.mrb[0].mxu0
    %v1592 = vpop.f32.mrb[0].mxu0
    %v1593 = vpop.f32.mrb[0].mxu0
    %1594 = vdwg.mxu0
    %v1595 = vpack.c.bf16 %v1590, %v1590
    %v1597 = vsel %vm371, %v1595, 0
    %1599 = vmatprep.subr.bf16.mxu0 0
    %1600 = vmatpush1.bf16.msra.mxu0 %v968
    %1601 = vmatprep.subr.bf16.mxu0 0
    %1602 = vmatpush1.bf16.msra.mxu0 0
    %1603 = vmatprep.subr.bf16.mxu0 0
    %1604 = vmatpush1.bf16.msra.mxu0 0
    %1605 = vmatprep.subr.bf16.mxu0 0
    %1606 = vmatpush1.bf16.msra.mxu0 0
    %1607 = vmatprep.subr.bf16.mxu0 0
    %1608 = vmatpush1.bf16.msra.mxu0 0
    %1609 = vmatprep.subr.bf16.mxu0 0
    %1610 = vmatpush1.bf16.msra.mxu0 0
    %1611 = vmatprep.subr.bf16.mxu0 0
    %1612 = vmatpush1.bf16.msra.mxu0 0
    %1613 = vmatprep.subr.bf16.mxu0 0
    %1614 = vmatpush1.bf16.msra.mxu0 0
    %1615 = vmatprep.subr.bf16.mxu0 0
    %1616 = vmatpush1.bf16.msra.mxu0 0
    %1617 = vmatprep.subr.bf16.mxu0 0
    %1618 = vmatpush1.bf16.msra.mxu0 0
    %1619 = vmatprep.subr.bf16.mxu0 0
    %1620 = vmatpush1.bf16.msra.mxu0 0
    %1621 = vmatprep.subr.bf16.mxu0 0
    %1622 = vmatpush1.bf16.msra.mxu0 0
    %1623 = vmatprep.subr.bf16.mxu0 0
    %1624 = vmatpush1.bf16.msra.mxu0 0
    %1625 = vmatprep.subr.bf16.mxu0 0
    %1626 = vmatpush1.bf16.msra.mxu0 0
    %1627 = vmatprep.subr.bf16.mxu0 0
    %1628 = vmatpush1.bf16.msra.mxu0 0
    %1629 = vmatprep.subr.bf16.mxu0 0
    %1630 = vmatpush1.bf16.msra.mxu0 0
    %1631 = vmatprep.mubr.bf16.mxu0 0
    %1632 = vmatmul.mubr.bf16.gmra.mrb[0].mxu0 %v1597
    %v1633 = vpop.f32.mrb[0].mxu0
    %v1634 = vadd.f32 0.0, %v1633
    %v1635 = vpop.f32.mrb[0].mxu0
    %v1636 = vpop.f32.mrb[0].mxu0
    %v1637 = vpop.f32.mrb[0].mxu0
    %1638 = vdwg.mxu0
    %v1639 = vadd.f32 %v1482, %v1634
    %v1640 = vlaneseq
    %v1641 = vshrl.u32 %v1640, 7
    %v1642 = vsub.s32 2, %v1641
    %v1643 = vrot.slane %v297, %v1642
    %v1644 = vadd.f32 %v1010, %v1643
    %v1645 = vadd.f32 %v1639, %v1643
    %v1646 = vadd.f32 %v292, %v1644
    %v1647 = vadd.f32 %v293, %v1645
    %v1648 = vsel %vm250, %v1646, 0.0
    %1649 = vadd.xlane.f32.xlu0 %v1648
    %v1650 = vpop.xlane.xlu0 %1649
    %v1651 = vsel %vm250, %v1647, 0.0
    %1652 = vadd.xlane.f32.xlu0 %v1651
    %v1653 = vpop.xlane.xlu0 %1652
    %v1654 = vmul.f32 %v1650, %v257
    %v1655 = vmul.f32 %v1653, %v257
    %v1656 = vsub.f32 %v1646, %v1654
    %v1657 = vsub.f32 %v1647, %v1655
    %v1658 = vmul.f32 %v1656, %v1656
    %v1659 = vmul.f32 %v1657, %v1657
    %v1660 = vsel %vm250, %v1658, 0.0
    %1661 = vadd.xlane.f32.xlu0 %v1660
    %v1662 = vpop.xlane.xlu0 %1661
    %v1663 = vsel %vm250, %v1659, 0.0
    %1664 = vadd.xlane.f32.xlu0 %v1663
    %v1665 = vpop.xlane.xlu0 %1664
    %v1666 = vmul.f32 %v1662, %v257
    %v1667 = vmul.f32 %v1665, %v257
    %v1668 = vadd.f32 %v1666, 1e-12
    %v1669 = vadd.f32 %v1667, 1e-12
    %v1670 = vrsqrt.pop %v1668
    %v1671 = vrsqrt.pop %v1669
    %v1672 = vmul.f32 %v1656, %v1670
    %v1673 = vmul.f32 %v1657, %v1671
    %v1674 = vlaneseq
    %v1675 = vshrl.u32 %v1674, 7
    %v1676 = vsub.s32 3, %v1675
    %v1677 = vrot.slane %v297, %v1676
    %v1678 = vmul.f32 %v1672, %v1677
    %v1679 = vmul.f32 %v1673, %v1677
    %1681 = vrot.lane.b32.xlu0 %v1677, 96
    %v1682 = vpop.permute.xlu0 %1681
    %v1684 = vadd.f32 %v1678, %v1682
    %v1685 = vadd.f32 %v1679, %v1682
    %v1686 = vpack.c.bf16 %v1685, %v1684
    %v1687 = vld [vmem:[#allocation7] sm:$0xf]
    %v1688 = vld [vmem:[#allocation7 + $0x4] sm:$0xf]
    %v1689 = vld [vmem:[#allocation7 + $0x8] sm:$0xf]
    %v1690 = vld [vmem:[#allocation7 + $0xc] sm:$0xf]
    %v1691 = vlaneseq
    %v1692 = vshrl.u32 %v1691, 7
    %v1693 = vsub.s32 1, %v1692
    %v1694 = vrot.slane %v297, %v1693
    %v1699 = vunpack.c.l.b16 %v1687
    %v1700 = vunpack.c.l.b16 %v1688
    %v1701 = vunpack.c.l.b16 %v1689
    %v1702 = vunpack.c.l.b16 %v1690
    %v1703 = vpack.c.b16 %v1700, %v1699
    %v1704 = vpack.c.b16 %v1702, %v1701
    %v1708 = vsel %vm250, %v1686, 0
    %1710 = vmatprep.subr.bf16.mxu0 0
    %1711 = vmatpush1.bf16.msra.mxu0 %v1703
    %1712 = vmatprep.subr.bf16.mxu0 0
    %1713 = vmatpush1.bf16.msra.mxu0 %v1704
    %1714 = vmatprep.subr.bf16.mxu0 0
    %1715 = vmatpush1.bf16.msra.mxu0 0
    %1716 = vmatprep.subr.bf16.mxu0 0
    %1717 = vmatpush1.bf16.msra.mxu0 0
    %1718 = vmatprep.subr.bf16.mxu0 0
    %1719 = vmatpush1.bf16.msra.mxu0 0
    %1720 = vmatprep.subr.bf16.mxu0 0
    %1721 = vmatpush1.bf16.msra.mxu0 0
    %1722 = vmatprep.subr.bf16.mxu0 0
    %1723 = vmatpush1.bf16.msra.mxu0 0
    %1724 = vmatprep.subr.bf16.mxu0 0
    %1725 = vmatpush1.bf16.msra.mxu0 0
    %1726 = vmatprep.subr.bf16.mxu0 0
    %1727 = vmatpush1.bf16.msra.mxu0 0
    %1728 = vmatprep.subr.bf16.mxu0 0
    %1729 = vmatpush1.bf16.msra.mxu0 0
    %1730 = vmatprep.subr.bf16.mxu0 0
    %1731 = vmatpush1.bf16.msra.mxu0 0
    %1732 = vmatprep.subr.bf16.mxu0 0
    %1733 = vmatpush1.bf16.msra.mxu0 0
    %1734 = vmatprep.subr.bf16.mxu0 0
    %1735 = vmatpush1.bf16.msra.mxu0 0
    %1736 = vmatprep.subr.bf16.mxu0 0
    %1737 = vmatpush1.bf16.msra.mxu0 0
    %1738 = vmatprep.subr.bf16.mxu0 0
    %1739 = vmatpush1.bf16.msra.mxu0 0
    %1740 = vmatprep.subr.bf16.mxu0 0
    %1741 = vmatpush1.bf16.msra.mxu0 0
    %1742 = vmatprep.mubr.bf16.mxu0 0
    %1743 = vmatmul.mubr.bf16.gmra.mrb[0].mxu0 %v1708
    %v1744 = vpop.f32.mrb[0].mxu0
    %v1745 = vadd.f32 %v1694, %v1744
    %v1746 = vpop.f32.mrb[0].mxu0
    %v1747 = vpop.f32.mrb[0].mxu0
    %v1748 = vadd.f32 %v1694, %v1747
    %v1749 = vpop.f32.mrb[0].mxu0
    %1750 = vdwg.mxu0
    %v1751 = vmul.f32 %v1745, %v1745
    %v1752 = vmul.f32 %v1748, %v1748
    %v1753 = vmul.f32 %v1745, %v1751
    %v1754 = vmul.f32 %v1748, %v1752
    %v1755 = vmul.f32 %v1753, 0.044715
    %v1756 = vmul.f32 %v1754, 0.044715
    %v1757 = vadd.f32 %v1745, %v1755
    %v1758 = vadd.f32 %v1748, %v1756
    %v1759 = vmul.f32 %v1757, 0.7978846
    %v1760 = vmul.f32 %v1758, 0.7978846
    %v1761 = vtanh.pop %v1759
    %v1762 = vtanh.pop %v1760
    %v1763 = vadd.f32 %v1761, 1.0
    %v1764 = vadd.f32 %v1762, 1.0
    %v1765 = vmul.f32 %v1763, 0.5
    %v1766 = vmul.f32 %v1764, 0.5
    %v1767 = vmul.f32 %v1745, %v1765
    %v1768 = vmul.f32 %v1748, %v1766
    %v1769 = vpack.c.bf16 %v1768, %v1767
    %v1770 = vld [vmem:[#allocation9] sm:$0xf]
    %v1771 = vld [vmem:[#allocation9 + $0x4] sm:$0xf]
    %v1772 = vld [vmem:[#allocation9 + $0x8] sm:$0xf]
    %v1773 = vld [vmem:[#allocation9 + $0xc] sm:$0xf]
    %v1774 = vld [vmem:[#allocation9 + $0x10] sm:$0xf]
    %v1775 = vld [vmem:[#allocation9 + $0x14] sm:$0xf]
    %v1776 = vld [vmem:[#allocation9 + $0x18] sm:$0xf]
    %v1777 = vld [vmem:[#allocation9 + $0x1c] sm:$0xf]
    %v1778 = vld [vmem:[#allocation9 + $0x20] sm:$0xf]
    %v1779 = vld [vmem:[#allocation9 + $0x24] sm:$0xf]
    %v1780 = vld [vmem:[#allocation9 + $0x28] sm:$0xf]
    %v1781 = vld [vmem:[#allocation9 + $0x2c] sm:$0xf]
    %v1782 = vld [vmem:[#allocation9 + $0x30] sm:$0xf]
    %v1783 = vld [vmem:[#allocation9 + $0x34] sm:$0xf]
    %v1784 = vld [vmem:[#allocation9 + $0x38] sm:$0xf]
    %v1785 = vld [vmem:[#allocation9 + $0x3c] sm:$0xf]
    %v1802 = vunpack.c.l.b16 %v1770
    %v1803 = vunpack.c.l.b16 %v1771
    %v1804 = vunpack.c.l.b16 %v1772
    %v1805 = vunpack.c.l.b16 %v1773
    %v1806 = vunpack.c.l.b16 %v1774
    %v1807 = vunpack.c.l.b16 %v1775
    %v1808 = vunpack.c.l.b16 %v1776
    %v1809 = vunpack.c.l.b16 %v1777
    %v1810 = vunpack.c.l.b16 %v1778
    %v1811 = vunpack.c.l.b16 %v1779
    %v1812 = vunpack.c.l.b16 %v1780
    %v1813 = vunpack.c.l.b16 %v1781
    %v1814 = vunpack.c.l.b16 %v1782
    %v1815 = vunpack.c.l.b16 %v1783
    %v1816 = vunpack.c.l.b16 %v1784
    %v1817 = vunpack.c.l.b16 %v1785
    %v1818 = vpack.c.b16 %v1803, %v1802
    %v1819 = vpack.c.b16 %v1805, %v1804
    %v1820 = vpack.c.b16 %v1807, %v1806
    %v1821 = vpack.c.b16 %v1809, %v1808
    %v1822 = vpack.c.b16 %v1811, %v1810
    %v1823 = vpack.c.b16 %v1813, %v1812
    %v1824 = vpack.c.b16 %v1815, %v1814
    %v1825 = vpack.c.b16 %v1817, %v1816
    %1835 = vrot.lane.b32.xlu0 %v1643, 96
    %v1836 = vpop.permute.xlu0 %1835
    %1838 = vmatprep.subr.bf16.mxu0 0
    %1839 = vmatpush1.bf16.msra.mxu0 %v1818
    %1840 = vmatprep.subr.bf16.mxu0 0
    %1841 = vmatpush1.bf16.msra.mxu0 %v1819
    %1842 = vmatprep.subr.bf16.mxu0 0
    %1843 = vmatpush1.bf16.msra.mxu0 %v1820
    %1844 = vmatprep.subr.bf16.mxu0 0
    %1845 = vmatpush1.bf16.msra.mxu0 %v1821
    %1846 = vmatprep.subr.bf16.mxu0 0
    %1847 = vmatpush1.bf16.msra.mxu0 %v1822
    %1848 = vmatprep.subr.bf16.mxu0 0
    %1849 = vmatpush1.bf16.msra.mxu0 %v1823
    %1850 = vmatprep.subr.bf16.mxu0 0
    %1851 = vmatpush1.bf16.msra.mxu0 %v1824
    %1852 = vmatprep.subr.bf16.mxu0 0
    %1853 = vmatpush1.bf16.msra.mxu0 %v1825
    %1854 = vmatprep.subr.bf16.mxu0 0
    %1855 = vmatpush1.bf16.msra.mxu0 0
    %1856 = vmatprep.subr.bf16.mxu0 0
    %1857 = vmatpush1.bf16.msra.mxu0 0
    %1858 = vmatprep.subr.bf16.mxu0 0
    %1859 = vmatpush1.bf16.msra.mxu0 0
    %1860 = vmatprep.subr.bf16.mxu0 0
    %1861 = vmatpush1.bf16.msra.mxu0 0
    %1862 = vmatprep.subr.bf16.mxu0 0
    %1863 = vmatpush1.bf16.msra.mxu0 0
    %1864 = vmatprep.subr.bf16.mxu0 0
    %1865 = vmatpush1.bf16.msra.mxu0 0
    %1866 = vmatprep.subr.bf16.mxu0 0
    %1867 = vmatpush1.bf16.msra.mxu0 0
    %1868 = vmatprep.subr.bf16.mxu0 0
    %1869 = vmatpush1.bf16.msra.mxu0 0
    %1870 = vmatprep.mubr.bf16.mxu0 0
    %1871 = vmatmul.mubr.bf16.gmra.mrb[0].mxu0 %v1769
    %v1872 = vpop.f32.mrb[0].mxu0
    %v1873 = vadd.f32 %v1836, %v1872
    %v1874 = vpop.f32.mrb[0].mxu0
    %v1875 = vpop.f32.mrb[0].mxu0
    %v1876 = vadd.f32 %v1836, %v1875
    %v1877 = vpop.f32.mrb[0].mxu0
    %1878 = vdwg.mxu0
    %v1879 = vadd.f32 %v1684, %v1873
    %v1880 = vadd.f32 %v1685, %v1876
    %v1881 = vsel %vm250, %v1879, 0.0
    %1882 = vadd.xlane.f32.xlu0 %v1881
    %v1883 = vpop.xlane.xlu0 %1882
    %v1884 = vsel %vm250, %v1880, 0.0
    %1885 = vadd.xlane.f32.xlu0 %v1884
    %v1886 = vpop.xlane.xlu0 %1885
    %v1887 = vmul.f32 %v1883, %v257
    %v1888 = vmul.f32 %v1886, %v257
    %v1889 = vsub.f32 %v1879, %v1887
    %v1890 = vsub.f32 %v1880, %v1888
    %v1891 = vmul.f32 %v1889, %v1889
    %v1892 = vmul.f32 %v1890, %v1890
    %v1893 = vsel %vm250, %v1891, 0.0
    %1894 = vadd.xlane.f32.xlu0 %v1893
    %v1895 = vpop.xlane.xlu0 %1894
    %v1896 = vsel %vm250, %v1892, 0.0
    %1897 = vadd.xlane.f32.xlu0 %v1896
    %v1898 = vpop.xlane.xlu0 %1897
    %v1899 = vmul.f32 %v1895, %v257
    %v1900 = vmul.f32 %v1898, %v257
    %v1901 = vadd.f32 %v1899, 1e-12
    %v1902 = vadd.f32 %v1900, 1e-12
    %v1903 = vrsqrt.pop %v1901
    %v1904 = vrsqrt.pop %v1902
    %v1905 = vmul.f32 %v1889, %v1903
    %v1906 = vmul.f32 %v1890, %v1904
    %1907 = vrot.lane.b32.xlu0 %v1677, 64
    %v1908 = vpop.permute.xlu0 %1907
    %v1910 = vmul.f32 %v1905, %v1908
    %v1911 = vmul.f32 %v1906, %v1908
    %1912 = vrot.lane.b32.xlu0 %v1677, 32
    %v1913 = vpop.permute.xlu0 %1912
    %v1915 = vadd.f32 %v1910, %v1913
    %v1916 = vadd.f32 %v1911, %v1913
    %s1917 = scalar_lea.vmem [#allocation10], 8
    %v1918 = vld [vmem:[%s1917] sm:$0xff]
    %s1919 = scalar_lea.vmem [#allocation6], 16
    %v1920 = vld [vmem:[%s1919] sm:$0xf]
    %v1921 = vld [vmem:[%s1919 + $0x4] sm:$0xf]
    %v1922 = vld [vmem:[%s1919 + $0x8] sm:$0xf]
    %v1923 = vld [vmem:[%s1919 + $0xc] sm:$0xf]
    %v1924 = vpack.c.bf16 %v1916, %v1915
    %s1925 = scalar_lea.vmem [#allocation4], 16
    %v1926 = vld [vmem:[%s1925] sm:$0xf]
    %v1927 = vld [vmem:[%s1925 + $0x4] sm:$0xf]
    %v1928 = vld [vmem:[%s1925 + $0x8] sm:$0xf]
    %v1929 = vld [vmem:[%s1925 + $0xc] sm:$0xf]
    %v1930 = vlaneseq
    %v1931 = vshrl.u32 %v1930, 7
    %v1932 = vsub.s32 0, %v1931
    %v1933 = vrot.slane %v1918, %v1932
    %v1938 = vunpack.c.l.b16 %v1926
    %v1939 = vunpack.c.l.b16 %v1927
    %v1940 = vunpack.c.l.b16 %v1928
    %v1941 = vunpack.c.l.b16 %v1929
    %v1942 = vpack.c.b16 %v1939, %v1938
    %v1943 = vpack.c.b16 %v1941, %v1940
    %v1947 = vsel %vm250, %v1924, 0
    %1949 = vmatprep.subr.bf16.mxu0 0
    %1950 = vmatpush1.bf16.msra.mxu0 %v1942
    %1951 = vmatprep.subr.bf16.mxu0 0
    %1952 = vmatpush1.bf16.msra.mxu0 %v1943
    %1953 = vmatprep.subr.bf16.mxu0 0
    %1954 = vmatpush1.bf16.msra.mxu0 0
    %1955 = vmatprep.subr.bf16.mxu0 0
    %1956 = vmatpush1.bf16.msra.mxu0 0
    %1957 = vmatprep.subr.bf16.mxu0 0
    %1958 = vmatpush1.bf16.msra.mxu0 0
    %1959 = vmatprep.subr.bf16.mxu0 0
    %1960 = vmatpush1.bf16.msra.mxu0 0
    %1961 = vmatprep.subr.bf16.mxu0 0
    %1962 = vmatpush1.bf16.msra.mxu0 0
    %1963 = vmatprep.subr.bf16.mxu0 0
    %1964 = vmatpush1.bf16.msra.mxu0 0
    %1965 = vmatprep.subr.bf16.mxu0 0
    %1966 = vmatpush1.bf16.msra.mxu0 0
    %1967 = vmatprep.subr.bf16.mxu0 0
    %1968 = vmatpush1.bf16.msra.mxu0 0
    %1969 = vmatprep.subr.bf16.mxu0 0
    %1970 = vmatpush1.bf16.msra.mxu0 0
    %1971 = vmatprep.subr.bf16.mxu0 0
    %1972 = vmatpush1.bf16.msra.mxu0 0
    %1973 = vmatprep.subr.bf16.mxu0 0
    %1974 = vmatpush1.bf16.msra.mxu0 0
    %1975 = vmatprep.subr.bf16.mxu0 0
    %1976 = vmatpush1.bf16.msra.mxu0 0
    %1977 = vmatprep.subr.bf16.mxu0 0
    %1978 = vmatpush1.bf16.msra.mxu0 0
    %1979 = vmatprep.subr.bf16.mxu0 0
    %1980 = vmatpush1.bf16.msra.mxu0 0
    %1981 = vmatprep.mubr.bf16.mxu0 0
    %1982 = vmatmul.mubr.bf16.gmra.mrb[0].mxu0 %v1947
    %v1983 = vpop.f32.mrb[0].mxu0
    %v1984 = vadd.f32 %v1933, %v1983
    %v1985 = vpop.f32.mrb[0].mxu0
    %v1986 = vpop.f32.mrb[0].mxu0
    %v1987 = vadd.f32 %v1933, %v1986
    %v1988 = vpop.f32.mrb[0].mxu0
    %1989 = vdwg.mxu0
    %v1990 = vpack.c.bf16 %v1987, %v1984
    %1992 = vrot.lane.b32.xlu0 %v1990, 96
    %v1993 = vpop.permute.xlu0 %1992
    %v1995 = vsel %vm371, %v1990, 0
    %v1998 = vsel %vm371, %v1993, 0
    %2000 = vmatprep.subr.bf16.mxu0 0
    %2001 = vmatpush1.bf16.xpose.msra.mxu0 %v1998
    %2002 = vmatprep.subr.bf16.mxu0 0
    %2003 = vmatpush1.bf16.xpose.msra.mxu0 0
    %2004 = vmatprep.subr.bf16.mxu0 0
    %2005 = vmatpush1.bf16.xpose.msra.mxu0 0
    %2006 = vmatprep.subr.bf16.mxu0 0
    %2007 = vmatpush1.bf16.xpose.msra.mxu0 0
    %2008 = vmatprep.subr.bf16.mxu0 0
    %2009 = vmatpush1.bf16.xpose.msra.mxu0 0
    %2010 = vmatprep.subr.bf16.mxu0 0
    %2011 = vmatpush1.bf16.xpose.msra.mxu0 0
    %2012 = vmatprep.subr.bf16.mxu0 0
    %2013 = vmatpush1.bf16.xpose.msra.mxu0 0
    %2014 = vmatprep.subr.bf16.mxu0 0
    %2015 = vmatpush1.bf16.xpose.msra.mxu0 0
    %2016 = vmatprep.subr.bf16.mxu0 0
    %2017 = vmatpush1.bf16.xpose.msra.mxu0 0
    %2018 = vmatprep.subr.bf16.mxu0 0
    %2019 = vmatpush1.bf16.xpose.msra.mxu0 0
    %2020 = vmatprep.subr.bf16.mxu0 0
    %2021 = vmatpush1.bf16.xpose.msra.mxu0 0
    %2022 = vmatprep.subr.bf16.mxu0 0
    %2023 = vmatpush1.bf16.xpose.msra.mxu0 0
    %2024 = vmatprep.subr.bf16.mxu0 0
    %2025 = vmatpush1.bf16.xpose.msra.mxu0 0
    %2026 = vmatprep.subr.bf16.mxu0 0
    %2027 = vmatpush1.bf16.xpose.msra.mxu0 0
    %2028 = vmatprep.subr.bf16.mxu0 0
    %2029 = vmatpush1.bf16.xpose.msra.mxu0 0
    %2030 = vmatprep.subr.bf16.mxu0 0
    %2031 = vmatpush1.bf16.xpose.msra.mxu0 0
    %2032 = vmatprep.mubr.bf16.mxu0 0
    %2033 = vmatmul.mubr.bf16.gmra.mrb[0].mxu0 %v1995
    %v2034 = vpop.f32.mrb[0].mxu0
    %v2035 = vadd.f32 0.0, %v2034
    %v2036 = vpop.f32.mrb[0].mxu0
    %v2037 = vpop.f32.mrb[0].mxu0
    %v2038 = vpop.f32.mrb[0].mxu0
    %2039 = vdwg.mxu0
    %v2040 = vmul.f32 %v2035, 0.35355338
    %v2041 = vadd.f32 %v2040, %v422
    %v2042 = vsel %vm371, %v2041, -inf
    %2043 = vmax.xlane.f32.xlu0 %v2042
    %v2044 = vpop.xlane.xlu0 %2043
    %v2045 = vsub.f32 %v2041, %v2044
    %v2046 = vmul.f32 %v2045, 1.442695
    %v2047 = vpow.pop %v2046
    %v2048 = vsel %vm371, %v2047, 0.0
    %2049 = vadd.xlane.f32.xlu0 %v2048
    %v2050 = vpop.xlane.xlu0 %2049
    %v2051 = vrcp.pop %v2050
    %v2052 = vmul.f32 %v2047, %v2051
    %v2053 = vpack.c.bf16 %v2052, %v2052
    %2054 = vrot.lane.b32.xlu0 %v1990, 64
    %v2055 = vpop.permute.xlu0 %2054
    %v2057 = vsel %vm371, %v2053, 0
    %v2060 = vsel %vm441, %v2055, 0
    %2062 = vmatprep.subr.bf16.mxu0 0
    %2063 = vmatpush1.bf16.msra.mxu0 %v2060
    %2064 = vmatprep.subr.bf16.mxu0 0
    %2065 = vmatpush1.bf16.msra.mxu0 0
    %2066 = vmatprep.subr.bf16.mxu0 0
    %2067 = vmatpush1.bf16.msra.mxu0 0
    %2068 = vmatprep.subr.bf16.mxu0 0
    %2069 = vmatpush1.bf16.msra.mxu0 0
    %2070 = vmatprep.subr.bf16.mxu0 0
    %2071 = vmatpush1.bf16.msra.mxu0 0
    %2072 = vmatprep.subr.bf16.mxu0 0
    %2073 = vmatpush1.bf16.msra.mxu0 0
    %2074 = vmatprep.subr.bf16.mxu0 0
    %2075 = vmatpush1.bf16.msra.mxu0 0
    %2076 = vmatprep.subr.bf16.mxu0 0
    %2077 = vmatpush1.bf16.msra.mxu0 0
    %2078 = vmatprep.subr.bf16.mxu0 0
    %2079 = vmatpush1.bf16.msra.mxu0 0
    %2080 = vmatprep.subr.bf16.mxu0 0
    %2081 = vmatpush1.bf16.msra.mxu0 0
    %2082 = vmatprep.subr.bf16.mxu0 0
    %2083 = vmatpush1.bf16.msra.mxu0 0
    %2084 = vmatprep.subr.bf16.mxu0 0
    %2085 = vmatpush1.bf16.msra.mxu0 0
    %2086 = vmatprep.subr.bf16.mxu0 0
    %2087 = vmatpush1.bf16.msra.mxu0 0
    %2088 = vmatprep.subr.bf16.mxu0 0
    %2089 = vmatpush1.bf16.msra.mxu0 0
    %2090 = vmatprep.subr.bf16.mxu0 0
    %2091 = vmatpush1.bf16.msra.mxu0 0
    %2092 = vmatprep.subr.bf16.mxu0 0
    %2093 = vmatpush1.bf16.msra.mxu0 0
    %2094 = vmatprep.mubr.bf16.mxu0 0
    %2095 = vmatmul.mubr.bf16.gmra.mrb[0].mxu0 %v2057
    %v2096 = vpop.f32.mrb[0].mxu0
    %v2097 = vadd.f32 0.0, %v2096
    %v2098 = vpop.f32.mrb[0].mxu0
    %v2099 = vpop.f32.mrb[0].mxu0
    %v2100 = vpop.f32.mrb[0].mxu0
    %2101 = vdwg.mxu0
    %v2102 = vpack.c.bf16 %v2097, %v2097
    %2103 = vrot.lane.b32.xlu0 %v1990, 120
    %v2104 = vpop.permute.xlu0 %2103
    %2105 = vrot.lane.b32.xlu0 %v1990, 88
    %v2106 = vpop.permute.xlu0 %2105
    %v2108 = vsel %vm371, %v2104, 0
    %v2111 = vsel %vm371, %v2106, 0
    %2113 = vmatprep.subr.bf16.mxu0 0
    %2114 = vmatpush1.bf16.xpose.msra.mxu0 %v2111
    %2115 = vmatprep.subr.bf16.mxu0 0
    %2116 = vmatpush1.bf16.xpose.msra.mxu0 0
    %2117 = vmatprep.subr.bf16.mxu0 0
    %2118 = vmatpush1.bf16.xpose.msra.mxu0 0
    %2119 = vmatprep.subr.bf16.mxu0 0
    %2120 = vmatpush1.bf16.xpose.msra.mxu0 0
    %2121 = vmatprep.subr.bf16.mxu0 0
    %2122 = vmatpush1.bf16.xpose.msra.mxu0 0
    %2123 = vmatprep.subr.bf16.mxu0 0
    %2124 = vmatpush1.bf16.xpose.msra.mxu0 0
    %2125 = vmatprep.subr.bf16.mxu0 0
    %2126 = vmatpush1.bf16.xpose.msra.mxu0 0
    %2127 = vmatprep.subr.bf16.mxu0 0
    %2128 = vmatpush1.bf16.xpose.msra.mxu0 0
    %2129 = vmatprep.subr.bf16.mxu0 0
    %2130 = vmatpush1.bf16.xpose.msra.mxu0 0
    %2131 = vmatprep.subr.bf16.mxu0 0
    %2132 = vmatpush1.bf16.xpose.msra.mxu0 0
    %2133 = vmatprep.subr.bf16.mxu0 0
    %2134 = vmatpush1.bf16.xpose.msra.mxu0 0
    %2135 = vmatprep.subr.bf16.mxu0 0
    %2136 = vmatpush1.bf16.xpose.msra.mxu0 0
    %2137 = vmatprep.subr.bf16.mxu0 0
    %2138 = vmatpush1.bf16.xpose.msra.mxu0 0
    %2139 = vmatprep.subr.bf16.mxu0 0
    %2140 = vmatpush1.bf16.xpose.msra.mxu0 0
    %2141 = vmatprep.subr.bf16.mxu0 0
    %2142 = vmatpush1.bf16.xpose.msra.mxu0 0
    %2143 = vmatprep.subr.bf16.mxu0 0
    %2144 = vmatpush1.bf16.xpose.msra.mxu0 0
    %2145 = vmatprep.mubr.bf16.mxu0 0
    %2146 = vmatmul.mubr.bf16.gmra.mrb[0].mxu0 %v2108
    %v2147 = vpop.f32.mrb[0].mxu0
    %v2148 = vadd.f32 0.0, %v2147
    %v2149 = vpop.f32.mrb[0].mxu0
    %v2150 = vpop.f32.mrb[0].mxu0
    %v2151 = vpop.f32.mrb[0].mxu0
    %2152 = vdwg.mxu0
    %v2153 = vmul.f32 %v2148, 0.35355338
    %v2154 = vadd.f32 %v2153, %v422
    %v2155 = vsel %vm371, %v2154, -inf
    %2156 = vmax.xlane.f32.xlu0 %v2155
    %v2157 = vpop.xlane.xlu0 %2156
    %v2158 = vsub.f32 %v2154, %v2157
    %v2159 = vmul.f32 %v2158, 1.442695
    %v2160 = vpow.pop %v2159
    %v2161 = vsel %vm371, %v2160, 0.0
    %2162 = vadd.xlane.f32.xlu0 %v2161
    %v2163 = vpop.xlane.xlu0 %2162
    %v2164 = vrcp.pop %v2163
    %v2165 = vmul.f32 %v2160, %v2164
    %v2166 = vpack.c.bf16 %v2165, %v2165
    %2167 = vrot.lane.b32.xlu0 %v1990, 56
    %v2168 = vpop.permute.xlu0 %2167
    %v2170 = vsel %vm371, %v2166, 0
    %v2173 = vsel %vm441, %v2168, 0
    %2175 = vmatprep.subr.bf16.mxu0 0
    %2176 = vmatpush1.bf16.msra.mxu0 %v2173
    %2177 = vmatprep.subr.bf16.mxu0 0
    %2178 = vmatpush1.bf16.msra.mxu0 0
    %2179 = vmatprep.subr.bf16.mxu0 0
    %2180 = vmatpush1.bf16.msra.mxu0 0
    %2181 = vmatprep.subr.bf16.mxu0 0
    %2182 = vmatpush1.bf16.msra.mxu0 0
    %2183 = vmatprep.subr.bf16.mxu0 0
    %2184 = vmatpush1.bf16.msra.mxu0 0
    %2185 = vmatprep.subr.bf16.mxu0 0
    %2186 = vmatpush1.bf16.msra.mxu0 0
    %2187 = vmatprep.subr.bf16.mxu0 0
    %2188 = vmatpush1.bf16.msra.mxu0 0
    %2189 = vmatprep.subr.bf16.mxu0 0
    %2190 = vmatpush1.bf16.msra.mxu0 0
    %2191 = vmatprep.subr.bf16.mxu0 0
    %2192 = vmatpush1.bf16.msra.mxu0 0
    %2193 = vmatprep.subr.bf16.mxu0 0
    %2194 = vmatpush1.bf16.msra.mxu0 0
    %2195 = vmatprep.subr.bf16.mxu0 0
    %2196 = vmatpush1.bf16.msra.mxu0 0
    %2197 = vmatprep.subr.bf16.mxu0 0
    %2198 = vmatpush1.bf16.msra.mxu0 0
    %2199 = vmatprep.subr.bf16.mxu0 0
    %2200 = vmatpush1.bf16.msra.mxu0 0
    %2201 = vmatprep.subr.bf16.mxu0 0
    %2202 = vmatpush1.bf16.msra.mxu0 0
    %2203 = vmatprep.subr.bf16.mxu0 0
    %2204 = vmatpush1.bf16.msra.mxu0 0
    %2205 = vmatprep.subr.bf16.mxu0 0
    %2206 = vmatpush1.bf16.msra.mxu0 0
    %2207 = vmatprep.mubr.bf16.mxu0 0
    %2208 = vmatmul.mubr.bf16.gmra.mrb[0].mxu0 %v2170
    %v2209 = vpop.f32.mrb[0].mxu0
    %v2210 = vadd.f32 0.0, %v2209
    %v2211 = vpop.f32.mrb[0].mxu0
    %v2212 = vpop.f32.mrb[0].mxu0
    %v2213 = vpop.f32.mrb[0].mxu0
    %2214 = vdwg.mxu0
    %v2215 = vpack.c.bf16 %v2210, %v2210
    %v2217 = vsel %vm371, %v2215, 0
    %v2220 = vsel %vm441, %v1921, 0
    %2222 = vmatprep.subr.bf16.mxu0 0
    %2223 = vmatpush1.bf16.msra.mxu0 %v2220
    %2224 = vmatprep.subr.bf16.mxu0 0
    %2225 = vmatpush1.bf16.msra.mxu0 0
    %2226 = vmatprep.subr.bf16.mxu0 0
    %2227 = vmatpush1.bf16.msra.mxu0 0
    %2228 = vmatprep.subr.bf16.mxu0 0
    %2229 = vmatpush1.bf16.msra.mxu0 0
    %2230 = vmatprep.subr.bf16.mxu0 0
    %2231 = vmatpush1.bf16.msra.mxu0 0
    %2232 = vmatprep.subr.bf16.mxu0 0
    %2233 = vmatpush1.bf16.msra.mxu0 0
    %2234 = vmatprep.subr.bf16.mxu0 0
    %2235 = vmatpush1.bf16.msra.mxu0 0
    %2236 = vmatprep.subr.bf16.mxu0 0
    %2237 = vmatpush1.bf16.msra.mxu0 0
    %2238 = vmatprep.subr.bf16.mxu0 0
    %2239 = vmatpush1.bf16.msra.mxu0 0
    %2240 = vmatprep.subr.bf16.mxu0 0
    %2241 = vmatpush1.bf16.msra.mxu0 0
    %2242 = vmatprep.subr.bf16.mxu0 0
    %2243 = vmatpush1.bf16.msra.mxu0 0
    %2244 = vmatprep.subr.bf16.mxu0 0
    %2245 = vmatpush1.bf16.msra.mxu0 0
    %2246 = vmatprep.subr.bf16.mxu0 0
    %2247 = vmatpush1.bf16.msra.mxu0 0
    %2248 = vmatprep.subr.bf16.mxu0 0
    %2249 = vmatpush1.bf16.msra.mxu0 0
    %2250 = vmatprep.subr.bf16.mxu0 0
    %2251 = vmatpush1.bf16.msra.mxu0 0
    %2252 = vmatprep.subr.bf16.mxu0 0
    %2253 = vmatpush1.bf16.msra.mxu0 0
    %2254 = vmatprep.mubr.bf16.mxu0 0
    %2255 = vmatmul.mubr.bf16.gmra.mrb[0].mxu0 %v2217
    %v2256 = vpop.f32.mrb[0].mxu0
    %v2257 = vadd.f32 0.0, %v2256
    %v2258 = vpop.f32.mrb[0].mxu0
    %v2259 = vpop.f32.mrb[0].mxu0
    %v2260 = vpop.f32.mrb[0].mxu0
    %2261 = vdwg.mxu0
    %v2263 = vsel %vm371, %v2102, 0
    %v2266 = vsel %vm441, %v1920, 0
    %2268 = vmatprep.subr.bf16.mxu0 0
    %2269 = vmatpush1.bf16.msra.mxu0 %v2266
    %2270 = vmatprep.subr.bf16.mxu0 0
    %2271 = vmatpush1.bf16.msra.mxu0 0
    %2272 = vmatprep.subr.bf16.mxu0 0
    %2273 = vmatpush1.bf16.msra.mxu0 0
    %2274 = vmatprep.subr.bf16.mxu0 0
    %2275 = vmatpush1.bf16.msra.mxu0 0
    %2276 = vmatprep.subr.bf16.mxu0 0
    %2277 = vmatpush1.bf16.msra.mxu0 0
    %2278 = vmatprep.subr.bf16.mxu0 0
    %2279 = vmatpush1.bf16.msra.mxu0 0
    %2280 = vmatprep.subr.bf16.mxu0 0
    %2281 = vmatpush1.bf16.msra.mxu0 0
    %2282 = vmatprep.subr.bf16.mxu0 0
    %2283 = vmatpush1.bf16.msra.mxu0 0
    %2284 = vmatprep.subr.bf16.mxu0 0
    %2285 = vmatpush1.bf16.msra.mxu0 0
    %2286 = vmatprep.subr.bf16.mxu0 0
    %2287 = vmatpush1.bf16.msra.mxu0 0
    %2288 = vmatprep.subr.bf16.mxu0 0
    %2289 = vmatpush1.bf16.msra.mxu0 0
    %2290 = vmatprep.subr.bf16.mxu0 0
    %2291 = vmatpush1.bf16.msra.mxu0 0
    %2292 = vmatprep.subr.bf16.mxu0 0
    %2293 = vmatpush1.bf16.msra.mxu0 0
    %2294 = vmatprep.subr.bf16.mxu0 0
    %2295 = vmatpush1.bf16.msra.mxu0 0
    %2296 = vmatprep.subr.bf16.mxu0 0
    %2297 = vmatpush1.bf16.msra.mxu0 0
    %2298 = vmatprep.subr.bf16.mxu0 0
    %2299 = vmatpush1.bf16.msra.mxu0 0
    %2300 = vmatprep.mubr.bf16.mxu0 0
    %2301 = vmatmul.mubr.bf16.gmra.mrb[0].mxu0 %v2263
    %v2302 = vpop.f32.mrb[0].mxu0
    %v2303 = vadd.f32 %v2257, %v2302
    %v2304 = vpop.f32.mrb[0].mxu0
    %v2305 = vpop.f32.mrb[0].mxu0
    %v2306 = vpop.f32.mrb[0].mxu0
    %2307 = vdwg.mxu0
    %2308 = vrot.lane.b32.xlu0 %v1990, 112
    %v2309 = vpop.permute.xlu0 %2308
    %2310 = vrot.lane.b32.xlu0 %v1990, 80
    %v2311 = vpop.permute.xlu0 %2310
    %v2313 = vsel %vm371, %v2309, 0
    %v2316 = vsel %vm371, %v2311, 0
    %2318 = vmatprep.subr.bf16.mxu0 0
    %2319 = vmatpush1.bf16.xpose.msra.mxu0 %v2316
    %2320 = vmatprep.subr.bf16.mxu0 0
    %2321 = vmatpush1.bf16.xpose.msra.mxu0 0
    %2322 = vmatprep.subr.bf16.mxu0 0
    %2323 = vmatpush1.bf16.xpose.msra.mxu0 0
    %2324 = vmatprep.subr.bf16.mxu0 0
    %2325 = vmatpush1.bf16.xpose.msra.mxu0 0
    %2326 = vmatprep.subr.bf16.mxu0 0
    %2327 = vmatpush1.bf16.xpose.msra.mxu0 0
    %2328 = vmatprep.subr.bf16.mxu0 0
    %2329 = vmatpush1.bf16.xpose.msra.mxu0 0
    %2330 = vmatprep.subr.bf16.mxu0 0
    %2331 = vmatpush1.bf16.xpose.msra.mxu0 0
    %2332 = vmatprep.subr.bf16.mxu0 0
    %2333 = vmatpush1.bf16.xpose.msra.mxu0 0
    %2334 = vmatprep.subr.bf16.mxu0 0
    %2335 = vmatpush1.bf16.xpose.msra.mxu0 0
    %2336 = vmatprep.subr.bf16.mxu0 0
    %2337 = vmatpush1.bf16.xpose.msra.mxu0 0
    %2338 = vmatprep.subr.bf16.mxu0 0
    %2339 = vmatpush1.bf16.xpose.msra.mxu0 0
    %2340 = vmatprep.subr.bf16.mxu0 0
    %2341 = vmatpush1.bf16.xpose.msra.mxu0 0
    %2342 = vmatprep.subr.bf16.mxu0 0
    %2343 = vmatpush1.bf16.xpose.msra.mxu0 0
    %2344 = vmatprep.subr.bf16.mxu0 0
    %2345 = vmatpush1.bf16.xpose.msra.mxu0 0
    %2346 = vmatprep.subr.bf16.mxu0 0
    %2347 = vmatpush1.bf16.xpose.msra.mxu0 0
    %2348 = vmatprep.subr.bf16.mxu0 0
    %2349 = vmatpush1.bf16.xpose.msra.mxu0 0
    %2350 = vmatprep.mubr.bf16.mxu0 0
    %2351 = vmatmul.mubr.bf16.gmra.mrb[0].mxu0 %v2313
    %v2352 = vpop.f32.mrb[0].mxu0
    %v2353 = vadd.f32 0.0, %v2352
    %v2354 = vpop.f32.mrb[0].mxu0
    %v2355 = vpop.f32.mrb[0].mxu0
    %v2356 = vpop.f32.mrb[0].mxu0
    %2357 = vdwg.mxu0
    %v2358 = vmul.f32 %v2353, 0.35355338
    %v2359 = vadd.f32 %v2358, %v422
    %v2360 = vsel %vm371, %v2359, -inf
    %2361 = vmax.xlane.f32.xlu0 %v2360
    %v2362 = vpop.xlane.xlu0 %2361
    %v2363 = vsub.f32 %v2359, %v2362
    %v2364 = vmul.f32 %v2363, 1.442695
    %v2365 = vpow.pop %v2364
    %v2366 = vsel %vm371, %v2365, 0.0
    %2367 = vadd.xlane.f32.xlu0 %v2366
    %v2368 = vpop.xlane.xlu0 %2367
    %v2369 = vrcp.pop %v2368
    %v2370 = vmul.f32 %v2365, %v2369
    %v2371 = vpack.c.bf16 %v2370, %v2370
    %2372 = vrot.lane.b32.xlu0 %v1990, 48
    %v2373 = vpop.permute.xlu0 %2372
    %v2375 = vsel %vm371, %v2371, 0
    %v2378 = vsel %vm441, %v2373, 0
    %2380 = vmatprep.subr.bf16.mxu0 0
    %2381 = vmatpush1.bf16.msra.mxu0 %v2378
    %2382 = vmatprep.subr.bf16.mxu0 0
    %2383 = vmatpush1.bf16.msra.mxu0 0
    %2384 = vmatprep.subr.bf16.mxu0 0
    %2385 = vmatpush1.bf16.msra.mxu0 0
    %2386 = vmatprep.subr.bf16.mxu0 0
    %2387 = vmatpush1.bf16.msra.mxu0 0
    %2388 = vmatprep.subr.bf16.mxu0 0
    %2389 = vmatpush1.bf16.msra.mxu0 0
    %2390 = vmatprep.subr.bf16.mxu0 0
    %2391 = vmatpush1.bf16.msra.mxu0 0
    %2392 = vmatprep.subr.bf16.mxu0 0
    %2393 = vmatpush1.bf16.msra.mxu0 0
    %2394 = vmatprep.subr.bf16.mxu0 0
    %2395 = vmatpush1.bf16.msra.mxu0 0
    %2396 = vmatprep.subr.bf16.mxu0 0
    %2397 = vmatpush1.bf16.msra.mxu0 0
    %2398 = vmatprep.subr.bf16.mxu0 0
    %2399 = vmatpush1.bf16.msra.mxu0 0
    %2400 = vmatprep.subr.bf16.mxu0 0
    %2401 = vmatpush1.bf16.msra.mxu0 0
    %2402 = vmatprep.subr.bf16.mxu0 0
    %2403 = vmatpush1.bf16.msra.mxu0 0
    %2404 = vmatprep.subr.bf16.mxu0 0
    %2405 = vmatpush1.bf16.msra.mxu0 0
    %2406 = vmatprep.subr.bf16.mxu0 0
    %2407 = vmatpush1.bf16.msra.mxu0 0
    %2408 = vmatprep.subr.bf16.mxu0 0
    %2409 = vmatpush1.bf16.msra.mxu0 0
    %2410 = vmatprep.subr.bf16.mxu0 0
    %2411 = vmatpush1.bf16.msra.mxu0 0
    %2412 = vmatprep.mubr.bf16.mxu0 0
    %2413 = vmatmul.mubr.bf16.gmra.mrb[0].mxu0 %v2375
    %v2414 = vpop.f32.mrb[0].mxu0
    %v2415 = vadd.f32 0.0, %v2414
    %v2416 = vpop.f32.mrb[0].mxu0
    %v2417 = vpop.f32.mrb[0].mxu0
    %v2418 = vpop.f32.mrb[0].mxu0
    %2419 = vdwg.mxu0
    %v2420 = vpack.c.bf16 %v2415, %v2415
    %v2422 = vsel %vm371, %v2420, 0
    %v2425 = vsel %vm441, %v1922, 0
    %2427 = vmatprep.subr.bf16.mxu0 0
    %2428 = vmatpush1.bf16.msra.mxu0 %v2425
    %2429 = vmatprep.subr.bf16.mxu0 0
    %2430 = vmatpush1.bf16.msra.mxu0 0
    %2431 = vmatprep.subr.bf16.mxu0 0
    %2432 = vmatpush1.bf16.msra.mxu0 0
    %2433 = vmatprep.subr.bf16.mxu0 0
    %2434 = vmatpush1.bf16.msra.mxu0 0
    %2435 = vmatprep.subr.bf16.mxu0 0
    %2436 = vmatpush1.bf16.msra.mxu0 0
    %2437 = vmatprep.subr.bf16.mxu0 0
    %2438 = vmatpush1.bf16.msra.mxu0 0
    %2439 = vmatprep.subr.bf16.mxu0 0
    %2440 = vmatpush1.bf16.msra.mxu0 0
    %2441 = vmatprep.subr.bf16.mxu0 0
    %2442 = vmatpush1.bf16.msra.mxu0 0
    %2443 = vmatprep.subr.bf16.mxu0 0
    %2444 = vmatpush1.bf16.msra.mxu0 0
    %2445 = vmatprep.subr.bf16.mxu0 0
    %2446 = vmatpush1.bf16.msra.mxu0 0
    %2447 = vmatprep.subr.bf16.mxu0 0
    %2448 = vmatpush1.bf16.msra.mxu0 0
    %2449 = vmatprep.subr.bf16.mxu0 0
    %2450 = vmatpush1.bf16.msra.mxu0 0
    %2451 = vmatprep.subr.bf16.mxu0 0
    %2452 = vmatpush1.bf16.msra.mxu0 0
    %2453 = vmatprep.subr.bf16.mxu0 0
    %2454 = vmatpush1.bf16.msra.mxu0 0
    %2455 = vmatprep.subr.bf16.mxu0 0
    %2456 = vmatpush1.bf16.msra.mxu0 0
    %2457 = vmatprep.subr.bf16.mxu0 0
    %2458 = vmatpush1.bf16.msra.mxu0 0
    %2459 = vmatprep.mubr.bf16.mxu0 0
    %2460 = vmatmul.mubr.bf16.gmra.mrb[0].mxu0 %v2422
    %v2461 = vpop.f32.mrb[0].mxu0
    %v2462 = vadd.f32 0.0, %v2461
    %v2463 = vpop.f32.mrb[0].mxu0
    %v2464 = vpop.f32.mrb[0].mxu0
    %v2465 = vpop.f32.mrb[0].mxu0
    %2466 = vdwg.mxu0
    %v2467 = vadd.f32 %v2303, %v2462
    %2468 = vrot.lane.b32.xlu0 %v1990, 104
    %v2469 = vpop.permute.xlu0 %2468
    %2470 = vrot.lane.b32.xlu0 %v1990, 72
    %v2471 = vpop.permute.xlu0 %2470
    %v2473 = vsel %vm371, %v2469, 0
    %v2476 = vsel %vm371, %v2471, 0
    %2478 = vmatprep.subr.bf16.mxu0 0
    %2479 = vmatpush1.bf16.xpose.msra.mxu0 %v2476
    %2480 = vmatprep.subr.bf16.mxu0 0
    %2481 = vmatpush1.bf16.xpose.msra.mxu0 0
    %2482 = vmatprep.subr.bf16.mxu0 0
    %2483 = vmatpush1.bf16.xpose.msra.mxu0 0
    %2484 = vmatprep.subr.bf16.mxu0 0
    %2485 = vmatpush1.bf16.xpose.msra.mxu0 0
    %2486 = vmatprep.subr.bf16.mxu0 0
    %2487 = vmatpush1.bf16.xpose.msra.mxu0 0
    %2488 = vmatprep.subr.bf16.mxu0 0
    %2489 = vmatpush1.bf16.xpose.msra.mxu0 0
    %2490 = vmatprep.subr.bf16.mxu0 0
    %2491 = vmatpush1.bf16.xpose.msra.mxu0 0
    %2492 = vmatprep.subr.bf16.mxu0 0
    %2493 = vmatpush1.bf16.xpose.msra.mxu0 0
    %2494 = vmatprep.subr.bf16.mxu0 0
    %2495 = vmatpush1.bf16.xpose.msra.mxu0 0
    %2496 = vmatprep.subr.bf16.mxu0 0
    %2497 = vmatpush1.bf16.xpose.msra.mxu0 0
    %2498 = vmatprep.subr.bf16.mxu0 0
    %2499 = vmatpush1.bf16.xpose.msra.mxu0 0
    %2500 = vmatprep.subr.bf16.mxu0 0
    %2501 = vmatpush1.bf16.xpose.msra.mxu0 0
    %2502 = vmatprep.subr.bf16.mxu0 0
    %2503 = vmatpush1.bf16.xpose.msra.mxu0 0
    %2504 = vmatprep.subr.bf16.mxu0 0
    %2505 = vmatpush1.bf16.xpose.msra.mxu0 0
    %2506 = vmatprep.subr.bf16.mxu0 0
    %2507 = vmatpush1.bf16.xpose.msra.mxu0 0
    %2508 = vmatprep.subr.bf16.mxu0 0
    %2509 = vmatpush1.bf16.xpose.msra.mxu0 0
    %2510 = vmatprep.mubr.bf16.mxu0 0
    %2511 = vmatmul.mubr.bf16.gmra.mrb[0].mxu0 %v2473
    %v2512 = vpop.f32.mrb[0].mxu0
    %v2513 = vadd.f32 0.0, %v2512
    %v2514 = vpop.f32.mrb[0].mxu0
    %v2515 = vpop.f32.mrb[0].mxu0
    %v2516 = vpop.f32.mrb[0].mxu0
    %2517 = vdwg.mxu0
    %v2518 = vmul.f32 %v2513, 0.35355338
    %v2519 = vadd.f32 %v2518, %v422
    %v2520 = vsel %vm371, %v2519, -inf
    %2521 = vmax.xlane.f32.xlu0 %v2520
    %v2522 = vpop.xlane.xlu0 %2521
    %v2523 = vsub.f32 %v2519, %v2522
    %v2524 = vmul.f32 %v2523, 1.442695
    %v2525 = vpow.pop %v2524
    %v2526 = vsel %vm371, %v2525, 0.0
    %2527 = vadd.xlane.f32.xlu0 %v2526
    %v2528 = vpop.xlane.xlu0 %2527
    %v2529 = vrcp.pop %v2528
    %v2530 = vmul.f32 %v2525, %v2529
    %v2531 = vpack.c.bf16 %v2530, %v2530
    %2532 = vrot.lane.b32.xlu0 %v1990, 40
    %v2533 = vpop.permute.xlu0 %2532
    %v2535 = vsel %vm371, %v2531, 0
    %v2538 = vsel %vm441, %v2533, 0
    %2540 = vmatprep.subr.bf16.mxu0 0
    %2541 = vmatpush1.bf16.msra.mxu0 %v2538
    %2542 = vmatprep.subr.bf16.mxu0 0
    %2543 = vmatpush1.bf16.msra.mxu0 0
    %2544 = vmatprep.subr.bf16.mxu0 0
    %2545 = vmatpush1.bf16.msra.mxu0 0
    %2546 = vmatprep.subr.bf16.mxu0 0
    %2547 = vmatpush1.bf16.msra.mxu0 0
    %2548 = vmatprep.subr.bf16.mxu0 0
    %2549 = vmatpush1.bf16.msra.mxu0 0
    %2550 = vmatprep.subr.bf16.mxu0 0
    %2551 = vmatpush1.bf16.msra.mxu0 0
    %2552 = vmatprep.subr.bf16.mxu0 0
    %2553 = vmatpush1.bf16.msra.mxu0 0
    %2554 = vmatprep.subr.bf16.mxu0 0
    %2555 = vmatpush1.bf16.msra.mxu0 0
    %2556 = vmatprep.subr.bf16.mxu0 0
    %2557 = vmatpush1.bf16.msra.mxu0 0
    %2558 = vmatprep.subr.bf16.mxu0 0
    %2559 = vmatpush1.bf16.msra.mxu0 0
    %2560 = vmatprep.subr.bf16.mxu0 0
    %2561 = vmatpush1.bf16.msra.mxu0 0
    %2562 = vmatprep.subr.bf16.mxu0 0
    %2563 = vmatpush1.bf16.msra.mxu0 0
    %2564 = vmatprep.subr.bf16.mxu0 0
    %2565 = vmatpush1.bf16.msra.mxu0 0
    %2566 = vmatprep.subr.bf16.mxu0 0
    %2567 = vmatpush1.bf16.msra.mxu0 0
    %2568 = vmatprep.subr.bf16.mxu0 0
    %2569 = vmatpush1.bf16.msra.mxu0 0
    %2570 = vmatprep.subr.bf16.mxu0 0
    %2571 = vmatpush1.bf16.msra.mxu0 0
    %2572 = vmatprep.mubr.bf16.mxu0 0
    %2573 = vmatmul.mubr.bf16.gmra.mrb[0].mxu0 %v2535
    %v2574 = vpop.f32.mrb[0].mxu0
    %v2575 = vadd.f32 0.0, %v2574
    %v2576 = vpop.f32.mrb[0].mxu0
    %v2577 = vpop.f32.mrb[0].mxu0
    %v2578 = vpop.f32.mrb[0].mxu0
    %2579 = vdwg.mxu0
    %v2580 = vpack.c.bf16 %v2575, %v2575
    %v2582 = vsel %vm371, %v2580, 0
    %v2585 = vsel %vm441, %v1923, 0
    %2587 = vmatprep.subr.bf16.mxu0 0
    %2588 = vmatpush1.bf16.msra.mxu0 %v2585
    %2589 = vmatprep.subr.bf16.mxu0 0
    %2590 = vmatpush1.bf16.msra.mxu0 0
    %2591 = vmatprep.subr.bf16.mxu0 0
    %2592 = vmatpush1.bf16.msra.mxu0 0
    %2593 = vmatprep.subr.bf16.mxu0 0
    %2594 = vmatpush1.bf16.msra.mxu0 0
    %2595 = vmatprep.subr.bf16.mxu0 0
    %2596 = vmatpush1.bf16.msra.mxu0 0
    %2597 = vmatprep.subr.bf16.mxu0 0
    %2598 = vmatpush1.bf16.msra.mxu0 0
    %2599 = vmatprep.subr.bf16.mxu0 0
    %2600 = vmatpush1.bf16.msra.mxu0 0
    %2601 = vmatprep.subr.bf16.mxu0 0
    %2602 = vmatpush1.bf16.msra.mxu0 0
    %2603 = vmatprep.subr.bf16.mxu0 0
    %2604 = vmatpush1.bf16.msra.mxu0 0
    %2605 = vmatprep.subr.bf16.mxu0 0
    %2606 = vmatpush1.bf16.msra.mxu0 0
    %2607 = vmatprep.subr.bf16.mxu0 0
    %2608 = vmatpush1.bf16.msra.mxu0 0
    %2609 = vmatprep.subr.bf16.mxu0 0
    %2610 = vmatpush1.bf16.msra.mxu0 0
    %2611 = vmatprep.subr.bf16.mxu0 0
    %2612 = vmatpush1.bf16.msra.mxu0 0
    %2613 = vmatprep.subr.bf16.mxu0 0
    %2614 = vmatpush1.bf16.msra.mxu0 0
    %2615 = vmatprep.subr.bf16.mxu0 0
    %2616 = vmatpush1.bf16.msra.mxu0 0
    %2617 = vmatprep.subr.bf16.mxu0 0
    %2618 = vmatpush1.bf16.msra.mxu0 0
    %2619 = vmatprep.mubr.bf16.mxu0 0
    %2620 = vmatmul.mubr.bf16.gmra.mrb[0].mxu0 %v2582
    %v2621 = vpop.f32.mrb[0].mxu0
    %v2622 = vadd.f32 0.0, %v2621
    %v2623 = vpop.f32.mrb[0].mxu0
    %v2624 = vpop.f32.mrb[0].mxu0
    %v2625 = vpop.f32.mrb[0].mxu0
    %2626 = vdwg.mxu0
    %v2627 = vadd.f32 %v2467, %v2622
    %v2628 = vrot.slane %v1990, 4
    %2629 = vrot.lane.b32.xlu0 %v2628, 96
    %v2630 = vpop.permute.xlu0 %2629
    %v2632 = vsel %vm371, %v2628, 0
    %v2635 = vsel %vm371, %v2630, 0
    %2637 = vmatprep.subr.bf16.mxu0 0
    %2638 = vmatpush1.bf16.xpose.msra.mxu0 %v2635
    %2639 = vmatprep.subr.bf16.mxu0 0
    %2640 = vmatpush1.bf16.xpose.msra.mxu0 0
    %2641 = vmatprep.subr.bf16.mxu0 0
    %2642 = vmatpush1.bf16.xpose.msra.mxu0 0
    %2643 = vmatprep.subr.bf16.mxu0 0
    %2644 = vmatpush1.bf16.xpose.msra.mxu0 0
    %2645 = vmatprep.subr.bf16.mxu0 0
    %2646 = vmatpush1.bf16.xpose.msra.mxu0 0
    %2647 = vmatprep.subr.bf16.mxu0 0
    %2648 = vmatpush1.bf16.xpose.msra.mxu0 0
    %2649 = vmatprep.subr.bf16.mxu0 0
    %2650 = vmatpush1.bf16.xpose.msra.mxu0 0
    %2651 = vmatprep.subr.bf16.mxu0 0
    %2652 = vmatpush1.bf16.xpose.msra.mxu0 0
    %2653 = vmatprep.subr.bf16.mxu0 0
    %2654 = vmatpush1.bf16.xpose.msra.mxu0 0
    %2655 = vmatprep.subr.bf16.mxu0 0
    %2656 = vmatpush1.bf16.xpose.msra.mxu0 0
    %2657 = vmatprep.subr.bf16.mxu0 0
    %2658 = vmatpush1.bf16.xpose.msra.mxu0 0
    %2659 = vmatprep.subr.bf16.mxu0 0
    %2660 = vmatpush1.bf16.xpose.msra.mxu0 0
    %2661 = vmatprep.subr.bf16.mxu0 0
    %2662 = vmatpush1.bf16.xpose.msra.mxu0 0
    %2663 = vmatprep.subr.bf16.mxu0 0
    %2664 = vmatpush1.bf16.xpose.msra.mxu0 0
    %2665 = vmatprep.subr.bf16.mxu0 0
    %2666 = vmatpush1.bf16.xpose.msra.mxu0 0
    %2667 = vmatprep.subr.bf16.mxu0 0
    %2668 = vmatpush1.bf16.xpose.msra.mxu0 0
    %2669 = vmatprep.mubr.bf16.mxu0 0
    %2670 = vmatmul.mubr.bf16.gmra.mrb[0].mxu0 %v2632
    %v2671 = vpop.f32.mrb[0].mxu0
    %v2672 = vadd.f32 0.0, %v2671
    %v2673 = vpop.f32.mrb[0].mxu0
    %v2674 = vpop.f32.mrb[0].mxu0
    %v2675 = vpop.f32.mrb[0].mxu0
    %2676 = vdwg.mxu0
    %v2677 = vmul.f32 %v2672, 0.35355338
    %v2678 = vadd.f32 %v2677, %v1064
    %v2679 = vsel %vm371, %v2678, -inf
    %2680 = vmax.xlane.f32.xlu0 %v2679
    %v2681 = vpop.xlane.xlu0 %2680
    %v2682 = vsub.f32 %v2678, %v2681
    %v2683 = vmul.f32 %v2682, 1.442695
    %v2684 = vpow.pop %v2683
    %v2685 = vsel %vm371, %v2684, 0.0
    %2686 = vadd.xlane.f32.xlu0 %v2685
    %v2687 = vpop.xlane.xlu0 %2686
    %v2688 = vrcp.pop %v2687
    %v2689 = vmul.f32 %v2684, %v2688
    %v2690 = vpack.c.bf16 %v2689, %v2689
    %2691 = vrot.lane.b32.xlu0 %v2628, 64
    %v2692 = vpop.permute.xlu0 %2691
    %v2694 = vsel %vm371, %v2690, 0
    %v2697 = vsel %vm441, %v2692, 0
    %2699 = vmatprep.subr.bf16.mxu0 0
    %2700 = vmatpush1.bf16.msra.mxu0 %v2697
    %2701 = vmatprep.subr.bf16.mxu0 0
    %2702 = vmatpush1.bf16.msra.mxu0 0
    %2703 = vmatprep.subr.bf16.mxu0 0
    %2704 = vmatpush1.bf16.msra.mxu0 0
    %2705 = vmatprep.subr.bf16.mxu0 0
    %2706 = vmatpush1.bf16.msra.mxu0 0
    %2707 = vmatprep.subr.bf16.mxu0 0
    %2708 = vmatpush1.bf16.msra.mxu0 0
    %2709 = vmatprep.subr.bf16.mxu0 0
    %2710 = vmatpush1.bf16.msra.mxu0 0
    %2711 = vmatprep.subr.bf16.mxu0 0
    %2712 = vmatpush1.bf16.msra.mxu0 0
    %2713 = vmatprep.subr.bf16.mxu0 0
    %2714 = vmatpush1.bf16.msra.mxu0 0
    %2715 = vmatprep.subr.bf16.mxu0 0
    %2716 = vmatpush1.bf16.msra.mxu0 0
    %2717 = vmatprep.subr.bf16.mxu0 0
    %2718 = vmatpush1.bf16.msra.mxu0 0
    %2719 = vmatprep.subr.bf16.mxu0 0
    %2720 = vmatpush1.bf16.msra.mxu0 0
    %2721 = vmatprep.subr.bf16.mxu0 0
    %2722 = vmatpush1.bf16.msra.mxu0 0
    %2723 = vmatprep.subr.bf16.mxu0 0
    %2724 = vmatpush1.bf16.msra.mxu0 0
    %2725 = vmatprep.subr.bf16.mxu0 0
    %2726 = vmatpush1.bf16.msra.mxu0 0
    %2727 = vmatprep.subr.bf16.mxu0 0
    %2728 = vmatpush1.bf16.msra.mxu0 0
    %2729 = vmatprep.subr.bf16.mxu0 0
    %2730 = vmatpush1.bf16.msra.mxu0 0
    %2731 = vmatprep.mubr.bf16.mxu0 0
    %2732 = vmatmul.mubr.bf16.gmra.mrb[0].mxu0 %v2694
    %v2733 = vpop.f32.mrb[0].mxu0
    %v2734 = vadd.f32 0.0, %v2733
    %v2735 = vpop.f32.mrb[0].mxu0
    %v2736 = vpop.f32.mrb[0].mxu0
    %v2737 = vpop.f32.mrb[0].mxu0
    %2738 = vdwg.mxu0
    %v2739 = vpack.c.bf16 %v2734, %v2734
    %2740 = vrot.lane.b32.xlu0 %v2628, 120
    %v2741 = vpop.permute.xlu0 %2740
    %2742 = vrot.lane.b32.xlu0 %v2628, 88
    %v2743 = vpop.permute.xlu0 %2742
    %v2745 = vsel %vm371, %v2741, 0
    %v2748 = vsel %vm371, %v2743, 0
    %2750 = vmatprep.subr.bf16.mxu0 0
    %2751 = vmatpush1.bf16.xpose.msra.mxu0 %v2748
    %2752 = vmatprep.subr.bf16.mxu0 0
    %2753 = vmatpush1.bf16.xpose.msra.mxu0 0
    %2754 = vmatprep.subr.bf16.mxu0 0
    %2755 = vmatpush1.bf16.xpose.msra.mxu0 0
    %2756 = vmatprep.subr.bf16.mxu0 0
    %2757 = vmatpush1.bf16.xpose.msra.mxu0 0
    %2758 = vmatprep.subr.bf16.mxu0 0
    %2759 = vmatpush1.bf16.xpose.msra.mxu0 0
    %2760 = vmatprep.subr.bf16.mxu0 0
    %2761 = vmatpush1.bf16.xpose.msra.mxu0 0
    %2762 = vmatprep.subr.bf16.mxu0 0
    %2763 = vmatpush1.bf16.xpose.msra.mxu0 0
    %2764 = vmatprep.subr.bf16.mxu0 0
    %2765 = vmatpush1.bf16.xpose.msra.mxu0 0
    %2766 = vmatprep.subr.bf16.mxu0 0
    %2767 = vmatpush1.bf16.xpose.msra.mxu0 0
    %2768 = vmatprep.subr.bf16.mxu0 0
    %2769 = vmatpush1.bf16.xpose.msra.mxu0 0
    %2770 = vmatprep.subr.bf16.mxu0 0
    %2771 = vmatpush1.bf16.xpose.msra.mxu0 0
    %2772 = vmatprep.subr.bf16.mxu0 0
    %2773 = vmatpush1.bf16.xpose.msra.mxu0 0
    %2774 = vmatprep.subr.bf16.mxu0 0
    %2775 = vmatpush1.bf16.xpose.msra.mxu0 0
    %2776 = vmatprep.subr.bf16.mxu0 0
    %2777 = vmatpush1.bf16.xpose.msra.mxu0 0
    %2778 = vmatprep.subr.bf16.mxu0 0
    %2779 = vmatpush1.bf16.xpose.msra.mxu0 0
    %2780 = vmatprep.subr.bf16.mxu0 0
    %2781 = vmatpush1.bf16.xpose.msra.mxu0 0
    %2782 = vmatprep.mubr.bf16.mxu0 0
    %2783 = vmatmul.mubr.bf16.gmra.mrb[0].mxu0 %v2745
    %v2784 = vpop.f32.mrb[0].mxu0
    %v2785 = vadd.f32 0.0, %v2784
    %v2786 = vpop.f32.mrb[0].mxu0
    %v2787 = vpop.f32.mrb[0].mxu0
    %v2788 = vpop.f32.mrb[0].mxu0
    %2789 = vdwg.mxu0
    %v2790 = vmul.f32 %v2785, 0.35355338
    %v2791 = vadd.f32 %v2790, %v1064
    %v2792 = vsel %vm371, %v2791, -inf
    %2793 = vmax.xlane.f32.xlu0 %v2792
    %v2794 = vpop.xlane.xlu0 %2793
    %v2795 = vsub.f32 %v2791, %v2794
    %v2796 = vmul.f32 %v2795, 1.442695
    %v2797 = vpow.pop %v2796
    %v2798 = vsel %vm371, %v2797, 0.0
    %2799 = vadd.xlane.f32.xlu0 %v2798
    %v2800 = vpop.xlane.xlu0 %2799
    %v2801 = vrcp.pop %v2800
    %v2802 = vmul.f32 %v2797, %v2801
    %v2803 = vpack.c.bf16 %v2802, %v2802
    %2804 = vrot.lane.b32.xlu0 %v2628, 56
    %v2805 = vpop.permute.xlu0 %2804
    %v2807 = vsel %vm371, %v2803, 0
    %v2810 = vsel %vm441, %v2805, 0
    %2812 = vmatprep.subr.bf16.mxu0 0
    %2813 = vmatpush1.bf16.msra.mxu0 %v2810
    %2814 = vmatprep.subr.bf16.mxu0 0
    %2815 = vmatpush1.bf16.msra.mxu0 0
    %2816 = vmatprep.subr.bf16.mxu0 0
    %2817 = vmatpush1.bf16.msra.mxu0 0
    %2818 = vmatprep.subr.bf16.mxu0 0
    %2819 = vmatpush1.bf16.msra.mxu0 0
    %2820 = vmatprep.subr.bf16.mxu0 0
    %2821 = vmatpush1.bf16.msra.mxu0 0
    %2822 = vmatprep.subr.bf16.mxu0 0
    %2823 = vmatpush1.bf16.msra.mxu0 0
    %2824 = vmatprep.subr.bf16.mxu0 0
    %2825 = vmatpush1.bf16.msra.mxu0 0
    %2826 = vmatprep.subr.bf16.mxu0 0
    %2827 = vmatpush1.bf16.msra.mxu0 0
    %2828 = vmatprep.subr.bf16.mxu0 0
    %2829 = vmatpush1.bf16.msra.mxu0 0
    %2830 = vmatprep.subr.bf16.mxu0 0
    %2831 = vmatpush1.bf16.msra.mxu0 0
    %2832 = vmatprep.subr.bf16.mxu0 0
    %2833 = vmatpush1.bf16.msra.mxu0 0
    %2834 = vmatprep.subr.bf16.mxu0 0
    %2835 = vmatpush1.bf16.msra.mxu0 0
    %2836 = vmatprep.subr.bf16.mxu0 0
    %2837 = vmatpush1.bf16.msra.mxu0 0
    %2838 = vmatprep.subr.bf16.mxu0 0
    %2839 = vmatpush1.bf16.msra.mxu0 0
    %2840 = vmatprep.subr.bf16.mxu0 0
    %2841 = vmatpush1.bf16.msra.mxu0 0
    %2842 = vmatprep.subr.bf16.mxu0 0
    %2843 = vmatpush1.bf16.msra.mxu0 0
    %2844 = vmatprep.mubr.bf16.mxu0 0
    %2845 = vmatmul.mubr.bf16.gmra.mrb[0].mxu0 %v2807
    %v2846 = vpop.f32.mrb[0].mxu0
    %v2847 = vadd.f32 0.0, %v2846
    %v2848 = vpop.f32.mrb[0].mxu0
    %v2849 = vpop.f32.mrb[0].mxu0
    %v2850 = vpop.f32.mrb[0].mxu0
    %2851 = vdwg.mxu0
    %v2852 = vpack.c.bf16 %v2847, %v2847
    %v2854 = vsel %vm371, %v2852, 0
    %2856 = vmatprep.subr.bf16.mxu0 0
    %2857 = vmatpush1.bf16.msra.mxu0 %v2220
    %2858 = vmatprep.subr.bf16.mxu0 0
    %2859 = vmatpush1.bf16.msra.mxu0 0
    %2860 = vmatprep.subr.bf16.mxu0 0
    %2861 = vmatpush1.bf16.msra.mxu0 0
    %2862 = vmatprep.subr.bf16.mxu0 0
    %2863 = vmatpush1.bf16.msra.mxu0 0
    %2864 = vmatprep.subr.bf16.mxu0 0
    %2865 = vmatpush1.bf16.msra.mxu0 0
    %2866 = vmatprep.subr.bf16.mxu0 0
    %2867 = vmatpush1.bf16.msra.mxu0 0
    %2868 = vmatprep.subr.bf16.mxu0 0
    %2869 = vmatpush1.bf16.msra.mxu0 0
    %2870 = vmatprep.subr.bf16.mxu0 0
    %2871 = vmatpush1.bf16.msra.mxu0 0
    %2872 = vmatprep.subr.bf16.mxu0 0
    %2873 = vmatpush1.bf16.msra.mxu0 0
    %2874 = vmatprep.subr.bf16.mxu0 0
    %2875 = vmatpush1.bf16.msra.mxu0 0
    %2876 = vmatprep.subr.bf16.mxu0 0
    %2877 = vmatpush1.bf16.msra.mxu0 0
    %2878 = vmatprep.subr.bf16.mxu0 0
    %2879 = vmatpush1.bf16.msra.mxu0 0
    %2880 = vmatprep.subr.bf16.mxu0 0
    %2881 = vmatpush1.bf16.msra.mxu0 0
    %2882 = vmatprep.subr.bf16.mxu0 0
    %2883 = vmatpush1.bf16.msra.mxu0 0
    %2884 = vmatprep.subr.bf16.mxu0 0
    %2885 = vmatpush1.bf16.msra.mxu0 0
    %2886 = vmatprep.subr.bf16.mxu0 0
    %2887 = vmatpush1.bf16.msra.mxu0 0
    %2888 = vmatprep.mubr.bf16.mxu0 0
    %2889 = vmatmul.mubr.bf16.gmra.mrb[0].mxu0 %v2854
    %v2890 = vpop.f32.mrb[0].mxu0
    %v2891 = vadd.f32 0.0, %v2890
    %v2892 = vpop.f32.mrb[0].mxu0
    %v2893 = vpop.f32.mrb[0].mxu0
    %v2894 = vpop.f32.mrb[0].mxu0
    %2895 = vdwg.mxu0
    %v2897 = vsel %vm371, %v2739, 0
    %2899 = vmatprep.subr.bf16.mxu0 0
    %2900 = vmatpush1.bf16.msra.mxu0 %v2266
    %2901 = vmatprep.subr.bf16.mxu0 0
    %2902 = vmatpush1.bf16.msra.mxu0 0
    %2903 = vmatprep.subr.bf16.mxu0 0
    %2904 = vmatpush1.bf16.msra.mxu0 0
    %2905 = vmatprep.subr.bf16.mxu0 0
    %2906 = vmatpush1.bf16.msra.mxu0 0
    %2907 = vmatprep.subr.bf16.mxu0 0
    %2908 = vmatpush1.bf16.msra.mxu0 0
    %2909 = vmatprep.subr.bf16.mxu0 0
    %2910 = vmatpush1.bf16.msra.mxu0 0
    %2911 = vmatprep.subr.bf16.mxu0 0
    %2912 = vmatpush1.bf16.msra.mxu0 0
    %2913 = vmatprep.subr.bf16.mxu0 0
    %2914 = vmatpush1.bf16.msra.mxu0 0
    %2915 = vmatprep.subr.bf16.mxu0 0
    %2916 = vmatpush1.bf16.msra.mxu0 0
    %2917 = vmatprep.subr.bf16.mxu0 0
    %2918 = vmatpush1.bf16.msra.mxu0 0
    %2919 = vmatprep.subr.bf16.mxu0 0
    %2920 = vmatpush1.bf16.msra.mxu0 0
    %2921 = vmatprep.subr.bf16.mxu0 0
    %2922 = vmatpush1.bf16.msra.mxu0 0
    %2923 = vmatprep.subr.bf16.mxu0 0
    %2924 = vmatpush1.bf16.msra.mxu0 0
    %2925 = vmatprep.subr.bf16.mxu0 0
    %2926 = vmatpush1.bf16.msra.mxu0 0
    %2927 = vmatprep.subr.bf16.mxu0 0
    %2928 = vmatpush1.bf16.msra.mxu0 0
    %2929 = vmatprep.subr.bf16.mxu0 0
    %2930 = vmatpush1.bf16.msra.mxu0 0
    %2931 = vmatprep.mubr.bf16.mxu0 0
    %2932 = vmatmul.mubr.bf16.gmra.mrb[0].mxu0 %v2897
    %v2933 = vpop.f32.mrb[0].mxu0
    %v2934 = vadd.f32 %v2891, %v2933
    %v2935 = vpop.f32.mrb[0].mxu0
    %v2936 = vpop.f32.mrb[0].mxu0
    %v2937 = vpop.f32.mrb[0].mxu0
    %2938 = vdwg.mxu0
    %2939 = vrot.lane.b32.xlu0 %v2628, 112
    %v2940 = vpop.permute.xlu0 %2939
    %2941 = vrot.lane.b32.xlu0 %v2628, 80
    %v2942 = vpop.permute.xlu0 %2941
    %v2944 = vsel %vm371, %v2940, 0
    %v2947 = vsel %vm371, %v2942, 0
    %2949 = vmatprep.subr.bf16.mxu0 0
    %2950 = vmatpush1.bf16.xpose.msra.mxu0 %v2947
    %2951 = vmatprep.subr.bf16.mxu0 0
    %2952 = vmatpush1.bf16.xpose.msra.mxu0 0
    %2953 = vmatprep.subr.bf16.mxu0 0
    %2954 = vmatpush1.bf16.xpose.msra.mxu0 0
    %2955 = vmatprep.subr.bf16.mxu0 0
    %2956 = vmatpush1.bf16.xpose.msra.mxu0 0
    %2957 = vmatprep.subr.bf16.mxu0 0
    %2958 = vmatpush1.bf16.xpose.msra.mxu0 0
    %2959 = vmatprep.subr.bf16.mxu0 0
    %2960 = vmatpush1.bf16.xpose.msra.mxu0 0
    %2961 = vmatprep.subr.bf16.mxu0 0
    %2962 = vmatpush1.bf16.xpose.msra.mxu0 0
    %2963 = vmatprep.subr.bf16.mxu0 0
    %2964 = vmatpush1.bf16.xpose.msra.mxu0 0
    %2965 = vmatprep.subr.bf16.mxu0 0
    %2966 = vmatpush1.bf16.xpose.msra.mxu0 0
    %2967 = vmatprep.subr.bf16.mxu0 0
    %2968 = vmatpush1.bf16.xpose.msra.mxu0 0
    %2969 = vmatprep.subr.bf16.mxu0 0
    %2970 = vmatpush1.bf16.xpose.msra.mxu0 0
    %2971 = vmatprep.subr.bf16.mxu0 0
    %2972 = vmatpush1.bf16.xpose.msra.mxu0 0
    %2973 = vmatprep.subr.bf16.mxu0 0
    %2974 = vmatpush1.bf16.xpose.msra.mxu0 0
    %2975 = vmatprep.subr.bf16.mxu0 0
    %2976 = vmatpush1.bf16.xpose.msra.mxu0 0
    %2977 = vmatprep.subr.bf16.mxu0 0
    %2978 = vmatpush1.bf16.xpose.msra.mxu0 0
    %2979 = vmatprep.subr.bf16.mxu0 0
    %2980 = vmatpush1.bf16.xpose.msra.mxu0 0
    %2981 = vmatprep.mubr.bf16.mxu0 0
    %2982 = vmatmul.mubr.bf16.gmra.mrb[0].mxu0 %v2944
    %v2983 = vpop.f32.mrb[0].mxu0
    %v2984 = vadd.f32 0.0, %v2983
    %v2985 = vpop.f32.mrb[0].mxu0
    %v2986 = vpop.f32.mrb[0].mxu0
    %v2987 = vpop.f32.mrb[0].mxu0
    %2988 = vdwg.mxu0
    %v2989 = vmul.f32 %v2984, 0.35355338
    %v2990 = vadd.f32 %v2989, %v1064
    %v2991 = vsel %vm371, %v2990, -inf
    %2992 = vmax.xlane.f32.xlu0 %v2991
    %v2993 = vpop.xlane.xlu0 %2992
    %v2994 = vsub.f32 %v2990, %v2993
    %v2995 = vmul.f32 %v2994, 1.442695
    %v2996 = vpow.pop %v2995
    %v2997 = vsel %vm371, %v2996, 0.0
    %2998 = vadd.xlane.f32.xlu0 %v2997
    %v2999 = vpop.xlane.xlu0 %2998
    %v3000 = vrcp.pop %v2999
    %v3001 = vmul.f32 %v2996, %v3000
    %v3002 = vpack.c.bf16 %v3001, %v3001
    %3003 = vrot.lane.b32.xlu0 %v2628, 48
    %v3004 = vpop.permute.xlu0 %3003
    %v3006 = vsel %vm371, %v3002, 0
    %v3009 = vsel %vm441, %v3004, 0
    %3011 = vmatprep.subr.bf16.mxu0 0
    %3012 = vmatpush1.bf16.msra.mxu0 %v3009
    %3013 = vmatprep.subr.bf16.mxu0 0
    %3014 = vmatpush1.bf16.msra.mxu0 0
    %3015 = vmatprep.subr.bf16.mxu0 0
    %3016 = vmatpush1.bf16.msra.mxu0 0
    %3017 = vmatprep.subr.bf16.mxu0 0
    %3018 = vmatpush1.bf16.msra.mxu0 0
    %3019 = vmatprep.subr.bf16.mxu0 0
    %3020 = vmatpush1.bf16.msra.mxu0 0
    %3021 = vmatprep.subr.bf16.mxu0 0
    %3022 = vmatpush1.bf16.msra.mxu0 0
    %3023 = vmatprep.subr.bf16.mxu0 0
    %3024 = vmatpush1.bf16.msra.mxu0 0
    %3025 = vmatprep.subr.bf16.mxu0 0
    %3026 = vmatpush1.bf16.msra.mxu0 0
    %3027 = vmatprep.subr.bf16.mxu0 0
    %3028 = vmatpush1.bf16.msra.mxu0 0
    %3029 = vmatprep.subr.bf16.mxu0 0
    %3030 = vmatpush1.bf16.msra.mxu0 0
    %3031 = vmatprep.subr.bf16.mxu0 0
    %3032 = vmatpush1.bf16.msra.mxu0 0
    %3033 = vmatprep.subr.bf16.mxu0 0
    %3034 = vmatpush1.bf16.msra.mxu0 0
    %3035 = vmatprep.subr.bf16.mxu0 0
    %3036 = vmatpush1.bf16.msra.mxu0 0
    %3037 = vmatprep.subr.bf16.mxu0 0
    %3038 = vmatpush1.bf16.msra.mxu0 0
    %3039 = vmatprep.subr.bf16.mxu0 0
    %3040 = vmatpush1.bf16.msra.mxu0 0
    %3041 = vmatprep.subr.bf16.mxu0 0
    %3042 = vmatpush1.bf16.msra.mxu0 0
    %3043 = vmatprep.mubr.bf16.mxu0 0
    %3044 = vmatmul.mubr.bf16.gmra.mrb[0].mxu0 %v3006
    %v3045 = vpop.f32.mrb[0].mxu0
    %v3046 = vadd.f32 0.0, %v3045
    %v3047 = vpop.f32.mrb[0].mxu0
    %v3048 = vpop.f32.mrb[0].mxu0
    %v3049 = vpop.f32.mrb[0].mxu0
    %3050 = vdwg.mxu0
    %v3051 = vpack.c.bf16 %v3046, %v3046
    %v3053 = vsel %vm371, %v3051, 0
    %3055 = vmatprep.subr.bf16.mxu0 0
    %3056 = vmatpush1.bf16.msra.mxu0 %v2425
    %3057 = vmatprep.subr.bf16.mxu0 0
    %3058 = vmatpush1.bf16.msra.mxu0 0
    %3059 = vmatprep.subr.bf16.mxu0 0
    %3060 = vmatpush1.bf16.msra.mxu0 0
    %3061 = vmatprep.subr.bf16.mxu0 0
    %3062 = vmatpush1.bf16.msra.mxu0 0
    %3063 = vmatprep.subr.bf16.mxu0 0
    %3064 = vmatpush1.bf16.msra.mxu0 0
    %3065 = vmatprep.subr.bf16.mxu0 0
    %3066 = vmatpush1.bf16.msra.mxu0 0
    %3067 = vmatprep.subr.bf16.mxu0 0
    %3068 = vmatpush1.bf16.msra.mxu0 0
    %3069 = vmatprep.subr.bf16.mxu0 0
    %3070 = vmatpush1.bf16.msra.mxu0 0
    %3071 = vmatprep.subr.bf16.mxu0 0
    %3072 = vmatpush1.bf16.msra.mxu0 0
    %3073 = vmatprep.subr.bf16.mxu0 0
    %3074 = vmatpush1.bf16.msra.mxu0 0
    %3075 = vmatprep.subr.bf16.mxu0 0
    %3076 = vmatpush1.bf16.msra.mxu0 0
    %3077 = vmatprep.subr.bf16.mxu0 0
    %3078 = vmatpush1.bf16.msra.mxu0 0
    %3079 = vmatprep.subr.bf16.mxu0 0
    %3080 = vmatpush1.bf16.msra.mxu0 0
    %3081 = vmatprep.subr.bf16.mxu0 0
    %3082 = vmatpush1.bf16.msra.mxu0 0
    %3083 = vmatprep.subr.bf16.mxu0 0
    %3084 = vmatpush1.bf16.msra.mxu0 0
    %3085 = vmatprep.subr.bf16.mxu0 0
    %3086 = vmatpush1.bf16.msra.mxu0 0
    %3087 = vmatprep.mubr.bf16.mxu0 0
    %3088 = vmatmul.mubr.bf16.gmra.mrb[0].mxu0 %v3053
    %v3089 = vpop.f32.mrb[0].mxu0
    %v3090 = vadd.f32 0.0, %v3089
    %v3091 = vpop.f32.mrb[0].mxu0
    %v3092 = vpop.f32.mrb[0].mxu0
    %v3093 = vpop.f32.mrb[0].mxu0
    %3094 = vdwg.mxu0
    %v3095 = vadd.f32 %v2934, %v3090
    %3096 = vrot.lane.b32.xlu0 %v2628, 104
    %v3097 = vpop.permute.xlu0 %3096
    %3098 = vrot.lane.b32.xlu0 %v2628, 72
    %v3099 = vpop.permute.xlu0 %3098
    %v3101 = vsel %vm371, %v3097, 0
    %v3104 = vsel %vm371, %v3099, 0
    %3106 = vmatprep.subr.bf16.mxu0 0
    %3107 = vmatpush1.bf16.xpose.msra.mxu0 %v3104
    %3108 = vmatprep.subr.bf16.mxu0 0
    %3109 = vmatpush1.bf16.xpose.msra.mxu0 0
    %3110 = vmatprep.subr.bf16.mxu0 0
    %3111 = vmatpush1.bf16.xpose.msra.mxu0 0
    %3112 = vmatprep.subr.bf16.mxu0 0
    %3113 = vmatpush1.bf16.xpose.msra.mxu0 0
    %3114 = vmatprep.subr.bf16.mxu0 0
    %3115 = vmatpush1.bf16.xpose.msra.mxu0 0
    %3116 = vmatprep.subr.bf16.mxu0 0
    %3117 = vmatpush1.bf16.xpose.msra.mxu0 0
    %3118 = vmatprep.subr.bf16.mxu0 0
    %3119 = vmatpush1.bf16.xpose.msra.mxu0 0
    %3120 = vmatprep.subr.bf16.mxu0 0
    %3121 = vmatpush1.bf16.xpose.msra.mxu0 0
    %3122 = vmatprep.subr.bf16.mxu0 0
    %3123 = vmatpush1.bf16.xpose.msra.mxu0 0
    %3124 = vmatprep.subr.bf16.mxu0 0
    %3125 = vmatpush1.bf16.xpose.msra.mxu0 0
    %3126 = vmatprep.subr.bf16.mxu0 0
    %3127 = vmatpush1.bf16.xpose.msra.mxu0 0
    %3128 = vmatprep.subr.bf16.mxu0 0
    %3129 = vmatpush1.bf16.xpose.msra.mxu0 0
    %3130 = vmatprep.subr.bf16.mxu0 0
    %3131 = vmatpush1.bf16.xpose.msra.mxu0 0
    %3132 = vmatprep.subr.bf16.mxu0 0
    %3133 = vmatpush1.bf16.xpose.msra.mxu0 0
    %3134 = vmatprep.subr.bf16.mxu0 0
    %3135 = vmatpush1.bf16.xpose.msra.mxu0 0
    %3136 = vmatprep.subr.bf16.mxu0 0
    %3137 = vmatpush1.bf16.xpose.msra.mxu0 0
    %3138 = vmatprep.mubr.bf16.mxu0 0
    %3139 = vmatmul.mubr.bf16.gmra.mrb[0].mxu0 %v3101
    %v3140 = vpop.f32.mrb[0].mxu0
    %v3141 = vadd.f32 0.0, %v3140
    %v3142 = vpop.f32.mrb[0].mxu0
    %v3143 = vpop.f32.mrb[0].mxu0
    %v3144 = vpop.f32.mrb[0].mxu0
    %3145 = vdwg.mxu0
    %v3146 = vmul.f32 %v3141, 0.35355338
    %v3147 = vadd.f32 %v3146, %v1064
    %v3148 = vsel %vm371, %v3147, -inf
    %3149 = vmax.xlane.f32.xlu0 %v3148
    %v3150 = vpop.xlane.xlu0 %3149
    %v3151 = vsub.f32 %v3147, %v3150
    %v3152 = vmul.f32 %v3151, 1.442695
    %v3153 = vpow.pop %v3152
    %v3154 = vsel %vm371, %v3153, 0.0
    %3155 = vadd.xlane.f32.xlu0 %v3154
    %v3156 = vpop.xlane.xlu0 %3155
    %v3157 = vrcp.pop %v3156
    %v3158 = vmul.f32 %v3153, %v3157
    %v3159 = vpack.c.bf16 %v3158, %v3158
    %3160 = vrot.lane.b32.xlu0 %v2628, 40
    %v3161 = vpop.permute.xlu0 %3160
    %v3163 = vsel %vm371, %v3159, 0
    %v3166 = vsel %vm441, %v3161, 0
    %3168 = vmatprep.subr.bf16.mxu0 0
    %3169 = vmatpush1.bf16.msra.mxu0 %v3166
    %3170 = vmatprep.subr.bf16.mxu0 0
    %3171 = vmatpush1.bf16.msra.mxu0 0
    %3172 = vmatprep.subr.bf16.mxu0 0
    %3173 = vmatpush1.bf16.msra.mxu0 0
    %3174 = vmatprep.subr.bf16.mxu0 0
    %3175 = vmatpush1.bf16.msra.mxu0 0
    %3176 = vmatprep.subr.bf16.mxu0 0
    %3177 = vmatpush1.bf16.msra.mxu0 0
    %3178 = vmatprep.subr.bf16.mxu0 0
    %3179 = vmatpush1.bf16.msra.mxu0 0
    %3180 = vmatprep.subr.bf16.mxu0 0
    %3181 = vmatpush1.bf16.msra.mxu0 0
    %3182 = vmatprep.subr.bf16.mxu0 0
    %3183 = vmatpush1.bf16.msra.mxu0 0
    %3184 = vmatprep.subr.bf16.mxu0 0
    %3185 = vmatpush1.bf16.msra.mxu0 0
    %3186 = vmatprep.subr.bf16.mxu0 0
    %3187 = vmatpush1.bf16.msra.mxu0 0
    %3188 = vmatprep.subr.bf16.mxu0 0
    %3189 = vmatpush1.bf16.msra.mxu0 0
    %3190 = vmatprep.subr.bf16.mxu0 0
    %3191 = vmatpush1.bf16.msra.mxu0 0
    %3192 = vmatprep.subr.bf16.mxu0 0
    %3193 = vmatpush1.bf16.msra.mxu0 0
    %3194 = vmatprep.subr.bf16.mxu0 0
    %3195 = vmatpush1.bf16.msra.mxu0 0
    %3196 = vmatprep.subr.bf16.mxu0 0
    %3197 = vmatpush1.bf16.msra.mxu0 0
    %3198 = vmatprep.subr.bf16.mxu0 0
    %3199 = vmatpush1.bf16.msra.mxu0 0
    %3200 = vmatprep.mubr.bf16.mxu0 0
    %3201 = vmatmul.mubr.bf16.gmra.mrb[0].mxu0 %v3163
    %v3202 = vpop.f32.mrb[0].mxu0
    %v3203 = vadd.f32 0.0, %v3202
    %v3204 = vpop.f32.mrb[0].mxu0
    %v3205 = vpop.f32.mrb[0].mxu0
    %v3206 = vpop.f32.mrb[0].mxu0
    %3207 = vdwg.mxu0
    %v3208 = vpack.c.bf16 %v3203, %v3203
    %v3210 = vsel %vm371, %v3208, 0
    %3212 = vmatprep.subr.bf16.mxu0 0
    %3213 = vmatpush1.bf16.msra.mxu0 %v2585
    %3214 = vmatprep.subr.bf16.mxu0 0
    %3215 = vmatpush1.bf16.msra.mxu0 0
    %3216 = vmatprep.subr.bf16.mxu0 0
    %3217 = vmatpush1.bf16.msra.mxu0 0
    %3218 = vmatprep.subr.bf16.mxu0 0
    %3219 = vmatpush1.bf16.msra.mxu0 0
    %3220 = vmatprep.subr.bf16.mxu0 0
    %3221 = vmatpush1.bf16.msra.mxu0 0
    %3222 = vmatprep.subr.bf16.mxu0 0
    %3223 = vmatpush1.bf16.msra.mxu0 0
    %3224 = vmatprep.subr.bf16.mxu0 0
    %3225 = vmatpush1.bf16.msra.mxu0 0
    %3226 = vmatprep.subr.bf16.mxu0 0
    %3227 = vmatpush1.bf16.msra.mxu0 0
    %3228 = vmatprep.subr.bf16.mxu0 0
    %3229 = vmatpush1.bf16.msra.mxu0 0
    %3230 = vmatprep.subr.bf16.mxu0 0
    %3231 = vmatpush1.bf16.msra.mxu0 0
    %3232 = vmatprep.subr.bf16.mxu0 0
    %3233 = vmatpush1.bf16.msra.mxu0 0
    %3234 = vmatprep.subr.bf16.mxu0 0
    %3235 = vmatpush1.bf16.msra.mxu0 0
    %3236 = vmatprep.subr.bf16.mxu0 0
    %3237 = vmatpush1.bf16.msra.mxu0 0
    %3238 = vmatprep.subr.bf16.mxu0 0
    %3239 = vmatpush1.bf16.msra.mxu0 0
    %3240 = vmatprep.subr.bf16.mxu0 0
    %3241 = vmatpush1.bf16.msra.mxu0 0
    %3242 = vmatprep.subr.bf16.mxu0 0
    %3243 = vmatpush1.bf16.msra.mxu0 0
    %3244 = vmatprep.mubr.bf16.mxu0 0
    %3245 = vmatmul.mubr.bf16.gmra.mrb[0].mxu0 %v3210
    %v3246 = vpop.f32.mrb[0].mxu0
    %v3247 = vadd.f32 0.0, %v3246
    %v3248 = vpop.f32.mrb[0].mxu0
    %v3249 = vpop.f32.mrb[0].mxu0
    %v3250 = vpop.f32.mrb[0].mxu0
    %3251 = vdwg.mxu0
    %v3252 = vadd.f32 %v3095, %v3247
    %v3253 = vlaneseq
    %v3254 = vshrl.u32 %v3253, 7
    %v3255 = vsub.s32 2, %v3254
    %v3256 = vrot.slane %v1918, %v3255
    %v3257 = vadd.f32 %v2627, %v3256
    %v3258 = vadd.f32 %v3252, %v3256
    %v3259 = vadd.f32 %v1915, %v3257
    %v3260 = vadd.f32 %v1916, %v3258
    %v3261 = vsel %vm250, %v3259, 0.0
    %3262 = vadd.xlane.f32.xlu0 %v3261
    %v3263 = vpop.xlane.xlu0 %3262
    %v3264 = vsel %vm250, %v3260, 0.0
    %3265 = vadd.xlane.f32.xlu0 %v3264
    %v3266 = vpop.xlane.xlu0 %3265
    %v3267 = vmul.f32 %v3263, %v257
    %v3268 = vmul.f32 %v3266, %v257
    %v3269 = vsub.f32 %v3259, %v3267
    %v3270 = vsub.f32 %v3260, %v3268
    %v3271 = vmul.f32 %v3269, %v3269
    %v3272 = vmul.f32 %v3270, %v3270
    %v3273 = vsel %vm250, %v3271, 0.0
    %3274 = vadd.xlane.f32.xlu0 %v3273
    %v3275 = vpop.xlane.xlu0 %3274
    %v3276 = vsel %vm250, %v3272, 0.0
    %3277 = vadd.xlane.f32.xlu0 %v3276
    %v3278 = vpop.xlane.xlu0 %3277
    %v3279 = vmul.f32 %v3275, %v257
    %v3280 = vmul.f32 %v3278, %v257
    %v3281 = vadd.f32 %v3279, 1e-12
    %v3282 = vadd.f32 %v3280, 1e-12
    %v3283 = vrsqrt.pop %v3281
    %v3284 = vrsqrt.pop %v3282
    %v3285 = vmul.f32 %v3269, %v3283
    %v3286 = vmul.f32 %v3270, %v3284
    %v3287 = vlaneseq
    %v3288 = vshrl.u32 %v3287, 7
    %v3289 = vsub.s32 3, %v3288
    %v3290 = vrot.slane %v1918, %v3289
    %v3291 = vmul.f32 %v3285, %v3290
    %v3292 = vmul.f32 %v3286, %v3290
    %3294 = vrot.lane.b32.xlu0 %v3290, 96
    %v3295 = vpop.permute.xlu0 %3294
    %v3297 = vadd.f32 %v3291, %v3295
    %v3298 = vadd.f32 %v3292, %v3295
    %v3299 = vpack.c.bf16 %v3298, %v3297
    %s3300 = scalar_lea.vmem [#allocation7], 16
    %v3301 = vld [vmem:[%s3300] sm:$0xf]
    %v3302 = vld [vmem:[%s3300 + $0x4] sm:$0xf]
    %v3303 = vld [vmem:[%s3300 + $0x8] sm:$0xf]
    %v3304 = vld [vmem:[%s3300 + $0xc] sm:$0xf]
    %v3305 = vlaneseq
    %v3306 = vshrl.u32 %v3305, 7
    %v3307 = vsub.s32 1, %v3306
    %v3308 = vrot.slane %v1918, %v3307
    %v3313 = vunpack.c.l.b16 %v3301
    %v3314 = vunpack.c.l.b16 %v3302
    %v3315 = vunpack.c.l.b16 %v3303
    %v3316 = vunpack.c.l.b16 %v3304
    %v3317 = vpack.c.b16 %v3314, %v3313
    %v3318 = vpack.c.b16 %v3316, %v3315
    %v3322 = vsel %vm250, %v3299, 0
    %3324 = vmatprep.subr.bf16.mxu0 0
    %3325 = vmatpush1.bf16.msra.mxu0 %v3317
    %3326 = vmatprep.subr.bf16.mxu0 0
    %3327 = vmatpush1.bf16.msra.mxu0 %v3318
    %3328 = vmatprep.subr.bf16.mxu0 0
    %3329 = vmatpush1.bf16.msra.mxu0 0
    %3330 = vmatprep.subr.bf16.mxu0 0
    %3331 = vmatpush1.bf16.msra.mxu0 0
    %3332 = vmatprep.subr.bf16.mxu0 0
    %3333 = vmatpush1.bf16.msra.mxu0 0
    %3334 = vmatprep.subr.bf16.mxu0 0
    %3335 = vmatpush1.bf16.msra.mxu0 0
    %3336 = vmatprep.subr.bf16.mxu0 0
    %3337 = vmatpush1.bf16.msra.mxu0 0
    %3338 = vmatprep.subr.bf16.mxu0 0
    %3339 = vmatpush1.bf16.msra.mxu0 0
    %3340 = vmatprep.subr.bf16.mxu0 0
    %3341 = vmatpush1.bf16.msra.mxu0 0
    %3342 = vmatprep.subr.bf16.mxu0 0
    %3343 = vmatpush1.bf16.msra.mxu0 0
    %3344 = vmatprep.subr.bf16.mxu0 0
    %3345 = vmatpush1.bf16.msra.mxu0 0
    %3346 = vmatprep.subr.bf16.mxu0 0
    %3347 = vmatpush1.bf16.msra.mxu0 0
    %3348 = vmatprep.subr.bf16.mxu0 0
    %3349 = vmatpush1.bf16.msra.mxu0 0
    %3350 = vmatprep.subr.bf16.mxu0 0
    %3351 = vmatpush1.bf16.msra.mxu0 0
    %3352 = vmatprep.subr.bf16.mxu0 0
    %3353 = vmatpush1.bf16.msra.mxu0 0
    %3354 = vmatprep.subr.bf16.mxu0 0
    %3355 = vmatpush1.bf16.msra.mxu0 0
    %3356 = vmatprep.mubr.bf16.mxu0 0
    %3357 = vmatmul.mubr.bf16.gmra.mrb[0].mxu0 %v3322
    %v3358 = vpop.f32.mrb[0].mxu0
    %v3359 = vadd.f32 %v3308, %v3358
    %v3360 = vpop.f32.mrb[0].mxu0
    %v3361 = vpop.f32.mrb[0].mxu0
    %v3362 = vadd.f32 %v3308, %v3361
    %v3363 = vpop.f32.mrb[0].mxu0
    %3364 = vdwg.mxu0
    %v3365 = vmul.f32 %v3359, %v3359
    %v3366 = vmul.f32 %v3362, %v3362
    %v3367 = vmul.f32 %v3359, %v3365
    %v3368 = vmul.f32 %v3362, %v3366
    %v3369 = vmul.f32 %v3367, 0.044715
    %v3370 = vmul.f32 %v3368, 0.044715
    %v3371 = vadd.f32 %v3359, %v3369
    %v3372 = vadd.f32 %v3362, %v3370
    %v3373 = vmul.f32 %v3371, 0.7978846
    %v3374 = vmul.f32 %v3372, 0.7978846
    %v3375 = vtanh.pop %v3373
    %v3376 = vtanh.pop %v3374
    %v3377 = vadd.f32 %v3375, 1.0
    %v3378 = vadd.f32 %v3376, 1.0
    %v3379 = vmul.f32 %v3377, 0.5
    %v3380 = vmul.f32 %v3378, 0.5
    %v3381 = vmul.f32 %v3359, %v3379
    %v3382 = vmul.f32 %v3362, %v3380
    %v3383 = vpack.c.bf16 %v3382, %v3381
    %s3384 = scalar_lea.vmem [#allocation9], 64
    %v3385 = vld [vmem:[%s3384] sm:$0xf]
    %v3386 = vld [vmem:[%s3384 + $0x4] sm:$0xf]
    %v3387 = vld [vmem:[%s3384 + $0x8] sm:$0xf]
    %v3388 = vld [vmem:[%s3384 + $0xc] sm:$0xf]
    %v3389 = vld [vmem:[%s3384 + $0x10] sm:$0xf]
    %v3390 = vld [vmem:[%s3384 + $0x14] sm:$0xf]
    %v3391 = vld [vmem:[%s3384 + $0x18] sm:$0xf]
    %v3392 = vld [vmem:[%s3384 + $0x1c] sm:$0xf]
    %v3393 = vld [vmem:[%s3384 + $0x20] sm:$0xf]
    %v3394 = vld [vmem:[%s3384 + $0x24] sm:$0xf]
    %v3395 = vld [vmem:[%s3384 + $0x28] sm:$0xf]
    %v3396 = vld [vmem:[%s3384 + $0x2c] sm:$0xf]
    %v3397 = vld [vmem:[%s3384 + $0x30] sm:$0xf]
    %v3398 = vld [vmem:[%s3384 + $0x34] sm:$0xf]
    %v3399 = vld [vmem:[%s3384 + $0x38] sm:$0xf]
    %v3400 = vld [vmem:[%s3384 + $0x3c] sm:$0xf]
    %v3417 = vunpack.c.l.b16 %v3385
    %v3418 = vunpack.c.l.b16 %v3386
    %v3419 = vunpack.c.l.b16 %v3387
    %v3420 = vunpack.c.l.b16 %v3388
    %v3421 = vunpack.c.l.b16 %v3389
    %v3422 = vunpack.c.l.b16 %v3390
    %v3423 = vunpack.c.l.b16 %v3391
    %v3424 = vunpack.c.l.b16 %v3392
    %v3425 = vunpack.c.l.b16 %v3393
    %v3426 = vunpack.c.l.b16 %v3394
    %v3427 = vunpack.c.l.b16 %v3395
    %v3428 = vunpack.c.l.b16 %v3396
    %v3429 = vunpack.c.l.b16 %v3397
    %v3430 = vunpack.c.l.b16 %v3398
    %v3431 = vunpack.c.l.b16 %v3399
    %v3432 = vunpack.c.l.b16 %v3400
    %v3433 = vpack.c.b16 %v3418, %v3417
    %v3434 = vpack.c.b16 %v3420, %v3419
    %v3435 = vpack.c.b16 %v3422, %v3421
    %v3436 = vpack.c.b16 %v3424, %v3423
    %v3437 = vpack.c.b16 %v3426, %v3425
    %v3438 = vpack.c.b16 %v3428, %v3427
    %v3439 = vpack.c.b16 %v3430, %v3429
    %v3440 = vpack.c.b16 %v3432, %v3431
    %3450 = vrot.lane.b32.xlu0 %v3256, 96
    %v3451 = vpop.permute.xlu0 %3450
    %3453 = vmatprep.subr.bf16.mxu0 0
    %3454 = vmatpush1.bf16.msra.mxu0 %v3433
    %3455 = vmatprep.subr.bf16.mxu0 0
    %3456 = vmatpush1.bf16.msra.mxu0 %v3434
    %3457 = vmatprep.subr.bf16.mxu0 0
    %3458 = vmatpush1.bf16.msra.mxu0 %v3435
    %3459 = vmatprep.subr.bf16.mxu0 0
    %3460 = vmatpush1.bf16.msra.mxu0 %v3436
    %3461 = vmatprep.subr.bf16.mxu0 0
    %3462 = vmatpush1.bf16.msra.mxu0 %v3437
    %3463 = vmatprep.subr.bf16.mxu0 0
    %3464 = vmatpush1.bf16.msra.mxu0 %v3438
    %3465 = vmatprep.subr.bf16.mxu0 0
    %3466 = vmatpush1.bf16.msra.mxu0 %v3439
    %3467 = vmatprep.subr.bf16.mxu0 0
    %3468 = vmatpush1.bf16.msra.mxu0 %v3440
    %3469 = vmatprep.subr.bf16.mxu0 0
    %3470 = vmatpush1.bf16.msra.mxu0 0
    %3471 = vmatprep.subr.bf16.mxu0 0
    %3472 = vmatpush1.bf16.msra.mxu0 0
    %3473 = vmatprep.subr.bf16.mxu0 0
    %3474 = vmatpush1.bf16.msra.mxu0 0
    %3475 = vmatprep.subr.bf16.mxu0 0
    %3476 = vmatpush1.bf16.msra.mxu0 0
    %3477 = vmatprep.subr.bf16.mxu0 0
    %3478 = vmatpush1.bf16.msra.mxu0 0
    %3479 = vmatprep.subr.bf16.mxu0 0
    %3480 = vmatpush1.bf16.msra.mxu0 0
    %3481 = vmatprep.subr.bf16.mxu0 0
    %3482 = vmatpush1.bf16.msra.mxu0 0
    %3483 = vmatprep.subr.bf16.mxu0 0
    %3484 = vmatpush1.bf16.msra.mxu0 0
    %3485 = vmatprep.mubr.bf16.mxu0 0
    %3486 = vmatmul.mubr.bf16.gmra.mrb[0].mxu0 %v3383
    %v3487 = vpop.f32.mrb[0].mxu0
    %v3488 = vadd.f32 %v3451, %v3487
    %v3489 = vpop.f32.mrb[0].mxu0
    %v3490 = vpop.f32.mrb[0].mxu0
    %v3491 = vadd.f32 %v3451, %v3490
    %v3492 = vpop.f32.mrb[0].mxu0
    %3493 = vdwg.mxu0
    %v3494 = vadd.f32 %v3297, %v3488
    %v3495 = vadd.f32 %v3298, %v3491
    %v3496 = vsel %vm250, %v3494, 0.0
    %3497 = vadd.xlane.f32.xlu0 %v3496
    %v3498 = vpop.xlane.xlu0 %3497
    %v3499 = vsel %vm250, %v3495, 0.0
    %3500 = vadd.xlane.f32.xlu0 %v3499
    %v3501 = vpop.xlane.xlu0 %3500
    %v3502 = vmul.f32 %v3498, %v257
    %v3503 = vmul.f32 %v3501, %v257
    %v3504 = vsub.f32 %v3494, %v3502
    %v3505 = vsub.f32 %v3495, %v3503
    %v3506 = vmul.f32 %v3504, %v3504
    %v3507 = vmul.f32 %v3505, %v3505
    %v3508 = vsel %vm250, %v3506, 0.0
    %3509 = vadd.xlane.f32.xlu0 %v3508
    %v3510 = vpop.xlane.xlu0 %3509
    %v3511 = vsel %vm250, %v3507, 0.0
    %3512 = vadd.xlane.f32.xlu0 %v3511
    %v3513 = vpop.xlane.xlu0 %3512
    %v3514 = vmul.f32 %v3510, %v257
    %v3515 = vmul.f32 %v3513, %v257
    %v3516 = vadd.f32 %v3514, 1e-12
    %v3517 = vadd.f32 %v3515, 1e-12
    %v3518 = vrsqrt.pop %v3516
    %v3519 = vrsqrt.pop %v3517
    %v3520 = vmul.f32 %v3504, %v3518
    %v3521 = vmul.f32 %v3505, %v3519
    %3522 = vrot.lane.b32.xlu0 %v3290, 64
    %v3523 = vpop.permute.xlu0 %3522
    %v3525 = vmul.f32 %v3520, %v3523
    %v3526 = vmul.f32 %v3521, %v3523
    %3527 = vrot.lane.b32.xlu0 %v3290, 32
    %v3528 = vpop.permute.xlu0 %3527
    %v3530 = vadd.f32 %v3525, %v3528
    %v3531 = vadd.f32 %v3526, %v3528
    %v3532 = vpack.c.bf16 %v3531, %v3530
    %v3533 = vld [vmem:[%s11] sm:$0xf]
    %v3534 = vld [vmem:[%s11 + $0x4] sm:$0xf]
    %v3535 = vld [vmem:[%s11 + $0x8] sm:$0xf]
    %v3536 = vld [vmem:[%s11 + $0xc] sm:$0xf]
    %v3537 = vld [vmem:[%s12] sm:$0x1]
    %v3539 = vlaneseq
    %v3540 = vshrl.u32 %v3539, 7
    %v3541 = vsub.s32 0, %v3540
    %v3542 = vrot.slane %v3537, %v3541
    %v3548 = vunpack.c.l.b16 %v3533
    %v3549 = vunpack.c.l.b16 %v3534
    %v3550 = vunpack.c.l.b16 %v3535
    %v3551 = vunpack.c.l.b16 %v3536
    %v3552 = vpack.c.b16 %v3549, %v3548
    %v3553 = vpack.c.b16 %v3551, %v3550
    %v3557 = vsel %vm250, %v3532, 0
    %3559 = vmatprep.subr.bf16.mxu0 0
    %3560 = vmatpush1.bf16.msra.mxu0 %v3552
    %3561 = vmatprep.subr.bf16.mxu0 0
    %3562 = vmatpush1.bf16.msra.mxu0 %v3553
    %3563 = vmatprep.subr.bf16.mxu0 0
    %3564 = vmatpush1.bf16.msra.mxu0 0
    %3565 = vmatprep.subr.bf16.mxu0 0
    %3566 = vmatpush1.bf16.msra.mxu0 0
    %3567 = vmatprep.subr.bf16.mxu0 0
    %3568 = vmatpush1.bf16.msra.mxu0 0
    %3569 = vmatprep.subr.bf16.mxu0 0
    %3570 = vmatpush1.bf16.msra.mxu0 0
    %3571 = vmatprep.subr.bf16.mxu0 0
    %3572 = vmatpush1.bf16.msra.mxu0 0
    %3573 = vmatprep.subr.bf16.mxu0 0
    %3574 = vmatpush1.bf16.msra.mxu0 0
    %3575 = vmatprep.subr.bf16.mxu0 0
    %3576 = vmatpush1.bf16.msra.mxu0 0
    %3577 = vmatprep.subr.bf16.mxu0 0
    %3578 = vmatpush1.bf16.msra.mxu0 0
    %3579 = vmatprep.subr.bf16.mxu0 0
    %3580 = vmatpush1.bf16.msra.mxu0 0
    %3581 = vmatprep.subr.bf16.mxu0 0
    %3582 = vmatpush1.bf16.msra.mxu0 0
    %3583 = vmatprep.subr.bf16.mxu0 0
    %3584 = vmatpush1.bf16.msra.mxu0 0
    %3585 = vmatprep.subr.bf16.mxu0 0
    %3586 = vmatpush1.bf16.msra.mxu0 0
    %3587 = vmatprep.subr.bf16.mxu0 0
    %3588 = vmatpush1.bf16.msra.mxu0 0
    %3589 = vmatprep.subr.bf16.mxu0 0
    %3590 = vmatpush1.bf16.msra.mxu0 0
    %3591 = vmatprep.mubr.bf16.mxu0 0
    %3592 = vmatmul.mubr.bf16.gmra.mrb[0].mxu0 %v3557
    %v3593 = vpop.f32.mrb[0].mxu0
    %v3594 = vadd.f32 %v3542, %v3593
    %v3595 = vpop.f32.mrb[0].mxu0
    %v3596 = vpop.f32.mrb[0].mxu0
    %v3597 = vadd.f32 %v3542, %v3596
    %v3598 = vpop.f32.mrb[0].mxu0
    %3599 = vdwg.mxu0
    %3600 = vst [vmem:[%s13] sm:$0xff] %v3594
    %3601 = vst [vmem:[%s13 + $0x8] sm:$0xff] %v3597
    // Predicated region
    $region78: #{my_model_forward.1} parent=1 // pred_check
      _
    $region79: #{my_model_forward.1} parent=1 // pred_check_branch
      %3603 = sbr.rel (0) target = $region81
    $region80: #{my_model_forward.1} parent=1 // pred_region
      _
    $region81: #{my_model_forward.1} parent=1 // pred_fallthru
      _
    // Predicated region
    $region82: #{my_model_forward.1} parent=1 // pred_check
      _
    $region83: #{my_model_forward.1} parent=1 // pred_check_branch
      %3605 = sbr.rel (0) target = $region85
    $region84: #{my_model_forward.1} parent=1 // pred_region
      _
    $region85: #{my_model_forward.1} parent=1 // pred_fallthru
      _
    %3606 = vsyncpa [#allocation3], 1
    %3607 = vsyncpa [#allocation5], 1
    %3608 = vsyncpa [#allocation8], 1
    %3609 = vsyncpa [#allocation11], 1

</llo_original>
